<compile_context>
chip_gen: v5e
topology: v5e:2x2
jax: 0.10.0
libtpu: 0.0.40
codegen_flags: <defaults>
</compile_context>

<pallas_src>
import functools

import numpy as np
import jax
import jax.numpy as jnp
from jax import lax
from jax.experimental import pallas as pl
from jax.experimental.pallas import tpu as pltpu

EPS = 1e-5


def _round_up(x, m):
    return ((x + m - 1) // m) * m


# ----------------------------------------------------------------------------
# Fused ResBlk kernel
# ----------------------------------------------------------------------------
def _resblk_kernel(has_extra, M, Mp, Cp, PAD, offsets, *refs):
    """Single-call fused ResBlk.

    refs (has_extra=True):
      p1, w1, g1, b1, w2, g2, b2, xs, we, ge, be, tap_mask, o_ref, h1_scr
    refs (has_extra=False):
      p1, w1, g1, b1, w2, g2, b2, x_id, tap_mask, o_ref, h1_scr
    """
    if has_extra:
        (p1, w1, g1, b1, w2, g2, b2, xs, we, ge, be, tmask, o_ref, h1_scr) = refs
    else:
        (p1, w1, g1, b1, w2, g2, b2, x_id, tmask, o_ref, h1_scr) = refs

    inv_m = 1.0 / float(M)

    def batchnorm(y, g, b):
        # Padded rows/cols of y are exactly zero (no conv bias), so plain sums with
        # a 1/M scale give the exact training-mode (biased) batch statistics.
        mean = jnp.sum(y, axis=0, keepdims=True) * inv_m
        var = jnp.sum(y * y, axis=0, keepdims=True) * inv_m - mean * mean
        return (y - mean) * lax.rsqrt(var + EPS) * g + b

    # --- conv1 (im2col GEMM, bf16 -> f32 acc) + BN1 + ReLU --------------------
    y1 = jnp.dot(p1[...], w1[...], preferred_element_type=jnp.float32)
    h1 = jnp.maximum(batchnorm(y1, g1[...], b1[...]), 0.0)

    # --- stage h1 in VMEM with zeroed border rows for the shifted-row conv2 ---
    h1_scr[...] = jnp.zeros_like(h1_scr)
    h1_scr[PAD:PAD + Mp, :] = h1.astype(jnp.bfloat16)

    # --- conv2 (3x3, stride 1) as 9 shifted matmuls ---------------------------
    # Output row r needs input row r + di*Wo + dj; spatial validity is handled by
    # the precomputed per-tap masks (which also zero padded rows r >= M).
    main = jnp.zeros((Mp, Cp), jnp.float32)
    for t, off in enumerate(offsets):
        m = tmask[t].astype(jnp.bfloat16)                 # (Mp, 1)
        sl = h1_scr[PAD + off:PAD + off + Mp, :]          # (Mp, Cp) bf16
        main = main + jnp.dot(sl * m, w2[t], preferred_element_type=jnp.float32)

    out = batchnorm(main, g2[...], b2[...])

    # --- shortcut branch ------------------------------------------------------
    if has_extra:
        s = jnp.dot(xs[...], we[...], preferred_element_type=jnp.float32)
        out = out + batchnorm(s, ge[...], be[...])
    else:
        out = out + x_id[...]

    o_ref[...] = jnp.maximum(out, 0.0)


# ----------------------------------------------------------------------------
# Plain-JAX glue: im2col for the (possibly strided) conv1
# ----------------------------------------------------------------------------
def _im2col(x_nhwc, k, stride, padding):
    N, H, W, C = x_nhwc.shape
    Ho = (H + 2 * padding - k) // stride + 1
    Wo = (W + 2 * padding - k) // stride + 1
    xp = jnp.pad(x_nhwc, ((0, 0), (padding, padding), (padding, padding), (0, 0)))
    cols = []
    for ki in range(k):
        for kj in range(k):
            cols.append(xp[:, ki:ki + stride * (Ho - 1) + 1:stride,
                              kj:kj + stride * (Wo - 1) + 1:stride, :])
    patches = jnp.stack(cols, axis=3)                     # (N, Ho, Wo, k*k, C)
    return patches.reshape(N * Ho * Wo, k * k * C), (N, Ho, Wo)


# ----------------------------------------------------------------------------
# One-time parameter preparation (hoisted out of the per-step forward)
# ----------------------------------------------------------------------------
def prepare_resblk_params(raw, ch_in, ch_out):
    Cp = _round_up(ch_out, 128)
    K1p = _round_up(9 * ch_in, 128)
    Cinp = _round_up(ch_in, 128)

    def pad2(a, r, c):
        return jnp.pad(a, ((0, r - a.shape[0]), (0, c - a.shape[1])))

    def bn_vec(v):
        return jnp.pad(v.reshape(1, -1), ((0, 0), (0, Cp - ch_out))).astype(jnp.float32)

    # conv1: (Cout, Cin, 3, 3) -> (9*Cin, Cout), tap-major rows matching im2col order
    w1 = jnp.transpose(raw["conv1"]["w"], (2, 3, 1, 0)).reshape(9 * ch_in, ch_out)
    w1 = pad2(w1, K1p, Cp).astype(jnp.bfloat16)

    # conv2: (Cout, Cin2, 3, 3) -> (9, Cin2, Cout), tap t = ki*3 + kj
    w2 = jnp.transpose(raw["conv2"]["w"], (2, 3, 1, 0)).reshape(9, ch_out, ch_out)
    w2 = jnp.pad(w2, ((0, 0), (0, Cp - ch_out), (0, Cp - ch_out))).astype(jnp.bfloat16)

    prepped = dict(
        w1=w1, g1=bn_vec(raw["bn1"]["gamma"]), b1=bn_vec(raw["bn1"]["beta"]),
        w2=w2, g2=bn_vec(raw["bn2"]["gamma"]), b2=bn_vec(raw["bn2"]["beta"]),
    )
    # NOTE: conv biases exist in `raw` (nn.Conv2d default) but are not prepared:
    # they cancel exactly under the train-mode BatchNorm that follows each conv.
    if ch_out != ch_in:
        we = raw["extra_conv"]["w"].reshape(ch_out, ch_in).T            # (Cin, Cout)
        prepped["we"] = pad2(we, Cinp, Cp).astype(jnp.bfloat16)
        prepped["ge"] = bn_vec(raw["extra_bn"]["gamma"])
        prepped["be"] = bn_vec(raw["extra_bn"]["beta"])
    return prepped


# ----------------------------------------------------------------------------
# ResBlk forward (NCHW in / NCHW out, like the PyTorch module)
# ----------------------------------------------------------------------------
def res_blk_forward(x_nchw, prepped, *, ch_in, ch_out, stride):
    has_extra = ch_out != ch_in
    x = jnp.transpose(x_nchw, (0, 2, 3, 1)).astype(jnp.float32)         # NHWC
    N = x.shape[0]

    patches1, (_, Ho, Wo) = _im2col(x, 3, stride, 1)
    M = N * Ho * Wo
    Mp = _round_up(max(M, 8), 8)
    Cp = _round_up(ch_out, 128)
    K1p = _round_up(9 * ch_in, 128)
    Cinp = _round_up(ch_in, 128)
    PAD = _round_up(Wo + 1, 8)

    p1 = jnp.pad(patches1, ((0, Mp - M), (0, K1p - 9 * ch_in))).astype(jnp.bfloat16)

    # conv2 tap offsets + validity masks: shape-only -> numpy compile-time constants.
    r = np.arange(Mp)
    ii = (r % (Ho * Wo)) // Wo
    jj = r % Wo
    valid_row = r < M
    offsets, masks = [], []
    for di in (-1, 0, 1):
        for dj in (-1, 0, 1):
            offsets.append(di * Wo + dj)
            masks.append(valid_row & (ii + di >= 0) & (ii + di < Ho)
                         & (jj + dj >= 0) & (jj + dj < Wo))
    tap_mask = jnp.asarray(np.stack(masks).astype(np.float32).reshape(9, Mp, 1))

    inputs = [p1, prepped["w1"], prepped["g1"], prepped["b1"],
              prepped["w2"], prepped["g2"], prepped["b2"]]
    if has_extra:
        xs = x[:, ::stride, ::stride, :].reshape(M, ch_in)              # 1x1 conv, stride s
        xs = jnp.pad(xs, ((0, Mp - M), (0, Cinp - ch_in))).astype(jnp.bfloat16)
        inputs += [xs, prepped["we"], prepped["ge"], prepped["be"]]
    else:
        x_id = jnp.pad(x.reshape(M, ch_in), ((0, Mp - M), (0, Cp - ch_in)))
        inputs += [x_id]
    inputs += [tap_mask]

    kernel = functools.partial(_resblk_kernel, has_extra, M, Mp, Cp, PAD, tuple(offsets))

    out = pl.pallas_call(
        kernel,
        out_shape=jax.ShapeDtypeStruct((Mp, Cp), jnp.float32),
        in_specs=[pl.BlockSpec(memory_space=pltpu.MemorySpace.VMEM)] * len(inputs),
        out_specs=pl.BlockSpec(memory_space=pltpu.MemorySpace.VMEM),
        scratch_shapes=[pltpu.VMEM((Mp + 2 * PAD, Cp), jnp.bfloat16)],
    )(*inputs)

    out = out[:M, :ch_out].reshape(N, Ho, Wo, ch_out)
    return jnp.transpose(out, (0, 3, 1, 2))                             # back to NCHW


# ----------------------------------------------------------------------------
# Pure-JAX f32 reference (keeps the conv biases, like the PyTorch module)
# ----------------------------------------------------------------------------
def reference_resblk(x_nchw, raw, ch_in, ch_out, stride):
    x = x_nchw.astype(jnp.float32)

    def conv(z, w, b, s, pad):
        out = lax.conv_general_dilated(z, w, (s, s), pad,
                                       dimension_numbers=("NCHW", "OIHW", "NCHW"))
        return out + b.reshape(1, -1, 1, 1)

    def bn(z, g, b):
        mean = z.mean(axis=(0, 2, 3), keepdims=True)
        var = ((z - mean) ** 2).mean(axis=(0, 2, 3), keepdims=True)
        return (z - mean) * lax.rsqrt(var + EPS) * g.reshape(1, -1, 1, 1) + b.reshape(1, -1, 1, 1)

    out = jax.nn.relu(bn(conv(x, raw["conv1"]["w"], raw["conv1"]["b"], stride, [(1, 1), (1, 1)]),
                         raw["bn1"]["gamma"], raw["bn1"]["beta"]))
    out = bn(conv(out, raw["conv2"]["w"], raw["conv2"]["b"], 1, [(1, 1), (1, 1)]),
             raw["bn2"]["gamma"], raw["bn2"]["beta"])
    if ch_out != ch_in:
        sc = bn(conv(x, raw["extra_conv"]["w"], raw["extra_conv"]["b"], stride, [(0, 0), (0, 0)]),
                raw["extra_bn"]["gamma"], raw["extra_bn"]["beta"])
    else:
        sc = x
    return jax.nn.relu(out + sc)


# ----------------------------------------------------------------------------
# Deterministic parameter init (shapes / defaults as in the module's __init__)
# ----------------------------------------------------------------------------
def init_resblk_params(key, ch_in, ch_out):
    ks = jax.random.split(key, 6)

    def conv_init(kw, kb, cout, cin, k):
        fan_in = cin * k * k
        bound = 1.0 / (fan_in ** 0.5)
        return dict(w=jax.random.uniform(kw, (cout, cin, k, k), jnp.float32, -bound, bound),
                    b=jax.random.uniform(kb, (cout,), jnp.float32, -bound, bound))

    def bn_init(c):
        return dict(gamma=jnp.ones((c,), jnp.float32), beta=jnp.zeros((c,), jnp.float32))

    p = dict(conv1=conv_init(ks[0], ks[1], ch_out, ch_in, 3), bn1=bn_init(ch_out),
             conv2=conv_init(ks[2], ks[3], ch_out, ch_out, 3), bn2=bn_init(ch_out))
    if ch_out != ch_in:
        p["extra_conv"] = conv_init(ks[4], ks[5], ch_out, ch_in, 1)
        p["extra_bn"] = bn_init(ch_out)
    return p


if __name__ == "__main__":
    key = jax.random.PRNGKey(0)
    kx1, kx2, kp1, kp2 = jax.random.split(key, 4)

    # Case 1: ch_in != ch_out, stride 2 -> `extra` shortcut (1x1 conv + BN)
    ch_in, ch_out, stride = 4, 8, 2
    x1 = jax.random.normal(kx1, (2, ch_in, 16, 16), jnp.float32)        # NCHW
    raw1 = init_resblk_params(kp1, ch_in, ch_out)
    prepped1 = prepare_resblk_params(raw1, ch_in, ch_out)
    fwd1 = jax.jit(functools.partial(res_blk_forward, ch_in=ch_in, ch_out=ch_out, stride=stride))
    y1 = jax.block_until_ready(fwd1(x1, prepped1))
    ref1 = reference_resblk(x1, raw1, ch_in, ch_out, stride)
    assert y1.shape == (2, ch_out, 8, 8)
    assert bool(jnp.all(jnp.isfinite(y1)))
    # bf16 MXU inputs (f32 accumulation) -> small drift vs. the f32 reference
    assert float(jnp.max(jnp.abs(y1 - ref1))) < 2e-1
    assert float(jnp.mean(jnp.abs(y1 - ref1))) < 2e-2

    # Case 2: ch_in == ch_out, stride 1 -> identity shortcut
    ch_in2 = ch_out2 = 8
    x2 = jax.random.normal(kx2, (2, ch_in2, 8, 8), jnp.float32)
    raw2 = init_resblk_params(kp2, ch_in2, ch_out2)
    prepped2 = prepare_resblk_params(raw2, ch_in2, ch_out2)
    fwd2 = jax.jit(functools.partial(res_blk_forward, ch_in=ch_in2, ch_out=ch_out2, stride=1))
    y2 = jax.block_until_ready(fwd2(x2, prepped2))
    ref2 = reference_resblk(x2, raw2, ch_in2, ch_out2, 1)
    assert y2.shape == (2, ch_out2, 8, 8)
    assert bool(jnp.all(jnp.isfinite(y2)))
    assert float(jnp.max(jnp.abs(y2 - ref2))) < 2e-1
    assert float(jnp.mean(jnp.abs(y2 - ref2))) < 2e-2

    print("KERNEL_OK")
</pallas_src>

<mosaic_0001>
module attributes {stable_mosaic.version = 11 : i64} {
  func.func @_resblk_kernel(%arg0: memref<128x128xbf16, #tpu.memory_space<vmem>>, %arg1: memref<128x128xbf16, #tpu.memory_space<vmem>>, %arg2: memref<1x128xf32, #tpu.memory_space<vmem>>, %arg3: memref<1x128xf32, #tpu.memory_space<vmem>>, %arg4: memref<9x128x128xbf16, #tpu.memory_space<vmem>>, %arg5: memref<1x128xf32, #tpu.memory_space<vmem>>, %arg6: memref<1x128xf32, #tpu.memory_space<vmem>>, %arg7: memref<128x128xbf16, #tpu.memory_space<vmem>>, %arg8: memref<128x128xbf16, #tpu.memory_space<vmem>>, %arg9: memref<1x128xf32, #tpu.memory_space<vmem>>, %arg10: memref<1x128xf32, #tpu.memory_space<vmem>>, %arg11: memref<9x128x1xf32, #tpu.memory_space<vmem>>, %arg12: memref<128x128xf32, #tpu.memory_space<vmem>>, %arg13: memref<160x128xbf16, #tpu.memory_space<vmem>>) attributes {dimension_semantics = [], scalar_prefetch = 0 : i64, scratch_operands = 1 : i64, tpu.core_type = #tpu.core_type<tc>} {
    %c0 = arith.constant 0 : index
    %c0_0 = arith.constant 0 : index
    %0 = vector.load %arg0[%c0, %c0_0] : memref<128x128xbf16, #tpu.memory_space<vmem>>, vector<128x128xbf16>
    %c0_1 = arith.constant 0 : index
    %c0_2 = arith.constant 0 : index
    %1 = vector.load %arg1[%c0_1, %c0_2] : memref<128x128xbf16, #tpu.memory_space<vmem>>, vector<128x128xbf16>
    %cst = arith.constant dense<0.000000e+00> : vector<128x128xf32>
    %2 = tpu.matmul %0, %1, %cst {dimension_numbers = #tpu.dot_dimension_numbers<[1], [0], [0], [1], [0, 0, 1, 1], [], []>} : vector<128x128xbf16>, vector<128x128xbf16>, vector<128x128xf32> -> vector<128x128xf32>
    %c0_3 = arith.constant 0 : index
    %c0_4 = arith.constant 0 : index
    %3 = vector.load %arg2[%c0_3, %c0_4] : memref<1x128xf32, #tpu.memory_space<vmem>>, vector<1x128xf32>
    %c0_5 = arith.constant 0 : index
    %c0_6 = arith.constant 0 : index
    %4 = vector.load %arg3[%c0_5, %c0_6] : memref<1x128xf32, #tpu.memory_space<vmem>>, vector<1x128xf32>
    %cst_7 = arith.constant dense<0.000000e+00> : vector<128xf32>
    %5 = vector.multi_reduction <add>, %2, %cst_7 [0] : vector<128x128xf32> to vector<128xf32>
    %6 = vector.shape_cast %5 : vector<128xf32> to vector<1x128xf32>
    %cst_8 = arith.constant 7.812500e-03 : f32
    %7 = vector.broadcast %cst_8 : f32 to vector<1x128xf32>
    %8 = arith.mulf %6, %7 : vector<1x128xf32>
    %9 = arith.mulf %2, %2 : vector<128x128xf32>
    %cst_9 = arith.constant dense<0.000000e+00> : vector<128xf32>
    %10 = vector.multi_reduction <add>, %9, %cst_9 [0] : vector<128x128xf32> to vector<128xf32>
    %11 = vector.shape_cast %10 : vector<128xf32> to vector<1x128xf32>
    %cst_10 = arith.constant 7.812500e-03 : f32
    %12 = vector.broadcast %cst_10 : f32 to vector<1x128xf32>
    %13 = arith.mulf %11, %12 : vector<1x128xf32>
    %14 = arith.mulf %8, %8 : vector<1x128xf32>
    %15 = arith.subf %13, %14 : vector<1x128xf32>
    %16 = vector.broadcast %8 : vector<1x128xf32> to vector<128x128xf32>
    %17 = arith.subf %2, %16 : vector<128x128xf32>
    %cst_11 = arith.constant 9.99999974E-6 : f32
    %18 = vector.broadcast %cst_11 : f32 to vector<1x128xf32>
    %19 = arith.addf %15, %18 : vector<1x128xf32>
    %20 = math.rsqrt %19 : vector<1x128xf32>
    %21 = vector.broadcast %20 : vector<1x128xf32> to vector<128x128xf32>
    %22 = arith.mulf %17, %21 : vector<128x128xf32>
    %23 = vector.broadcast %3 : vector<1x128xf32> to vector<128x128xf32>
    %24 = arith.mulf %22, %23 : vector<128x128xf32>
    %25 = vector.broadcast %4 : vector<1x128xf32> to vector<128x128xf32>
    %26 = arith.addf %24, %25 : vector<128x128xf32>
    %cst_12 = arith.constant 0.000000e+00 : f32
    %27 = vector.broadcast %cst_12 : f32 to vector<128x128xf32>
    %28 = arith.maximumf %26, %27 : vector<128x128xf32>
    %cst_13 = arith.constant 0.000000e+00 : bf16
    %29 = vector.broadcast %cst_13 : bf16 to vector<160x128xbf16>
    %c0_14 = arith.constant 0 : index
    %c0_15 = arith.constant 0 : index
    %30 = vector.load %arg13[%c0_14, %c0_15] : memref<160x128xbf16, #tpu.memory_space<vmem>>, vector<160x128xbf16>
    tpu.vector_store %arg13[%c0_14, %c0_15], %29 {strides = array<i32>} : memref<160x128xbf16, #tpu.memory_space<vmem>>, vector<160x128xbf16>,
    %31 = arith.truncf %28 : vector<128x128xf32> to vector<128x128xbf16>
    %c16 = arith.constant 16 : index
    %c0_16 = arith.constant 0 : index
    %32 = vector.load %arg13[%c16, %c0_16] : memref<160x128xbf16, #tpu.memory_space<vmem>>, vector<128x128xbf16>
    tpu.vector_store %arg13[%c16, %c0_16], %31 {strides = array<i32>} : memref<160x128xbf16, #tpu.memory_space<vmem>>, vector<128x128xbf16>,
    %cst_17 = arith.constant 0.000000e+00 : f32
    %33 = vector.broadcast %cst_17 : f32 to vector<128x128xf32>
    %c0_18 = arith.constant 0 : index
    %c0_19 = arith.constant 0 : index
    %c0_20 = arith.constant 0 : index
    %34 = vector.load %arg11[%c0_18, %c0_19, %c0_20] : memref<9x128x1xf32, #tpu.memory_space<vmem>>, vector<1x128x1xf32>
    %35 = vector.shape_cast %34 : vector<1x128x1xf32> to vector<128x1xf32>
    %36 = arith.truncf %35 : vector<128x1xf32> to vector<128x1xbf16>
    %c7 = arith.constant 7 : index
    %c0_21 = arith.constant 0 : index
    %37 = vector.load %arg13[%c7, %c0_21] : memref<160x128xbf16, #tpu.memory_space<vmem>>, vector<128x128xbf16>
    %38 = vector.broadcast %36 : vector<128x1xbf16> to vector<128x128xbf16>
    %39 = arith.mulf %37, %38 : vector<128x128xbf16>
    %c0_22 = arith.constant 0 : index
    %c0_23 = arith.constant 0 : index
    %c0_24 = arith.constant 0 : index
    %40 = vector.load %arg4[%c0_22, %c0_23, %c0_24] : memref<9x128x128xbf16, #tpu.memory_space<vmem>>, vector<1x128x128xbf16>
    %41 = vector.shape_cast %40 : vector<1x128x128xbf16> to vector<128x128xbf16>
    %cst_25 = arith.constant dense<0.000000e+00> : vector<128x128xf32>
    %42 = tpu.matmul %39, %41, %cst_25 {dimension_numbers = #tpu.dot_dimension_numbers<[1], [0], [0], [1], [0, 0, 1, 1], [], []>} : vector<128x128xbf16>, vector<128x128xbf16>, vector<128x128xf32> -> vector<128x128xf32>
    %43 = arith.addf %33, %42 : vector<128x128xf32>
    %c1 = arith.constant 1 : index
    %c0_26 = arith.constant 0 : index
    %c0_27 = arith.constant 0 : index
    %44 = vector.load %arg11[%c1, %c0_26, %c0_27] : memref<9x128x1xf32, #tpu.memory_space<vmem>>, vector<1x128x1xf32>
    %45 = vector.shape_cast %44 : vector<1x128x1xf32> to vector<128x1xf32>
    %46 = arith.truncf %45 : vector<128x1xf32> to vector<128x1xbf16>
    %c8 = arith.constant 8 : index
    %c0_28 = arith.constant 0 : index
    %47 = vector.load %arg13[%c8, %c0_28] : memref<160x128xbf16, #tpu.memory_space<vmem>>, vector<128x128xbf16>
    %48 = vector.broadcast %46 : vector<128x1xbf16> to vector<128x128xbf16>
    %49 = arith.mulf %47, %48 : vector<128x128xbf16>
    %c1_29 = arith.constant 1 : index
    %c0_30 = arith.constant 0 : index
    %c0_31 = arith.constant 0 : index
    %50 = vector.load %arg4[%c1_29, %c0_30, %c0_31] : memref<9x128x128xbf16, #tpu.memory_space<vmem>>, vector<1x128x128xbf16>
    %51 = vector.shape_cast %50 : vector<1x128x128xbf16> to vector<128x128xbf16>
    %cst_32 = arith.constant dense<0.000000e+00> : vector<128x128xf32>
    %52 = tpu.matmul %49, %51, %cst_32 {dimension_numbers = #tpu.dot_dimension_numbers<[1], [0], [0], [1], [0, 0, 1, 1], [], []>} : vector<128x128xbf16>, vector<128x128xbf16>, vector<128x128xf32> -> vector<128x128xf32>
    %53 = arith.addf %43, %52 : vector<128x128xf32>
    %c2 = arith.constant 2 : index
    %c0_33 = arith.constant 0 : index
    %c0_34 = arith.constant 0 : index
    %54 = vector.load %arg11[%c2, %c0_33, %c0_34] : memref<9x128x1xf32, #tpu.memory_space<vmem>>, vector<1x128x1xf32>
    %55 = vector.shape_cast %54 : vector<1x128x1xf32> to vector<128x1xf32>
    %56 = arith.truncf %55 : vector<128x1xf32> to vector<128x1xbf16>
    %c9 = arith.constant 9 : index
    %c0_35 = arith.constant 0 : index
    %57 = vector.load %arg13[%c9, %c0_35] : memref<160x128xbf16, #tpu.memory_space<vmem>>, vector<128x128xbf16>
    %58 = vector.broadcast %56 : vector<128x1xbf16> to vector<128x128xbf16>
    %59 = arith.mulf %57, %58 : vector<128x128xbf16>
    %c2_36 = arith.constant 2 : index
    %c0_37 = arith.constant 0 : index
    %c0_38 = arith.constant 0 : index
    %60 = vector.load %arg4[%c2_36, %c0_37, %c0_38] : memref<9x128x128xbf16, #tpu.memory_space<vmem>>, vector<1x128x128xbf16>
    %61 = vector.shape_cast %60 : vector<1x128x128xbf16> to vector<128x128xbf16>
    %cst_39 = arith.constant dense<0.000000e+00> : vector<128x128xf32>
    %62 = tpu.matmul %59, %61, %cst_39 {dimension_numbers = #tpu.dot_dimension_numbers<[1], [0], [0], [1], [0, 0, 1, 1], [], []>} : vector<128x128xbf16>, vector<128x128xbf16>, vector<128x128xf32> -> vector<128x128xf32>
    %63 = arith.addf %53, %62 : vector<128x128xf32>
    %c3 = arith.constant 3 : index
    %c0_40 = arith.constant 0 : index
    %c0_41 = arith.constant 0 : index
    %64 = vector.load %arg11[%c3, %c0_40, %c0_41] : memref<9x128x1xf32, #tpu.memory_space<vmem>>, vector<1x128x1xf32>
    %65 = vector.shape_cast %64 : vector<1x128x1xf32> to vector<128x1xf32>
    %66 = arith.truncf %65 : vector<128x1xf32> to vector<128x1xbf16>
    %c15 = arith.constant 15 : index
    %c0_42 = arith.constant 0 : index
    %67 = vector.load %arg13[%c15, %c0_42] : memref<160x128xbf16, #tpu.memory_space<vmem>>, vector<128x128xbf16>
    %68 = vector.broadcast %66 : vector<128x1xbf16> to vector<128x128xbf16>
    %69 = arith.mulf %67, %68 : vector<128x128xbf16>
    %c3_43 = arith.constant 3 : index
    %c0_44 = arith.constant 0 : index
    %c0_45 = arith.constant 0 : index
    %70 = vector.load %arg4[%c3_43, %c0_44, %c0_45] : memref<9x128x128xbf16, #tpu.memory_space<vmem>>, vector<1x128x128xbf16>
    %71 = vector.shape_cast %70 : vector<1x128x128xbf16> to vector<128x128xbf16>
    %cst_46 = arith.constant dense<0.000000e+00> : vector<128x128xf32>
    %72 = tpu.matmul %69, %71, %cst_46 {dimension_numbers = #tpu.dot_dimension_numbers<[1], [0], [0], [1], [0, 0, 1, 1], [], []>} : vector<128x128xbf16>, vector<128x128xbf16>, vector<128x128xf32> -> vector<128x128xf32>
    %73 = arith.addf %63, %72 : vector<128x128xf32>
    %c4 = arith.constant 4 : index
    %c0_47 = arith.constant 0 : index
    %c0_48 = arith.constant 0 : index
    %74 = vector.load %arg11[%c4, %c0_47, %c0_48] : memref<9x128x1xf32, #tpu.memory_space<vmem>>, vector<1x128x1xf32>
    %75 = vector.shape_cast %74 : vector<1x128x1xf32> to vector<128x1xf32>
    %76 = arith.truncf %75 : vector<128x1xf32> to vector<128x1xbf16>
    %c16_49 = arith.constant 16 : index
    %c0_50 = arith.constant 0 : index
    %77 = vector.load %arg13[%c16_49, %c0_50] : memref<160x128xbf16, #tpu.memory_space<vmem>>, vector<128x128xbf16>
    %78 = vector.broadcast %76 : vector<128x1xbf16> to vector<128x128xbf16>
    %79 = arith.mulf %77, %78 : vector<128x128xbf16>
    %c4_51 = arith.constant 4 : index
    %c0_52 = arith.constant 0 : index
    %c0_53 = arith.constant 0 : index
    %80 = vector.load %arg4[%c4_51, %c0_52, %c0_53] : memref<9x128x128xbf16, #tpu.memory_space<vmem>>, vector<1x128x128xbf16>
    %81 = vector.shape_cast %80 : vector<1x128x128xbf16> to vector<128x128xbf16>
    %cst_54 = arith.constant dense<0.000000e+00> : vector<128x128xf32>
    %82 = tpu.matmul %79, %81, %cst_54 {dimension_numbers = #tpu.dot_dimension_numbers<[1], [0], [0], [1], [0, 0, 1, 1], [], []>} : vector<128x128xbf16>, vector<128x128xbf16>, vector<128x128xf32> -> vector<128x128xf32>
    %83 = arith.addf %73, %82 : vector<128x128xf32>
    %c5 = arith.constant 5 : index
    %c0_55 = arith.constant 0 : index
    %c0_56 = arith.constant 0 : index
    %84 = vector.load %arg11[%c5, %c0_55, %c0_56] : memref<9x128x1xf32, #tpu.memory_space<vmem>>, vector<1x128x1xf32>
    %85 = vector.shape_cast %84 : vector<1x128x1xf32> to vector<128x1xf32>
    %86 = arith.truncf %85 : vector<128x1xf32> to vector<128x1xbf16>
    %c17 = arith.constant 17 : index
    %c0_57 = arith.constant 0 : index
    %87 = vector.load %arg13[%c17, %c0_57] : memref<160x128xbf16, #tpu.memory_space<vmem>>, vector<128x128xbf16>
    %88 = vector.broadcast %86 : vector<128x1xbf16> to vector<128x128xbf16>
    %89 = arith.mulf %87, %88 : vector<128x128xbf16>
    %c5_58 = arith.constant 5 : index
    %c0_59 = arith.constant 0 : index
    %c0_60 = arith.constant 0 : index
    %90 = vector.load %arg4[%c5_58, %c0_59, %c0_60] : memref<9x128x128xbf16, #tpu.memory_space<vmem>>, vector<1x128x128xbf16>
    %91 = vector.shape_cast %90 : vector<1x128x128xbf16> to vector<128x128xbf16>
    %cst_61 = arith.constant dense<0.000000e+00> : vector<128x128xf32>
    %92 = tpu.matmul %89, %91, %cst_61 {dimension_numbers = #tpu.dot_dimension_numbers<[1], [0], [0], [1], [0, 0, 1, 1], [], []>} : vector<128x128xbf16>, vector<128x128xbf16>, vector<128x128xf32> -> vector<128x128xf32>
    %93 = arith.addf %83, %92 : vector<128x128xf32>
    %c6 = arith.constant 6 : index
    %c0_62 = arith.constant 0 : index
    %c0_63 = arith.constant 0 : index
    %94 = vector.load %arg11[%c6, %c0_62, %c0_63] : memref<9x128x1xf32, #tpu.memory_space<vmem>>, vector<1x128x1xf32>
    %95 = vector.shape_cast %94 : vector<1x128x1xf32> to vector<128x1xf32>
    %96 = arith.truncf %95 : vector<128x1xf32> to vector<128x1xbf16>
    %c23 = arith.constant 23 : index
    %c0_64 = arith.constant 0 : index
    %97 = vector.load %arg13[%c23, %c0_64] : memref<160x128xbf16, #tpu.memory_space<vmem>>, vector<128x128xbf16>
    %98 = vector.broadcast %96 : vector<128x1xbf16> to vector<128x128xbf16>
    %99 = arith.mulf %97, %98 : vector<128x128xbf16>
    %c6_65 = arith.constant 6 : index
    %c0_66 = arith.constant 0 : index
    %c0_67 = arith.constant 0 : index
    %100 = vector.load %arg4[%c6_65, %c0_66, %c0_67] : memref<9x128x128xbf16, #tpu.memory_space<vmem>>, vector<1x128x128xbf16>
    %101 = vector.shape_cast %100 : vector<1x128x128xbf16> to vector<128x128xbf16>
    %cst_68 = arith.constant dense<0.000000e+00> : vector<128x128xf32>
    %102 = tpu.matmul %99, %101, %cst_68 {dimension_numbers = #tpu.dot_dimension_numbers<[1], [0], [0], [1], [0, 0, 1, 1], [], []>} : vector<128x128xbf16>, vector<128x128xbf16>, vector<128x128xf32> -> vector<128x128xf32>
    %103 = arith.addf %93, %102 : vector<128x128xf32>
    %c7_69 = arith.constant 7 : index
    %c0_70 = arith.constant 0 : index
    %c0_71 = arith.constant 0 : index
    %104 = vector.load %arg11[%c7_69, %c0_70, %c0_71] : memref<9x128x1xf32, #tpu.memory_space<vmem>>, vector<1x128x1xf32>
    %105 = vector.shape_cast %104 : vector<1x128x1xf32> to vector<128x1xf32>
    %106 = arith.truncf %105 : vector<128x1xf32> to vector<128x1xbf16>
    %c24 = arith.constant 24 : index
    %c0_72 = arith.constant 0 : index
    %107 = vector.load %arg13[%c24, %c0_72] : memref<160x128xbf16, #tpu.memory_space<vmem>>, vector<128x128xbf16>
    %108 = vector.broadcast %106 : vector<128x1xbf16> to vector<128x128xbf16>
    %109 = arith.mulf %107, %108 : vector<128x128xbf16>
    %c7_73 = arith.constant 7 : index
    %c0_74 = arith.constant 0 : index
    %c0_75 = arith.constant 0 : index
    %110 = vector.load %arg4[%c7_73, %c0_74, %c0_75] : memref<9x128x128xbf16, #tpu.memory_space<vmem>>, vector<1x128x128xbf16>
    %111 = vector.shape_cast %110 : vector<1x128x128xbf16> to vector<128x128xbf16>
    %cst_76 = arith.constant dense<0.000000e+00> : vector<128x128xf32>
    %112 = tpu.matmul %109, %111, %cst_76 {dimension_numbers = #tpu.dot_dimension_numbers<[1], [0], [0], [1], [0, 0, 1, 1], [], []>} : vector<128x128xbf16>, vector<128x128xbf16>, vector<128x128xf32> -> vector<128x128xf32>
    %113 = arith.addf %103, %112 : vector<128x128xf32>
    %c8_77 = arith.constant 8 : index
    %c0_78 = arith.constant 0 : index
    %c0_79 = arith.constant 0 : index
    %114 = vector.load %arg11[%c8_77, %c0_78, %c0_79] : memref<9x128x1xf32, #tpu.memory_space<vmem>>, vector<1x128x1xf32>
    %115 = vector.shape_cast %114 : vector<1x128x1xf32> to vector<128x1xf32>
    %116 = arith.truncf %115 : vector<128x1xf32> to vector<128x1xbf16>
    %c25 = arith.constant 25 : index
    %c0_80 = arith.constant 0 : index
    %117 = vector.load %arg13[%c25, %c0_80] : memref<160x128xbf16, #tpu.memory_space<vmem>>, vector<128x128xbf16>
    %118 = vector.broadcast %116 : vector<128x1xbf16> to vector<128x128xbf16>
    %119 = arith.mulf %117, %118 : vector<128x128xbf16>
    %c8_81 = arith.constant 8 : index
    %c0_82 = arith.constant 0 : index
    %c0_83 = arith.constant 0 : index
    %120 = vector.load %arg4[%c8_81, %c0_82, %c0_83] : memref<9x128x128xbf16, #tpu.memory_space<vmem>>, vector<1x128x128xbf16>
    %121 = vector.shape_cast %120 : vector<1x128x128xbf16> to vector<128x128xbf16>
    %cst_84 = arith.constant dense<0.000000e+00> : vector<128x128xf32>
    %122 = tpu.matmul %119, %121, %cst_84 {dimension_numbers = #tpu.dot_dimension_numbers<[1], [0], [0], [1], [0, 0, 1, 1], [], []>} : vector<128x128xbf16>, vector<128x128xbf16>, vector<128x128xf32> -> vector<128x128xf32>
    %123 = arith.addf %113, %122 : vector<128x128xf32>
    %c0_85 = arith.constant 0 : index
    %c0_86 = arith.constant 0 : index
    %124 = vector.load %arg5[%c0_85, %c0_86] : memref<1x128xf32, #tpu.memory_space<vmem>>, vector<1x128xf32>
    %c0_87 = arith.constant 0 : index
    %c0_88 = arith.constant 0 : index
    %125 = vector.load %arg6[%c0_87, %c0_88] : memref<1x128xf32, #tpu.memory_space<vmem>>, vector<1x128xf32>
    %cst_89 = arith.constant dense<0.000000e+00> : vector<128xf32>
    %126 = vector.multi_reduction <add>, %123, %cst_89 [0] : vector<128x128xf32> to vector<128xf32>
    %127 = vector.shape_cast %126 : vector<128xf32> to vector<1x128xf32>
    %cst_90 = arith.constant 7.812500e-03 : f32
    %128 = vector.broadcast %cst_90 : f32 to vector<1x128xf32>
    %129 = arith.mulf %127, %128 : vector<1x128xf32>
    %130 = arith.mulf %123, %123 : vector<128x128xf32>
    %cst_91 = arith.constant dense<0.000000e+00> : vector<128xf32>
    %131 = vector.multi_reduction <add>, %130, %cst_91 [0] : vector<128x128xf32> to vector<128xf32>
    %132 = vector.shape_cast %131 : vector<128xf32> to vector<1x128xf32>
    %cst_92 = arith.constant 7.812500e-03 : f32
    %133 = vector.broadcast %cst_92 : f32 to vector<1x128xf32>
    %134 = arith.mulf %132, %133 : vector<1x128xf32>
    %135 = arith.mulf %129, %129 : vector<1x128xf32>
    %136 = arith.subf %134, %135 : vector<1x128xf32>
    %137 = vector.broadcast %129 : vector<1x128xf32> to vector<128x128xf32>
    %138 = arith.subf %123, %137 : vector<128x128xf32>
    %cst_93 = arith.constant 9.99999974E-6 : f32
    %139 = vector.broadcast %cst_93 : f32 to vector<1x128xf32>
    %140 = arith.addf %136, %139 : vector<1x128xf32>
    %141 = math.rsqrt %140 : vector<1x128xf32>
    %142 = vector.broadcast %141 : vector<1x128xf32> to vector<128x128xf32>
    %143 = arith.mulf %138, %142 : vector<128x128xf32>
    %144 = vector.broadcast %124 : vector<1x128xf32> to vector<128x128xf32>
    %145 = arith.mulf %143, %144 : vector<128x128xf32>
    %146 = vector.broadcast %125 : vector<1x128xf32> to vector<128x128xf32>
    %147 = arith.addf %145, %146 : vector<128x128xf32>
    %c0_94 = arith.constant 0 : index
    %c0_95 = arith.constant 0 : index
    %148 = vector.load %arg7[%c0_94, %c0_95] : memref<128x128xbf16, #tpu.memory_space<vmem>>, vector<128x128xbf16>
    %c0_96 = arith.constant 0 : index
    %c0_97 = arith.constant 0 : index
    %149 = vector.load %arg8[%c0_96, %c0_97] : memref<128x128xbf16, #tpu.memory_space<vmem>>, vector<128x128xbf16>
    %cst_98 = arith.constant dense<0.000000e+00> : vector<128x128xf32>
    %150 = tpu.matmul %148, %149, %cst_98 {dimension_numbers = #tpu.dot_dimension_numbers<[1], [0], [0], [1], [0, 0, 1, 1], [], []>} : vector<128x128xbf16>, vector<128x128xbf16>, vector<128x128xf32> -> vector<128x128xf32>
    %c0_99 = arith.constant 0 : index
    %c0_100 = arith.constant 0 : index
    %151 = vector.load %arg9[%c0_99, %c0_100] : memref<1x128xf32, #tpu.memory_space<vmem>>, vector<1x128xf32>
    %c0_101 = arith.constant 0 : index
    %c0_102 = arith.constant 0 : index
    %152 = vector.load %arg10[%c0_101, %c0_102] : memref<1x128xf32, #tpu.memory_space<vmem>>, vector<1x128xf32>
    %cst_103 = arith.constant dense<0.000000e+00> : vector<128xf32>
    %153 = vector.multi_reduction <add>, %150, %cst_103 [0] : vector<128x128xf32> to vector<128xf32>
    %154 = vector.shape_cast %153 : vector<128xf32> to vector<1x128xf32>
    %cst_104 = arith.constant 7.812500e-03 : f32
    %155 = vector.broadcast %cst_104 : f32 to vector<1x128xf32>
    %156 = arith.mulf %154, %155 : vector<1x128xf32>
    %157 = arith.mulf %150, %150 : vector<128x128xf32>
    %cst_105 = arith.constant dense<0.000000e+00> : vector<128xf32>
    %158 = vector.multi_reduction <add>, %157, %cst_105 [0] : vector<128x128xf32> to vector<128xf32>
    %159 = vector.shape_cast %158 : vector<128xf32> to vector<1x128xf32>
    %cst_106 = arith.constant 7.812500e-03 : f32
    %160 = vector.broadcast %cst_106 : f32 to vector<1x128xf32>
    %161 = arith.mulf %159, %160 : vector<1x128xf32>
    %162 = arith.mulf %156, %156 : vector<1x128xf32>
    %163 = arith.subf %161, %162 : vector<1x128xf32>
    %164 = vector.broadcast %156 : vector<1x128xf32> to vector<128x128xf32>
    %165 = arith.subf %150, %164 : vector<128x128xf32>
    %cst_107 = arith.constant 9.99999974E-6 : f32
    %166 = vector.broadcast %cst_107 : f32 to vector<1x128xf32>
    %167 = arith.addf %163, %166 : vector<1x128xf32>
    %168 = math.rsqrt %167 : vector<1x128xf32>
    %169 = vector.broadcast %168 : vector<1x128xf32> to vector<128x128xf32>
    %170 = arith.mulf %165, %169 : vector<128x128xf32>
    %171 = vector.broadcast %151 : vector<1x128xf32> to vector<128x128xf32>
    %172 = arith.mulf %170, %171 : vector<128x128xf32>
    %173 = vector.broadcast %152 : vector<1x128xf32> to vector<128x128xf32>
    %174 = arith.addf %172, %173 : vector<128x128xf32>
    %175 = arith.addf %147, %174 : vector<128x128xf32>
    %cst_108 = arith.constant 0.000000e+00 : f32
    %176 = vector.broadcast %cst_108 : f32 to vector<128x128xf32>
    %177 = arith.maximumf %175, %176 : vector<128x128xf32>
    %c0_109 = arith.constant 0 : index
    %c0_110 = arith.constant 0 : index
    %178 = vector.load %arg12[%c0_109, %c0_110] : memref<128x128xf32, #tpu.memory_space<vmem>>, vector<128x128xf32>
    tpu.vector_store %arg12[%c0_109, %c0_110], %177 {strides = array<i32>} : memref<128x128xf32, #tpu.memory_space<vmem>>, vector<128x128xf32>,
    return
  }
}

</mosaic_0001>

<llo_original>
// kernel: res_blk_forward.1
$region0: #{res_blk_forward.1}
  #allocation0 [shape = 'u32[]', space=smem, size = 0x4, offset = 0x4, fixed_abs, tag = 'smem constant byte address 0x4 - core index']
  #allocation1 [shape = 'u32[72,128]{1,0:T(1,128)}', space=vmem, size = 0x9000, scoped, tag = 'internal scratch']
  #allocation2 [shape = 'bf16[160,128]{1,0:T(8,128)(2,1)}', space=vmem, size = 0xa000, scoped, tag = 'scratch operand']
  %s0 = inlined_call_operand.vmem [shape: bf16[128,128], index: 0, kind: input, shape index: {}]
  %s1 = inlined_call_operand.vmem [shape: bf16[128,128], index: 1, kind: input, shape index: {}]
  %s2 = inlined_call_operand.vmem [shape: f32[1,128], index: 2, kind: input, shape index: {}]
  %s3 = inlined_call_operand.vmem [shape: f32[1,128], index: 3, kind: input, shape index: {}]
  %s4 = inlined_call_operand.vmem [shape: bf16[9,128,128], index: 4, kind: input, shape index: {}]
  %s5 = inlined_call_operand.vmem [shape: f32[1,128], index: 5, kind: input, shape index: {}]
  %s6 = inlined_call_operand.vmem [shape: f32[1,128], index: 6, kind: input, shape index: {}]
  %s7 = inlined_call_operand.vmem [shape: bf16[128,128], index: 7, kind: input, shape index: {}]
  %s8 = inlined_call_operand.vmem [shape: bf16[128,128], index: 8, kind: input, shape index: {}]
  %s9 = inlined_call_operand.vmem [shape: f32[1,128], index: 9, kind: input, shape index: {}]
  %s10 = inlined_call_operand.vmem [shape: f32[1,128], index: 10, kind: input, shape index: {}]
  %s11 = inlined_call_operand.vmem [shape: f32[9,128,1], index: 11, kind: input, shape index: {}]
  %s12 = inlined_call_operand.vmem [shape: f32[128,128], index: 12, kind: output, shape index: {}]
  %s13 = sld [smem:[#allocation0]]
  $region58: #{res_blk_forward.1} parent=0
    _
  %s15 = ssub.s32 1, %s13
  %s16 = scalar_select 0, %s15, %s13
  // Predicated region
  $region2: #{res_blk_forward.1} parent=0 // pred_check
    _
  $region3: #{res_blk_forward.1} parent=0 // pred_check_branch
    %18 = sbr.rel (0) target = $region5
  $region4: #{res_blk_forward.1} parent=0 // pred_region
    _
  $region5: #{res_blk_forward.1} parent=0 // pred_fallthru
    _
  // Predicated region
  $region6: #{res_blk_forward.1} parent=0 // pred_check
    _
  $region7: #{res_blk_forward.1} parent=0 // pred_check_branch
    %20 = sbr.rel (0) target = $region9
  $region8: #{res_blk_forward.1} parent=0 // pred_region
    _
  $region9: #{res_blk_forward.1} parent=0 // pred_fallthru
    _
  // Predicated region
  $region10: #{res_blk_forward.1} parent=0 // pred_check
    _
  $region11: #{res_blk_forward.1} parent=0 // pred_check_branch
    %22 = sbr.rel (0) target = $region13
  $region12: #{res_blk_forward.1} parent=0 // pred_region
    _
  $region13: #{res_blk_forward.1} parent=0 // pred_fallthru
    _
  // Predicated region
  $region14: #{res_blk_forward.1} parent=0 // pred_check
    _
  $region15: #{res_blk_forward.1} parent=0 // pred_check_branch
    %24 = sbr.rel (0) target = $region17
  $region16: #{res_blk_forward.1} parent=0 // pred_region
    _
  $region17: #{res_blk_forward.1} parent=0 // pred_fallthru
    _
  // Predicated region
  $region18: #{res_blk_forward.1} parent=0 // pred_check
    _
  $region19: #{res_blk_forward.1} parent=0 // pred_check_branch
    %26 = sbr.rel (0) target = $region21
  $region20: #{res_blk_forward.1} parent=0 // pred_region
    _
  $region21: #{res_blk_forward.1} parent=0 // pred_fallthru
    _
  // Predicated region
  $region22: #{res_blk_forward.1} parent=0 // pred_check
    _
  $region23: #{res_blk_forward.1} parent=0 // pred_check_branch
    %28 = sbr.rel (0) target = $region25
  $region24: #{res_blk_forward.1} parent=0 // pred_region
    _
  $region25: #{res_blk_forward.1} parent=0 // pred_fallthru
    _
  // Predicated region
  $region26: #{res_blk_forward.1} parent=0 // pred_check
    _
  $region27: #{res_blk_forward.1} parent=0 // pred_check_branch
    %30 = sbr.rel (0) target = $region29
  $region28: #{res_blk_forward.1} parent=0 // pred_region
    _
  $region29: #{res_blk_forward.1} parent=0 // pred_fallthru
    _
  // Predicated region
  $region30: #{res_blk_forward.1} parent=0 // pred_check
    _
  $region31: #{res_blk_forward.1} parent=0 // pred_check_branch
    %32 = sbr.rel (0) target = $region33
  $region32: #{res_blk_forward.1} parent=0 // pred_region
    _
  $region33: #{res_blk_forward.1} parent=0 // pred_fallthru
    _
  // Predicated region
  $region34: #{res_blk_forward.1} parent=0 // pred_check
    _
  $region35: #{res_blk_forward.1} parent=0 // pred_check_branch
    %34 = sbr.rel (0) target = $region37
  $region36: #{res_blk_forward.1} parent=0 // pred_region
    _
  $region37: #{res_blk_forward.1} parent=0 // pred_fallthru
    _
  // Predicated region
  $region38: #{res_blk_forward.1} parent=0 // pred_check
    _
  $region39: #{res_blk_forward.1} parent=0 // pred_check_branch
    %36 = sbr.rel (0) target = $region41
  $region40: #{res_blk_forward.1} parent=0 // pred_region
    _
  $region41: #{res_blk_forward.1} parent=0 // pred_fallthru
    _
  // Predicated region
  $region42: #{res_blk_forward.1} parent=0 // pred_check
    _
  $region43: #{res_blk_forward.1} parent=0 // pred_check_branch
    %38 = sbr.rel (0) target = $region45
  $region44: #{res_blk_forward.1} parent=0 // pred_region
    _
  $region45: #{res_blk_forward.1} parent=0 // pred_fallthru
    _
  // Predicated region
  $region46: #{res_blk_forward.1} parent=0 // pred_check
    _
  $region47: #{res_blk_forward.1} parent=0 // pred_check_branch
    %40 = sbr.rel (0) target = $region49
  $region48: #{res_blk_forward.1} parent=0 // pred_region
    _
  $region49: #{res_blk_forward.1} parent=0 // pred_fallthru
    _
  %v42 = vld [vmem:[%s0] sm:$0xf]
  %v43 = vld [vmem:[%s0 + $0x4] sm:$0xf]
  %v44 = vld [vmem:[%s0 + $0x8] sm:$0xf]
  %v45 = vld [vmem:[%s0 + $0xc] sm:$0xf]
  %v46 = vld [vmem:[%s0 + $0x10] sm:$0xf]
  %v47 = vld [vmem:[%s0 + $0x14] sm:$0xf]
  %v48 = vld [vmem:[%s0 + $0x18] sm:$0xf]
  %v49 = vld [vmem:[%s0 + $0x1c] sm:$0xf]
  %v50 = vld [vmem:[%s0 + $0x20] sm:$0xf]
  %v51 = vld [vmem:[%s0 + $0x24] sm:$0xf]
  %v52 = vld [vmem:[%s0 + $0x28] sm:$0xf]
  %v53 = vld [vmem:[%s0 + $0x2c] sm:$0xf]
  %v54 = vld [vmem:[%s0 + $0x30] sm:$0xf]
  %v55 = vld [vmem:[%s0 + $0x34] sm:$0xf]
  %v56 = vld [vmem:[%s0 + $0x38] sm:$0xf]
  %v57 = vld [vmem:[%s0 + $0x3c] sm:$0xf]
  %v58 = vld [vmem:[%s1] sm:$0xf]
  %v59 = vld [vmem:[%s1 + $0x4] sm:$0xf]
  %v60 = vld [vmem:[%s1 + $0x8] sm:$0xf]
  %v61 = vld [vmem:[%s1 + $0xc] sm:$0xf]
  %v62 = vld [vmem:[%s1 + $0x10] sm:$0xf]
  %v63 = vld [vmem:[%s1 + $0x14] sm:$0xf]
  %v64 = vld [vmem:[%s1 + $0x18] sm:$0xf]
  %v65 = vld [vmem:[%s1 + $0x1c] sm:$0xf]
  %v66 = vld [vmem:[%s1 + $0x20] sm:$0xf]
  %v67 = vld [vmem:[%s1 + $0x24] sm:$0xf]
  %v68 = vld [vmem:[%s1 + $0x28] sm:$0xf]
  %v69 = vld [vmem:[%s1 + $0x2c] sm:$0xf]
  %v70 = vld [vmem:[%s1 + $0x30] sm:$0xf]
  %v71 = vld [vmem:[%s1 + $0x34] sm:$0xf]
  %v72 = vld [vmem:[%s1 + $0x38] sm:$0xf]
  %v73 = vld [vmem:[%s1 + $0x3c] sm:$0xf]
  %v90 = vunpack.c.l.b16 %v42
  %v91 = vunpack.c.l.b16 %v43
  %v92 = vunpack.c.l.b16 %v44
  %v93 = vunpack.c.l.b16 %v45
  %v94 = vunpack.c.l.b16 %v46
  %v95 = vunpack.c.l.b16 %v47
  %v96 = vunpack.c.l.b16 %v48
  %v97 = vunpack.c.l.b16 %v49
  %v98 = vunpack.c.l.b16 %v50
  %v99 = vunpack.c.l.b16 %v51
  %v100 = vunpack.c.l.b16 %v52
  %v101 = vunpack.c.l.b16 %v53
  %v102 = vunpack.c.l.b16 %v54
  %v103 = vunpack.c.l.b16 %v55
  %v104 = vunpack.c.l.b16 %v56
  %v105 = vunpack.c.l.b16 %v57
  %v106 = vpack.c.b16 %v91, %v90
  %v107 = vpack.c.b16 %v93, %v92
  %v108 = vpack.c.b16 %v95, %v94
  %v109 = vpack.c.b16 %v97, %v96
  %v110 = vpack.c.b16 %v99, %v98
  %v111 = vpack.c.b16 %v101, %v100
  %v112 = vpack.c.b16 %v103, %v102
  %v113 = vpack.c.b16 %v105, %v104
  %v138 = vunpack.c.l.b16 %v58
  %v139 = vunpack.c.l.b16 %v59
  %v140 = vunpack.c.l.b16 %v60
  %v141 = vunpack.c.l.b16 %v61
  %v142 = vunpack.c.l.b16 %v62
  %v143 = vunpack.c.l.b16 %v63
  %v144 = vunpack.c.l.b16 %v64
  %v145 = vunpack.c.l.b16 %v65
  %v146 = vunpack.c.l.b16 %v66
  %v147 = vunpack.c.l.b16 %v67
  %v148 = vunpack.c.l.b16 %v68
  %v149 = vunpack.c.l.b16 %v69
  %v150 = vunpack.c.l.b16 %v70
  %v151 = vunpack.c.l.b16 %v71
  %v152 = vunpack.c.l.b16 %v72
  %v153 = vunpack.c.l.b16 %v73
  %v154 = vpack.c.b16 %v139, %v138
  %v155 = vpack.c.b16 %v141, %v140
  %v156 = vpack.c.b16 %v143, %v142
  %v157 = vpack.c.b16 %v145, %v144
  %v158 = vpack.c.b16 %v147, %v146
  %v159 = vpack.c.b16 %v149, %v148
  %v160 = vpack.c.b16 %v151, %v150
  %v161 = vpack.c.b16 %v153, %v152
  %170 = vmatpush.bf16.msra.mxu0 %v161
  %171 = vmatpush.bf16.msra.mxu0 %v160
  %172 = vmatpush.bf16.msra.mxu0 %v159
  %173 = vmatpush.bf16.msra.mxu0 %v158
  %174 = vmatpush.bf16.msra.mxu0 %v157
  %175 = vmatpush.bf16.msra.mxu0 %v156
  %176 = vmatpush.bf16.msra.mxu0 %v155
  %177 = vmatpush.bf16.msra.mxu0 %v154
  %178 = vmatmul.bf16.gmra.mxu0 %v106
  %v179 = vpop.f32.mrf.mxu0
  %v180 = vadd.f32 0.0, %v179
  %v181 = vpop.f32.mrf.mxu0
  %v182 = vadd.f32 0.0, %v181
  %183 = vmatmul.bf16.gmra.mxu0 %v107
  %v184 = vpop.f32.mrf.mxu0
  %v185 = vadd.f32 0.0, %v184
  %v186 = vpop.f32.mrf.mxu0
  %v187 = vadd.f32 0.0, %v186
  %188 = vmatmul.bf16.gmra.mxu0 %v108
  %v189 = vpop.f32.mrf.mxu0
  %v190 = vadd.f32 0.0, %v189
  %v191 = vpop.f32.mrf.mxu0
  %v192 = vadd.f32 0.0, %v191
  %193 = vmatmul.bf16.gmra.mxu0 %v109
  %v194 = vpop.f32.mrf.mxu0
  %v195 = vadd.f32 0.0, %v194
  %v196 = vpop.f32.mrf.mxu0
  %v197 = vadd.f32 0.0, %v196
  %198 = vmatmul.bf16.gmra.mxu0 %v110
  %v199 = vpop.f32.mrf.mxu0
  %v200 = vadd.f32 0.0, %v199
  %v201 = vpop.f32.mrf.mxu0
  %v202 = vadd.f32 0.0, %v201
  %203 = vmatmul.bf16.gmra.mxu0 %v111
  %v204 = vpop.f32.mrf.mxu0
  %v205 = vadd.f32 0.0, %v204
  %v206 = vpop.f32.mrf.mxu0
  %v207 = vadd.f32 0.0, %v206
  %208 = vmatmul.bf16.gmra.mxu0 %v112
  %v209 = vpop.f32.mrf.mxu0
  %v210 = vadd.f32 0.0, %v209
  %v211 = vpop.f32.mrf.mxu0
  %v212 = vadd.f32 0.0, %v211
  %213 = vmatmul.bf16.gmra.mxu0 %v113
  %v214 = vpop.f32.mrf.mxu0
  %v215 = vadd.f32 0.0, %v214
  %v216 = vpop.f32.mrf.mxu0
  %v217 = vadd.f32 0.0, %v216
  %218 = vdwg.mxu0
  %v219 = vld [vmem:[%s2] sm:$0x1]
  %v220 = vld [vmem:[%s3] sm:$0x1]
  %v221 = vadd.f32 %v180, %v182
  %v222 = vadd.f32 %v221, %v185
  %v223 = vadd.f32 %v222, %v187
  %v224 = vadd.f32 %v223, %v190
  %v225 = vadd.f32 %v224, %v192
  %v226 = vadd.f32 %v225, %v195
  %v227 = vadd.f32 %v226, %v197
  %v228 = vadd.f32 %v227, %v200
  %v229 = vadd.f32 %v228, %v202
  %v230 = vadd.f32 %v229, %v205
  %v231 = vadd.f32 %v230, %v207
  %v232 = vadd.f32 %v231, %v210
  %v233 = vadd.f32 %v232, %v212
  %v234 = vadd.f32 %v233, %v215
  %v235 = vadd.f32 %v234, %v217
  %v236 = vrot.slane %v235, 4
  %v237 = vadd.f32 %v235, %v236
  %v238 = vrot.slane %v237, 2
  %v239 = vadd.f32 %v237, %v238
  %v240 = vrot.slane %v239, 1
  %v241 = vadd.f32 %v239, %v240
  %v242 = vmul.f32 %v241, 0.0078125
  %v243 = vmul.f32 %v180, %v180
  %v244 = vmul.f32 %v182, %v182
  %v245 = vmul.f32 %v185, %v185
  %v246 = vmul.f32 %v187, %v187
  %v247 = vmul.f32 %v190, %v190
  %v248 = vmul.f32 %v192, %v192
  %v249 = vmul.f32 %v195, %v195
  %v250 = vmul.f32 %v197, %v197
  %v251 = vmul.f32 %v200, %v200
  %v252 = vmul.f32 %v202, %v202
  %v253 = vmul.f32 %v205, %v205
  %v254 = vmul.f32 %v207, %v207
  %v255 = vmul.f32 %v210, %v210
  %v256 = vmul.f32 %v212, %v212
  %v257 = vmul.f32 %v215, %v215
  %v258 = vmul.f32 %v217, %v217
  %v259 = vadd.f32 %v243, %v244
  %v260 = vadd.f32 %v259, %v245
  %v261 = vadd.f32 %v260, %v246
  %v262 = vadd.f32 %v261, %v247
  %v263 = vadd.f32 %v262, %v248
  %v264 = vadd.f32 %v263, %v249
  %v265 = vadd.f32 %v264, %v250
  %v266 = vadd.f32 %v265, %v251
  %v267 = vadd.f32 %v266, %v252
  %v268 = vadd.f32 %v267, %v253
  %v269 = vadd.f32 %v268, %v254
  %v270 = vadd.f32 %v269, %v255
  %v271 = vadd.f32 %v270, %v256
  %v272 = vadd.f32 %v271, %v257
  %v273 = vadd.f32 %v272, %v258
  %v274 = vrot.slane %v273, 4
  %v275 = vadd.f32 %v273, %v274
  %v276 = vrot.slane %v275, 2
  %v277 = vadd.f32 %v275, %v276
  %v278 = vrot.slane %v277, 1
  %v279 = vadd.f32 %v277, %v278
  %v280 = vmul.f32 %v279, 0.0078125
  %v281 = vmul.f32 %v242, %v242
  %v282 = vsub.f32 %v280, %v281
  %v283 = vsub.f32 %v180, %v242
  %v284 = vsub.f32 %v182, %v242
  %v285 = vsub.f32 %v185, %v242
  %v286 = vsub.f32 %v187, %v242
  %v287 = vsub.f32 %v190, %v242
  %v288 = vsub.f32 %v192, %v242
  %v289 = vsub.f32 %v195, %v242
  %v290 = vsub.f32 %v197, %v242
  %v291 = vsub.f32 %v200, %v242
  %v292 = vsub.f32 %v202, %v242
  %v293 = vsub.f32 %v205, %v242
  %v294 = vsub.f32 %v207, %v242
  %v295 = vsub.f32 %v210, %v242
  %v296 = vsub.f32 %v212, %v242
  %v297 = vsub.f32 %v215, %v242
  %v298 = vsub.f32 %v217, %v242
  %v299 = vadd.f32 %v282, 1e-05
  %v300 = vrsqrt.pop %v299
  %v301 = vmul.f32 %v300, %v299
  %v302 = vmul.f32 %v301, %v300
  %v303 = vmul.f32 0.5, %v302
  %v304 = vsub.f32 1.5, %v303
  %v305 = vmul.f32 %v300, %v304
  %vm306 = vweird.f32 %v299
  %vm307 = vweird.f32 %v300
  %vm308 = vmor %vm306, %vm307
  %v309 = vsel %vm308, %v300, %v305
  %v310 = vmul.f32 %v283, %v309
  %v311 = vmul.f32 %v284, %v309
  %v312 = vmul.f32 %v285, %v309
  %v313 = vmul.f32 %v286, %v309
  %v314 = vmul.f32 %v287, %v309
  %v315 = vmul.f32 %v288, %v309
  %v316 = vmul.f32 %v289, %v309
  %v317 = vmul.f32 %v290, %v309
  %v318 = vmul.f32 %v291, %v309
  %v319 = vmul.f32 %v292, %v309
  %v320 = vmul.f32 %v293, %v309
  %v321 = vmul.f32 %v294, %v309
  %v322 = vmul.f32 %v295, %v309
  %v323 = vmul.f32 %v296, %v309
  %v324 = vmul.f32 %v297, %v309
  %v325 = vmul.f32 %v298, %v309
  %v327 = vperm.slane %v219, 0
  %v329 = vmul.f32 %v310, %v327
  %v330 = vmul.f32 %v311, %v327
  %v331 = vmul.f32 %v312, %v327
  %v332 = vmul.f32 %v313, %v327
  %v333 = vmul.f32 %v314, %v327
  %v334 = vmul.f32 %v315, %v327
  %v335 = vmul.f32 %v316, %v327
  %v336 = vmul.f32 %v317, %v327
  %v337 = vmul.f32 %v318, %v327
  %v338 = vmul.f32 %v319, %v327
  %v339 = vmul.f32 %v320, %v327
  %v340 = vmul.f32 %v321, %v327
  %v341 = vmul.f32 %v322, %v327
  %v342 = vmul.f32 %v323, %v327
  %v343 = vmul.f32 %v324, %v327
  %v344 = vmul.f32 %v325, %v327
  %v346 = vperm.slane %v220, 0
  %v348 = vadd.f32 %v329, %v346
  %v349 = vadd.f32 %v330, %v346
  %v350 = vadd.f32 %v331, %v346
  %v351 = vadd.f32 %v332, %v346
  %v352 = vadd.f32 %v333, %v346
  %v353 = vadd.f32 %v334, %v346
  %v354 = vadd.f32 %v335, %v346
  %v355 = vadd.f32 %v336, %v346
  %v356 = vadd.f32 %v337, %v346
  %v357 = vadd.f32 %v338, %v346
  %v358 = vadd.f32 %v339, %v346
  %v359 = vadd.f32 %v340, %v346
  %v360 = vadd.f32 %v341, %v346
  %v361 = vadd.f32 %v342, %v346
  %v362 = vadd.f32 %v343, %v346
  %v363 = vadd.f32 %v344, %v346
  %v364 = vmax.f32 %v348, 0.0
  %v365 = vmax.f32 %v349, 0.0
  %v366 = vmax.f32 %v350, 0.0
  %v367 = vmax.f32 %v351, 0.0
  %v368 = vmax.f32 %v352, 0.0
  %v369 = vmax.f32 %v353, 0.0
  %v370 = vmax.f32 %v354, 0.0
  %v371 = vmax.f32 %v355, 0.0
  %v372 = vmax.f32 %v356, 0.0
  %v373 = vmax.f32 %v357, 0.0
  %v374 = vmax.f32 %v358, 0.0
  %v375 = vmax.f32 %v359, 0.0
  %v376 = vmax.f32 %v360, 0.0
  %v377 = vmax.f32 %v361, 0.0
  %v378 = vmax.f32 %v362, 0.0
  %v379 = vmax.f32 %v363, 0.0
  %380 = vst [vmem:[#allocation2] sm:$0xf] 0
  %381 = vst [vmem:[#allocation2 + $0x4] sm:$0xf] 0
  %382 = vst [vmem:[#allocation2 + $0x8] sm:$0xf] 0
  %383 = vst [vmem:[#allocation2 + $0xc] sm:$0xf] 0
  %384 = vst [vmem:[#allocation2 + $0x10] sm:$0xf] 0
  %385 = vst [vmem:[#allocation2 + $0x14] sm:$0xf] 0
  %386 = vst [vmem:[#allocation2 + $0x18] sm:$0xf] 0
  %387 = vst [vmem:[#allocation2 + $0x1c] sm:$0xf] 0
  %388 = vst [vmem:[#allocation2 + $0x20] sm:$0xf] 0
  %389 = vst [vmem:[#allocation2 + $0x24] sm:$0xf] 0
  %390 = vst [vmem:[#allocation2 + $0x28] sm:$0xf] 0
  %391 = vst [vmem:[#allocation2 + $0x2c] sm:$0xf] 0
  %392 = vst [vmem:[#allocation2 + $0x30] sm:$0xf] 0
  %393 = vst [vmem:[#allocation2 + $0x34] sm:$0xf] 0
  %394 = vst [vmem:[#allocation2 + $0x38] sm:$0xf] 0
  %395 = vst [vmem:[#allocation2 + $0x3c] sm:$0xf] 0
  %396 = vst [vmem:[#allocation2 + $0x40] sm:$0xf] 0
  %397 = vst [vmem:[#allocation2 + $0x44] sm:$0xf] 0
  %398 = vst [vmem:[#allocation2 + $0x48] sm:$0xf] 0
  %399 = vst [vmem:[#allocation2 + $0x4c] sm:$0xf] 0
  %v400 = vpack.c.bf16 %v364, %v364
  %v401 = vpack.c.bf16 %v365, %v365
  %v402 = vpack.c.bf16 %v366, %v366
  %v403 = vpack.c.bf16 %v367, %v367
  %v404 = vpack.c.bf16 %v368, %v368
  %v405 = vpack.c.bf16 %v369, %v369
  %v406 = vpack.c.bf16 %v370, %v370
  %v407 = vpack.c.bf16 %v371, %v371
  %v408 = vpack.c.bf16 %v372, %v372
  %v409 = vpack.c.bf16 %v373, %v373
  %v410 = vpack.c.bf16 %v374, %v374
  %v411 = vpack.c.bf16 %v375, %v375
  %v412 = vpack.c.bf16 %v376, %v376
  %v413 = vpack.c.bf16 %v377, %v377
  %v414 = vpack.c.bf16 %v378, %v378
  %v415 = vpack.c.bf16 %v379, %v379
  %416 = vst [vmem:[#allocation2 + $0x8] sm:$0xf] %v400
  %417 = vst [vmem:[#allocation2 + $0xc] sm:$0xf] %v401
  %418 = vst [vmem:[#allocation2 + $0x10] sm:$0xf] %v402
  %419 = vst [vmem:[#allocation2 + $0x14] sm:$0xf] %v403
  %420 = vst [vmem:[#allocation2 + $0x18] sm:$0xf] %v404
  %421 = vst [vmem:[#allocation2 + $0x1c] sm:$0xf] %v405
  %422 = vst [vmem:[#allocation2 + $0x20] sm:$0xf] %v406
  %423 = vst [vmem:[#allocation2 + $0x24] sm:$0xf] %v407
  %424 = vst [vmem:[#allocation2 + $0x28] sm:$0xf] %v408
  %425 = vst [vmem:[#allocation2 + $0x2c] sm:$0xf] %v409
  %426 = vst [vmem:[#allocation2 + $0x30] sm:$0xf] %v410
  %427 = vst [vmem:[#allocation2 + $0x34] sm:$0xf] %v411
  %428 = vst [vmem:[#allocation2 + $0x38] sm:$0xf] %v412
  %429 = vst [vmem:[#allocation2 + $0x3c] sm:$0xf] %v413
  %430 = vst [vmem:[#allocation2 + $0x40] sm:$0xf] %v414
  %431 = vst [vmem:[#allocation2 + $0x44] sm:$0xf] %v415
  %v432 = vld [vmem:[%s11] sm:$0xff]
  %v433 = vld [vmem:[%s11 + $0x8] sm:$0xff]
  %v434 = vld [vmem:[%s11 + $0x10] sm:$0xff]
  %v435 = vld [vmem:[%s11 + $0x18] sm:$0xff]
  %v436 = vld [vmem:[%s11 + $0x20] sm:$0xff]
  %v437 = vld [vmem:[%s11 + $0x28] sm:$0xff]
  %v438 = vld [vmem:[%s11 + $0x30] sm:$0xff]
  %v439 = vld [vmem:[%s11 + $0x38] sm:$0xff]
  %v440 = vld [vmem:[%s11 + $0x40] sm:$0xff]
  %v441 = vld [vmem:[%s11 + $0x48] sm:$0xff]
  %v442 = vld [vmem:[%s11 + $0x50] sm:$0xff]
  %v443 = vld [vmem:[%s11 + $0x58] sm:$0xff]
  %v444 = vld [vmem:[%s11 + $0x60] sm:$0xff]
  %v445 = vld [vmem:[%s11 + $0x68] sm:$0xff]
  %v446 = vld [vmem:[%s11 + $0x70] sm:$0xff]
  %v447 = vld [vmem:[%s11 + $0x78] sm:$0xff]
  %v448 = vpack.c.bf16 %v432, %v432
  %v449 = vpack.c.bf16 %v433, %v433
  %v450 = vpack.c.bf16 %v434, %v434
  %v451 = vpack.c.bf16 %v435, %v435
  %v452 = vpack.c.bf16 %v436, %v436
  %v453 = vpack.c.bf16 %v437, %v437
  %v454 = vpack.c.bf16 %v438, %v438
  %v455 = vpack.c.bf16 %v439, %v439
  %v456 = vpack.c.bf16 %v440, %v440
  %v457 = vpack.c.bf16 %v441, %v441
  %v458 = vpack.c.bf16 %v442, %v442
  %v459 = vpack.c.bf16 %v443, %v443
  %v460 = vpack.c.bf16 %v444, %v444
  %v461 = vpack.c.bf16 %v445, %v445
  %v462 = vpack.c.bf16 %v446, %v446
  %v463 = vpack.c.bf16 %v447, %v447
  %v464 = vld [vmem:[#allocation2] sm:$0x8]
  %v465 = vld [vmem:[#allocation2 + $0x4] sm:$0xf]
  %v466 = vld [vmem:[#allocation2 + $0x8] sm:$0xf]
  %v467 = vld [vmem:[#allocation2 + $0xc] sm:$0xf]
  %v468 = vld [vmem:[#allocation2 + $0x10] sm:$0xf]
  %v469 = vld [vmem:[#allocation2 + $0x14] sm:$0xf]
  %v470 = vld [vmem:[#allocation2 + $0x18] sm:$0xf]
  %v471 = vld [vmem:[#allocation2 + $0x1c] sm:$0xf]
  %v472 = vld [vmem:[#allocation2 + $0x20] sm:$0xf]
  %v473 = vld [vmem:[#allocation2 + $0x24] sm:$0xf]
  %v474 = vld [vmem:[#allocation2 + $0x28] sm:$0xf]
  %v475 = vld [vmem:[#allocation2 + $0x2c] sm:$0xf]
  %v476 = vld [vmem:[#allocation2 + $0x30] sm:$0xf]
  %v477 = vld [vmem:[#allocation2 + $0x34] sm:$0xf]
  %v478 = vld [vmem:[#allocation2 + $0x38] sm:$0xf]
  %v479 = vld [vmem:[#allocation2 + $0x3c] sm:$0xf]
  %v480 = vld [vmem:[#allocation2 + $0x40] sm:$0xf]
  %482 = vset.pattern.permute.xlu0 0
  %483 = vperm.xlu0 %482, %v448
  %v484 = vpop.permute.xlu0 %483
  %v487 = vunpack.c.l.s4 839922192
  %v488 = vunpack.c.0.s8 %v487
  %v489 = vperm.slane %v484, %v488
  %491 = vset.pattern.permute.xlu0 0
  %492 = vperm.xlu0 %491, %v449
  %v493 = vpop.permute.xlu0 %492
  %v496 = vunpack.c.l.s4 839922192
  %v497 = vunpack.c.0.s8 %v496
  %v498 = vperm.slane %v493, %v497
  %500 = vset.pattern.permute.xlu0 0
  %501 = vperm.xlu0 %500, %v450
  %v502 = vpop.permute.xlu0 %501
  %v505 = vunpack.c.l.s4 839922192
  %v506 = vunpack.c.0.s8 %v505
  %v507 = vperm.slane %v502, %v506
  %509 = vset.pattern.permute.xlu0 0
  %510 = vperm.xlu0 %509, %v451
  %v511 = vpop.permute.xlu0 %510
  %v514 = vunpack.c.l.s4 839922192
  %v515 = vunpack.c.0.s8 %v514
  %v516 = vperm.slane %v511, %v515
  %518 = vset.pattern.permute.xlu0 0
  %519 = vperm.xlu0 %518, %v452
  %v520 = vpop.permute.xlu0 %519
  %v523 = vunpack.c.l.s4 839922192
  %v524 = vunpack.c.0.s8 %v523
  %v525 = vperm.slane %v520, %v524
  %527 = vset.pattern.permute.xlu0 0
  %528 = vperm.xlu0 %527, %v453
  %v529 = vpop.permute.xlu0 %528
  %v532 = vunpack.c.l.s4 839922192
  %v533 = vunpack.c.0.s8 %v532
  %v534 = vperm.slane %v529, %v533
  %536 = vset.pattern.permute.xlu0 0
  %537 = vperm.xlu0 %536, %v454
  %v538 = vpop.permute.xlu0 %537
  %v541 = vunpack.c.l.s4 839922192
  %v542 = vunpack.c.0.s8 %v541
  %v543 = vperm.slane %v538, %v542
  %545 = vset.pattern.permute.xlu0 0
  %546 = vperm.xlu0 %545, %v455
  %v547 = vpop.permute.xlu0 %546
  %v550 = vunpack.c.l.s4 839922192
  %v551 = vunpack.c.0.s8 %v550
  %v552 = vperm.slane %v547, %v551
  %554 = vset.pattern.permute.xlu0 0
  %555 = vperm.xlu0 %554, %v456
  %v556 = vpop.permute.xlu0 %555
  %v559 = vunpack.c.l.s4 839922192
  %v560 = vunpack.c.0.s8 %v559
  %v561 = vperm.slane %v556, %v560
  %563 = vset.pattern.permute.xlu0 0
  %564 = vperm.xlu0 %563, %v457
  %v565 = vpop.permute.xlu0 %564
  %v568 = vunpack.c.l.s4 839922192
  %v569 = vunpack.c.0.s8 %v568
  %v570 = vperm.slane %v565, %v569
  %572 = vset.pattern.permute.xlu0 0
  %573 = vperm.xlu0 %572, %v458
  %v574 = vpop.permute.xlu0 %573
  %v577 = vunpack.c.l.s4 839922192
  %v578 = vunpack.c.0.s8 %v577
  %v579 = vperm.slane %v574, %v578
  %581 = vset.pattern.permute.xlu0 0
  %582 = vperm.xlu0 %581, %v459
  %v583 = vpop.permute.xlu0 %582
  %v586 = vunpack.c.l.s4 839922192
  %v587 = vunpack.c.0.s8 %v586
  %v588 = vperm.slane %v583, %v587
  %590 = vset.pattern.permute.xlu0 0
  %591 = vperm.xlu0 %590, %v460
  %v592 = vpop.permute.xlu0 %591
  %v595 = vunpack.c.l.s4 839922192
  %v596 = vunpack.c.0.s8 %v595
  %v597 = vperm.slane %v592, %v596
  %599 = vset.pattern.permute.xlu0 0
  %600 = vperm.xlu0 %599, %v461
  %v601 = vpop.permute.xlu0 %600
  %v604 = vunpack.c.l.s4 839922192
  %v605 = vunpack.c.0.s8 %v604
  %v606 = vperm.slane %v601, %v605
  %608 = vset.pattern.permute.xlu0 0
  %609 = vperm.xlu0 %608, %v462
  %v610 = vpop.permute.xlu0 %609
  %v613 = vunpack.c.l.s4 839922192
  %v614 = vunpack.c.0.s8 %v613
  %v615 = vperm.slane %v610, %v614
  %617 = vset.pattern.permute.xlu0 0
  %618 = vperm.xlu0 %617, %v463
  %v619 = vpop.permute.xlu0 %618
  %v622 = vunpack.c.l.s4 839922192
  %v623 = vunpack.c.0.s8 %v622
  %v624 = vperm.slane %v619, %v623
  %v625 = vunpack.c.l.bf16 %v464
  %v626 = vunpack.c.l.bf16 %v465
  %v627 = vunpack.c.l.bf16 %v466
  %v628 = vunpack.c.l.bf16 %v467
  %v629 = vunpack.c.l.bf16 %v468
  %v630 = vunpack.c.l.bf16 %v469
  %v631 = vunpack.c.l.bf16 %v470
  %v632 = vunpack.c.l.bf16 %v471
  %v633 = vunpack.c.l.bf16 %v472
  %v634 = vunpack.c.l.bf16 %v473
  %v635 = vunpack.c.l.bf16 %v474
  %v636 = vunpack.c.l.bf16 %v475
  %v637 = vunpack.c.l.bf16 %v476
  %v638 = vunpack.c.l.bf16 %v477
  %v639 = vunpack.c.l.bf16 %v478
  %v640 = vunpack.c.l.bf16 %v479
  %v641 = vunpack.c.l.bf16 %v480
  %v642 = vunpack.c.l.bf16 %v489
  %v643 = vunpack.c.l.bf16 %v498
  %v644 = vunpack.c.l.bf16 %v507
  %v645 = vunpack.c.l.bf16 %v516
  %v646 = vunpack.c.l.bf16 %v525
  %v647 = vunpack.c.l.bf16 %v534
  %v648 = vunpack.c.l.bf16 %v543
  %v649 = vunpack.c.l.bf16 %v552
  %v650 = vunpack.c.l.bf16 %v561
  %v651 = vunpack.c.l.bf16 %v570
  %v652 = vunpack.c.l.bf16 %v579
  %v653 = vunpack.c.l.bf16 %v588
  %v654 = vunpack.c.l.bf16 %v597
  %v655 = vunpack.c.l.bf16 %v606
  %v656 = vunpack.c.l.bf16 %v615
  %v657 = vunpack.c.l.bf16 %v624
  %vm674 = vcmask 1046528
  %v675 = vrot.slane %v642, 1
  %v676 = vrot.slane %v643, 1
  %v677 = vsel %vm674, %v675, %v676
  %v678 = vrot.slane %v644, 1
  %v679 = vsel %vm674, %v676, %v678
  %v680 = vrot.slane %v645, 1
  %v681 = vsel %vm674, %v678, %v680
  %v682 = vrot.slane %v646, 1
  %v683 = vsel %vm674, %v680, %v682
  %v684 = vrot.slane %v647, 1
  %v685 = vsel %vm674, %v682, %v684
  %v686 = vrot.slane %v648, 1
  %v687 = vsel %vm674, %v684, %v686
  %v688 = vrot.slane %v649, 1
  %v689 = vsel %vm674, %v686, %v688
  %v690 = vrot.slane %v650, 1
  %v691 = vsel %vm674, %v688, %v690
  %v692 = vrot.slane %v651, 1
  %v693 = vsel %vm674, %v690, %v692
  %v694 = vrot.slane %v652, 1
  %v695 = vsel %vm674, %v692, %v694
  %v696 = vrot.slane %v653, 1
  %v697 = vsel %vm674, %v694, %v696
  %v698 = vrot.slane %v654, 1
  %v699 = vsel %vm674, %v696, %v698
  %v700 = vrot.slane %v655, 1
  %v701 = vsel %vm674, %v698, %v700
  %v702 = vrot.slane %v656, 1
  %v703 = vsel %vm674, %v700, %v702
  %v704 = vrot.slane %v657, 1
  %v705 = vsel %vm674, %v702, %v704
  %v723 = vmul.f32 %v625, %v675
  %v724 = vmul.f32 %v626, %v677
  %v725 = vmul.f32 %v627, %v679
  %v726 = vmul.f32 %v628, %v681
  %v727 = vmul.f32 %v629, %v683
  %v728 = vmul.f32 %v630, %v685
  %v729 = vmul.f32 %v631, %v687
  %v730 = vmul.f32 %v632, %v689
  %v731 = vmul.f32 %v633, %v691
  %v732 = vmul.f32 %v634, %v693
  %v733 = vmul.f32 %v635, %v695
  %v734 = vmul.f32 %v636, %v697
  %v735 = vmul.f32 %v637, %v699
  %v736 = vmul.f32 %v638, %v701
  %v737 = vmul.f32 %v639, %v703
  %v738 = vmul.f32 %v640, %v705
  %v739 = vmul.f32 %v641, %v704
  %v740 = vpack.c.bf16 %v724, %v723
  %v741 = vpack.c.bf16 %v726, %v725
  %v742 = vpack.c.bf16 %v728, %v727
  %v743 = vpack.c.bf16 %v730, %v729
  %v744 = vpack.c.bf16 %v732, %v731
  %v745 = vpack.c.bf16 %v734, %v733
  %v746 = vpack.c.bf16 %v736, %v735
  %v747 = vpack.c.bf16 %v738, %v737
  %v748 = vpack.c.bf16 %v739, %v739
  %v749 = vld [vmem:[%s4] sm:$0xf]
  %v750 = vld [vmem:[%s4 + $0x4] sm:$0xf]
  %v751 = vld [vmem:[%s4 + $0x8] sm:$0xf]
  %v752 = vld [vmem:[%s4 + $0xc] sm:$0xf]
  %v753 = vld [vmem:[%s4 + $0x10] sm:$0xf]
  %v754 = vld [vmem:[%s4 + $0x14] sm:$0xf]
  %v755 = vld [vmem:[%s4 + $0x18] sm:$0xf]
  %v756 = vld [vmem:[%s4 + $0x1c] sm:$0xf]
  %v757 = vld [vmem:[%s4 + $0x20] sm:$0xf]
  %v758 = vld [vmem:[%s4 + $0x24] sm:$0xf]
  %v759 = vld [vmem:[%s4 + $0x28] sm:$0xf]
  %v760 = vld [vmem:[%s4 + $0x2c] sm:$0xf]
  %v761 = vld [vmem:[%s4 + $0x30] sm:$0xf]
  %v762 = vld [vmem:[%s4 + $0x34] sm:$0xf]
  %v763 = vld [vmem:[%s4 + $0x38] sm:$0xf]
  %v764 = vld [vmem:[%s4 + $0x3c] sm:$0xf]
  %s765 = scalar_lea.vmem %s11, 128
  %v766 = vld [vmem:[%s765] sm:$0xff]
  %v767 = vld [vmem:[%s765 + $0x8] sm:$0xff]
  %v768 = vld [vmem:[%s765 + $0x10] sm:$0xff]
  %v769 = vld [vmem:[%s765 + $0x18] sm:$0xff]
  %v770 = vld [vmem:[%s765 + $0x20] sm:$0xff]
  %v771 = vld [vmem:[%s765 + $0x28] sm:$0xff]
  %v772 = vld [vmem:[%s765 + $0x30] sm:$0xff]
  %v773 = vld [vmem:[%s765 + $0x38] sm:$0xff]
  %v774 = vld [vmem:[%s765 + $0x40] sm:$0xff]
  %v775 = vld [vmem:[%s765 + $0x48] sm:$0xff]
  %v776 = vld [vmem:[%s765 + $0x50] sm:$0xff]
  %v777 = vld [vmem:[%s765 + $0x58] sm:$0xff]
  %v778 = vld [vmem:[%s765 + $0x60] sm:$0xff]
  %v779 = vld [vmem:[%s765 + $0x68] sm:$0xff]
  %v780 = vld [vmem:[%s765 + $0x70] sm:$0xff]
  %v781 = vld [vmem:[%s765 + $0x78] sm:$0xff]
  %v782 = vpack.c.bf16 %v766, %v766
  %v783 = vpack.c.bf16 %v767, %v767
  %v784 = vpack.c.bf16 %v768, %v768
  %v785 = vpack.c.bf16 %v769, %v769
  %v786 = vpack.c.bf16 %v770, %v770
  %v787 = vpack.c.bf16 %v771, %v771
  %v788 = vpack.c.bf16 %v772, %v772
  %v789 = vpack.c.bf16 %v773, %v773
  %v790 = vpack.c.bf16 %v774, %v774
  %v791 = vpack.c.bf16 %v775, %v775
  %v792 = vpack.c.bf16 %v776, %v776
  %v793 = vpack.c.bf16 %v777, %v777
  %v794 = vpack.c.bf16 %v778, %v778
  %v795 = vpack.c.bf16 %v779, %v779
  %v796 = vpack.c.bf16 %v780, %v780
  %v797 = vpack.c.bf16 %v781, %v781
  %799 = vset.pattern.permute.xlu0 0
  %800 = vperm.xlu0 %799, %v782
  %v801 = vpop.permute.xlu0 %800
  %v804 = vunpack.c.l.s4 839922192
  %v805 = vunpack.c.0.s8 %v804
  %v806 = vperm.slane %v801, %v805
  %808 = vset.pattern.permute.xlu0 0
  %809 = vperm.xlu0 %808, %v783
  %v810 = vpop.permute.xlu0 %809
  %v813 = vunpack.c.l.s4 839922192
  %v814 = vunpack.c.0.s8 %v813
  %v815 = vperm.slane %v810, %v814
  %817 = vset.pattern.permute.xlu0 0
  %818 = vperm.xlu0 %817, %v784
  %v819 = vpop.permute.xlu0 %818
  %v822 = vunpack.c.l.s4 839922192
  %v823 = vunpack.c.0.s8 %v822
  %v824 = vperm.slane %v819, %v823
  %826 = vset.pattern.permute.xlu0 0
  %827 = vperm.xlu0 %826, %v785
  %v828 = vpop.permute.xlu0 %827
  %v831 = vunpack.c.l.s4 839922192
  %v832 = vunpack.c.0.s8 %v831
  %v833 = vperm.slane %v828, %v832
  %835 = vset.pattern.permute.xlu0 0
  %836 = vperm.xlu0 %835, %v786
  %v837 = vpop.permute.xlu0 %836
  %v840 = vunpack.c.l.s4 839922192
  %v841 = vunpack.c.0.s8 %v840
  %v842 = vperm.slane %v837, %v841
  %844 = vset.pattern.permute.xlu0 0
  %845 = vperm.xlu0 %844, %v787
  %v846 = vpop.permute.xlu0 %845
  %v849 = vunpack.c.l.s4 839922192
  %v850 = vunpack.c.0.s8 %v849
  %v851 = vperm.slane %v846, %v850
  %853 = vset.pattern.permute.xlu0 0
  %854 = vperm.xlu0 %853, %v788
  %v855 = vpop.permute.xlu0 %854
  %v858 = vunpack.c.l.s4 839922192
  %v859 = vunpack.c.0.s8 %v858
  %v860 = vperm.slane %v855, %v859
  %862 = vset.pattern.permute.xlu0 0
  %863 = vperm.xlu0 %862, %v789
  %v864 = vpop.permute.xlu0 %863
  %v867 = vunpack.c.l.s4 839922192
  %v868 = vunpack.c.0.s8 %v867
  %v869 = vperm.slane %v864, %v868
  %871 = vset.pattern.permute.xlu0 0
  %872 = vperm.xlu0 %871, %v790
  %v873 = vpop.permute.xlu0 %872
  %v876 = vunpack.c.l.s4 839922192
  %v877 = vunpack.c.0.s8 %v876
  %v878 = vperm.slane %v873, %v877
  %880 = vset.pattern.permute.xlu0 0
  %881 = vperm.xlu0 %880, %v791
  %v882 = vpop.permute.xlu0 %881
  %v885 = vunpack.c.l.s4 839922192
  %v886 = vunpack.c.0.s8 %v885
  %v887 = vperm.slane %v882, %v886
  %889 = vset.pattern.permute.xlu0 0
  %890 = vperm.xlu0 %889, %v792
  %v891 = vpop.permute.xlu0 %890
  %v894 = vunpack.c.l.s4 839922192
  %v895 = vunpack.c.0.s8 %v894
  %v896 = vperm.slane %v891, %v895
  %898 = vset.pattern.permute.xlu0 0
  %899 = vperm.xlu0 %898, %v793
  %v900 = vpop.permute.xlu0 %899
  %v903 = vunpack.c.l.s4 839922192
  %v904 = vunpack.c.0.s8 %v903
  %v905 = vperm.slane %v900, %v904
  %907 = vset.pattern.permute.xlu0 0
  %908 = vperm.xlu0 %907, %v794
  %v909 = vpop.permute.xlu0 %908
  %v912 = vunpack.c.l.s4 839922192
  %v913 = vunpack.c.0.s8 %v912
  %v914 = vperm.slane %v909, %v913
  %916 = vset.pattern.permute.xlu0 0
  %917 = vperm.xlu0 %916, %v795
  %v918 = vpop.permute.xlu0 %917
  %v921 = vunpack.c.l.s4 839922192
  %v922 = vunpack.c.0.s8 %v921
  %v923 = vperm.slane %v918, %v922
  %925 = vset.pattern.permute.xlu0 0
  %926 = vperm.xlu0 %925, %v796
  %v927 = vpop.permute.xlu0 %926
  %v930 = vunpack.c.l.s4 839922192
  %v931 = vunpack.c.0.s8 %v930
  %v932 = vperm.slane %v927, %v931
  %934 = vset.pattern.permute.xlu0 0
  %935 = vperm.xlu0 %934, %v797
  %v936 = vpop.permute.xlu0 %935
  %v939 = vunpack.c.l.s4 839922192
  %v940 = vunpack.c.0.s8 %v939
  %v941 = vperm.slane %v936, %v940
  %v942 = vunpack.c.l.bf16 %v806
  %v943 = vunpack.c.l.bf16 %v815
  %v944 = vunpack.c.l.bf16 %v824
  %v945 = vunpack.c.l.bf16 %v833
  %v946 = vunpack.c.l.bf16 %v842
  %v947 = vunpack.c.l.bf16 %v851
  %v948 = vunpack.c.l.bf16 %v860
  %v949 = vunpack.c.l.bf16 %v869
  %v950 = vunpack.c.l.bf16 %v878
  %v951 = vunpack.c.l.bf16 %v887
  %v952 = vunpack.c.l.bf16 %v896
  %v953 = vunpack.c.l.bf16 %v905
  %v954 = vunpack.c.l.bf16 %v914
  %v955 = vunpack.c.l.bf16 %v923
  %v956 = vunpack.c.l.bf16 %v932
  %v957 = vunpack.c.l.bf16 %v941
  %v958 = vmul.f32 %v626, %v942
  %v959 = vmul.f32 %v627, %v943
  %v960 = vmul.f32 %v628, %v944
  %v961 = vmul.f32 %v629, %v945
  %v962 = vmul.f32 %v630, %v946
  %v963 = vmul.f32 %v631, %v947
  %v964 = vmul.f32 %v632, %v948
  %v965 = vmul.f32 %v633, %v949
  %v966 = vmul.f32 %v634, %v950
  %v967 = vmul.f32 %v635, %v951
  %v968 = vmul.f32 %v636, %v952
  %v969 = vmul.f32 %v637, %v953
  %v970 = vmul.f32 %v638, %v954
  %v971 = vmul.f32 %v639, %v955
  %v972 = vmul.f32 %v640, %v956
  %v973 = vmul.f32 %v641, %v957
  %v974 = vpack.c.bf16 %v959, %v958
  %v975 = vpack.c.bf16 %v961, %v960
  %v976 = vpack.c.bf16 %v963, %v962
  %v977 = vpack.c.bf16 %v965, %v964
  %v978 = vpack.c.bf16 %v967, %v966
  %v979 = vpack.c.bf16 %v969, %v968
  %v980 = vpack.c.bf16 %v971, %v970
  %v981 = vpack.c.bf16 %v973, %v972
  %s982 = scalar_lea.vmem %s4, 64
  %v983 = vld [vmem:[%s982] sm:$0xf]
  %v984 = vld [vmem:[%s982 + $0x4] sm:$0xf]
  %v985 = vld [vmem:[%s982 + $0x8] sm:$0xf]
  %v986 = vld [vmem:[%s982 + $0xc] sm:$0xf]
  %v987 = vld [vmem:[%s982 + $0x10] sm:$0xf]
  %v988 = vld [vmem:[%s982 + $0x14] sm:$0xf]
  %v989 = vld [vmem:[%s982 + $0x18] sm:$0xf]
  %v990 = vld [vmem:[%s982 + $0x1c] sm:$0xf]
  %v991 = vld [vmem:[%s982 + $0x20] sm:$0xf]
  %v992 = vld [vmem:[%s982 + $0x24] sm:$0xf]
  %v993 = vld [vmem:[%s982 + $0x28] sm:$0xf]
  %v994 = vld [vmem:[%s982 + $0x2c] sm:$0xf]
  %v995 = vld [vmem:[%s982 + $0x30] sm:$0xf]
  %v996 = vld [vmem:[%s982 + $0x34] sm:$0xf]
  %v997 = vld [vmem:[%s982 + $0x38] sm:$0xf]
  %v998 = vld [vmem:[%s982 + $0x3c] sm:$0xf]
  %v1015 = vunpack.c.l.b16 %v983
  %v1016 = vunpack.c.l.b16 %v984
  %v1017 = vunpack.c.l.b16 %v985
  %v1018 = vunpack.c.l.b16 %v986
  %v1019 = vunpack.c.l.b16 %v987
  %v1020 = vunpack.c.l.b16 %v988
  %v1021 = vunpack.c.l.b16 %v989
  %v1022 = vunpack.c.l.b16 %v990
  %v1023 = vunpack.c.l.b16 %v991
  %v1024 = vunpack.c.l.b16 %v992
  %v1025 = vunpack.c.l.b16 %v993
  %v1026 = vunpack.c.l.b16 %v994
  %v1027 = vunpack.c.l.b16 %v995
  %v1028 = vunpack.c.l.b16 %v996
  %v1029 = vunpack.c.l.b16 %v997
  %v1030 = vunpack.c.l.b16 %v998
  %v1031 = vpack.c.b16 %v1016, %v1015
  %v1032 = vpack.c.b16 %v1018, %v1017
  %v1033 = vpack.c.b16 %v1020, %v1019
  %v1034 = vpack.c.b16 %v1022, %v1021
  %v1035 = vpack.c.b16 %v1024, %v1023
  %v1036 = vpack.c.b16 %v1026, %v1025
  %v1037 = vpack.c.b16 %v1028, %v1027
  %v1038 = vpack.c.b16 %v1030, %v1029
  %1047 = vmatpush.bf16.msra.mxu0 %v1038
  %1048 = vmatpush.bf16.msra.mxu0 %v1037
  %1049 = vmatpush.bf16.msra.mxu0 %v1036
  %1050 = vmatpush.bf16.msra.mxu0 %v1035
  %1051 = vmatpush.bf16.msra.mxu0 %v1034
  %1052 = vmatpush.bf16.msra.mxu0 %v1033
  %1053 = vmatpush.bf16.msra.mxu0 %v1032
  %1054 = vmatpush.bf16.msra.mxu0 %v1031
  %1055 = vmatmul.bf16.gmra.mxu0 %v974
  %v1056 = vpop.f32.mrf.mxu0
  %v1057 = vadd.f32 0.0, %v1056
  %v1058 = vpop.f32.mrf.mxu0
  %v1059 = vadd.f32 0.0, %v1058
  %1060 = vmatmul.bf16.gmra.mxu0 %v975
  %v1061 = vpop.f32.mrf.mxu0
  %v1062 = vadd.f32 0.0, %v1061
  %v1063 = vpop.f32.mrf.mxu0
  %v1064 = vadd.f32 0.0, %v1063
  %1065 = vmatmul.bf16.gmra.mxu0 %v976
  %v1066 = vpop.f32.mrf.mxu0
  %v1067 = vadd.f32 0.0, %v1066
  %v1068 = vpop.f32.mrf.mxu0
  %v1069 = vadd.f32 0.0, %v1068
  %1070 = vmatmul.bf16.gmra.mxu0 %v977
  %v1071 = vpop.f32.mrf.mxu0
  %v1072 = vadd.f32 0.0, %v1071
  %v1073 = vpop.f32.mrf.mxu0
  %v1074 = vadd.f32 0.0, %v1073
  %1075 = vmatmul.bf16.gmra.mxu0 %v978
  %v1076 = vpop.f32.mrf.mxu0
  %v1077 = vadd.f32 0.0, %v1076
  %v1078 = vpop.f32.mrf.mxu0
  %v1079 = vadd.f32 0.0, %v1078
  %1080 = vmatmul.bf16.gmra.mxu0 %v979
  %v1081 = vpop.f32.mrf.mxu0
  %v1082 = vadd.f32 0.0, %v1081
  %v1083 = vpop.f32.mrf.mxu0
  %v1084 = vadd.f32 0.0, %v1083
  %1085 = vmatmul.bf16.gmra.mxu0 %v980
  %v1086 = vpop.f32.mrf.mxu0
  %v1087 = vadd.f32 0.0, %v1086
  %v1088 = vpop.f32.mrf.mxu0
  %v1089 = vadd.f32 0.0, %v1088
  %1090 = vmatmul.bf16.gmra.mxu0 %v981
  %v1091 = vpop.f32.mrf.mxu0
  %v1092 = vadd.f32 0.0, %v1091
  %v1093 = vpop.f32.mrf.mxu0
  %v1094 = vadd.f32 0.0, %v1093
  %1095 = vdwg.mxu0
  %vm1096 = vsmask.f32 4352
  %v1098 = vshrl.u32 %v740, 16
  %v1100 = vrot.slane %v1098, 3
  %v1101 = vshll.u32 %v740, 16
  %v1103 = vrot.slane %v1101, 4
  %v1104 = vor.u32 %v1100, %v1103
  %v1106 = vshrl.u32 %v741, 16
  %v1108 = vrot.slane %v1106, 3
  %v1109 = vshll.u32 %v741, 16
  %v1111 = vrot.slane %v1109, 4
  %v1112 = vor.u32 %v1108, %v1111
  %v1113 = vsel %vm1096, %v1104, %v1112
  %v1115 = vshrl.u32 %v742, 16
  %v1117 = vrot.slane %v1115, 3
  %v1118 = vshll.u32 %v742, 16
  %v1120 = vrot.slane %v1118, 4
  %v1121 = vor.u32 %v1117, %v1120
  %v1122 = vsel %vm1096, %v1112, %v1121
  %v1124 = vshrl.u32 %v743, 16
  %v1126 = vrot.slane %v1124, 3
  %v1127 = vshll.u32 %v743, 16
  %v1129 = vrot.slane %v1127, 4
  %v1130 = vor.u32 %v1126, %v1129
  %v1131 = vsel %vm1096, %v1121, %v1130
  %v1133 = vshrl.u32 %v744, 16
  %v1135 = vrot.slane %v1133, 3
  %v1136 = vshll.u32 %v744, 16
  %v1138 = vrot.slane %v1136, 4
  %v1139 = vor.u32 %v1135, %v1138
  %v1140 = vsel %vm1096, %v1130, %v1139
  %v1142 = vshrl.u32 %v745, 16
  %v1144 = vrot.slane %v1142, 3
  %v1145 = vshll.u32 %v745, 16
  %v1147 = vrot.slane %v1145, 4
  %v1148 = vor.u32 %v1144, %v1147
  %v1149 = vsel %vm1096, %v1139, %v1148
  %v1151 = vshrl.u32 %v746, 16
  %v1153 = vrot.slane %v1151, 3
  %v1154 = vshll.u32 %v746, 16
  %v1156 = vrot.slane %v1154, 4
  %v1157 = vor.u32 %v1153, %v1156
  %v1158 = vsel %vm1096, %v1148, %v1157
  %v1160 = vshrl.u32 %v747, 16
  %v1162 = vrot.slane %v1160, 3
  %v1163 = vshll.u32 %v747, 16
  %v1165 = vrot.slane %v1163, 4
  %v1166 = vor.u32 %v1162, %v1165
  %v1167 = vsel %vm1096, %v1157, %v1166
  %v1169 = vshrl.u32 %v748, 16
  %v1171 = vrot.slane %v1169, 3
  %v1172 = vshll.u32 %v748, 16
  %v1174 = vrot.slane %v1172, 4
  %v1175 = vor.u32 %v1171, %v1174
  %v1176 = vsel %vm1096, %v1166, %v1175
  %v1201 = vunpack.c.l.b16 %v749
  %v1202 = vunpack.c.l.b16 %v750
  %v1203 = vunpack.c.l.b16 %v751
  %v1204 = vunpack.c.l.b16 %v752
  %v1205 = vunpack.c.l.b16 %v753
  %v1206 = vunpack.c.l.b16 %v754
  %v1207 = vunpack.c.l.b16 %v755
  %v1208 = vunpack.c.l.b16 %v756
  %v1209 = vunpack.c.l.b16 %v757
  %v1210 = vunpack.c.l.b16 %v758
  %v1211 = vunpack.c.l.b16 %v759
  %v1212 = vunpack.c.l.b16 %v760
  %v1213 = vunpack.c.l.b16 %v761
  %v1214 = vunpack.c.l.b16 %v762
  %v1215 = vunpack.c.l.b16 %v763
  %v1216 = vunpack.c.l.b16 %v764
  %v1217 = vpack.c.b16 %v1202, %v1201
  %v1218 = vpack.c.b16 %v1204, %v1203
  %v1219 = vpack.c.b16 %v1206, %v1205
  %v1220 = vpack.c.b16 %v1208, %v1207
  %v1221 = vpack.c.b16 %v1210, %v1209
  %v1222 = vpack.c.b16 %v1212, %v1211
  %v1223 = vpack.c.b16 %v1214, %v1213
  %v1224 = vpack.c.b16 %v1216, %v1215
  %1233 = vmatpush.bf16.msra.mxu0 %v1224
  %1234 = vmatpush.bf16.msra.mxu0 %v1223
  %1235 = vmatpush.bf16.msra.mxu0 %v1222
  %1236 = vmatpush.bf16.msra.mxu0 %v1221
  %1237 = vmatpush.bf16.msra.mxu0 %v1220
  %1238 = vmatpush.bf16.msra.mxu0 %v1219
  %1239 = vmatpush.bf16.msra.mxu0 %v1218
  %1240 = vmatpush.bf16.msra.mxu0 %v1217
  %1241 = vmatmul.bf16.gmra.mxu0 %v1113
  %v1242 = vpop.f32.mrf.mxu0
  %v1243 = vadd.f32 %v1057, %v1242
  %v1244 = vpop.f32.mrf.mxu0
  %v1245 = vadd.f32 %v1059, %v1244
  %1246 = vmatmul.bf16.gmra.mxu0 %v1122
  %v1247 = vpop.f32.mrf.mxu0
  %v1248 = vadd.f32 %v1062, %v1247
  %v1249 = vpop.f32.mrf.mxu0
  %v1250 = vadd.f32 %v1064, %v1249
  %1251 = vmatmul.bf16.gmra.mxu0 %v1131
  %v1252 = vpop.f32.mrf.mxu0
  %v1253 = vadd.f32 %v1067, %v1252
  %v1254 = vpop.f32.mrf.mxu0
  %v1255 = vadd.f32 %v1069, %v1254
  %1256 = vmatmul.bf16.gmra.mxu0 %v1140
  %v1257 = vpop.f32.mrf.mxu0
  %v1258 = vadd.f32 %v1072, %v1257
  %v1259 = vpop.f32.mrf.mxu0
  %v1260 = vadd.f32 %v1074, %v1259
  %1261 = vmatmul.bf16.gmra.mxu0 %v1149
  %v1262 = vpop.f32.mrf.mxu0
  %v1263 = vadd.f32 %v1077, %v1262
  %v1264 = vpop.f32.mrf.mxu0
  %v1265 = vadd.f32 %v1079, %v1264
  %1266 = vmatmul.bf16.gmra.mxu0 %v1158
  %v1267 = vpop.f32.mrf.mxu0
  %v1268 = vadd.f32 %v1082, %v1267
  %v1269 = vpop.f32.mrf.mxu0
  %v1270 = vadd.f32 %v1084, %v1269
  %1271 = vmatmul.bf16.gmra.mxu0 %v1167
  %v1272 = vpop.f32.mrf.mxu0
  %v1273 = vadd.f32 %v1087, %v1272
  %v1274 = vpop.f32.mrf.mxu0
  %v1275 = vadd.f32 %v1089, %v1274
  %1276 = vmatmul.bf16.gmra.mxu0 %v1176
  %v1277 = vpop.f32.mrf.mxu0
  %v1278 = vadd.f32 %v1092, %v1277
  %v1279 = vpop.f32.mrf.mxu0
  %v1280 = vadd.f32 %v1094, %v1279
  %1281 = vdwg.mxu0
  %s1282 = scalar_lea.vmem %s11, 256
  %v1283 = vld [vmem:[%s1282] sm:$0xff]
  %v1284 = vld [vmem:[%s1282 + $0x8] sm:$0xff]
  %v1285 = vld [vmem:[%s1282 + $0x10] sm:$0xff]
  %v1286 = vld [vmem:[%s1282 + $0x18] sm:$0xff]
  %v1287 = vld [vmem:[%s1282 + $0x20] sm:$0xff]
  %v1288 = vld [vmem:[%s1282 + $0x28] sm:$0xff]
  %v1289 = vld [vmem:[%s1282 + $0x30] sm:$0xff]
  %v1290 = vld [vmem:[%s1282 + $0x38] sm:$0xff]
  %v1291 = vld [vmem:[%s1282 + $0x40] sm:$0xff]
  %v1292 = vld [vmem:[%s1282 + $0x48] sm:$0xff]
  %v1293 = vld [vmem:[%s1282 + $0x50] sm:$0xff]
  %v1294 = vld [vmem:[%s1282 + $0x58] sm:$0xff]
  %v1295 = vld [vmem:[%s1282 + $0x60] sm:$0xff]
  %v1296 = vld [vmem:[%s1282 + $0x68] sm:$0xff]
  %v1297 = vld [vmem:[%s1282 + $0x70] sm:$0xff]
  %v1298 = vld [vmem:[%s1282 + $0x78] sm:$0xff]
  %v1299 = vpack.c.bf16 %v1283, %v1283
  %v1300 = vpack.c.bf16 %v1284, %v1284
  %v1301 = vpack.c.bf16 %v1285, %v1285
  %v1302 = vpack.c.bf16 %v1286, %v1286
  %v1303 = vpack.c.bf16 %v1287, %v1287
  %v1304 = vpack.c.bf16 %v1288, %v1288
  %v1305 = vpack.c.bf16 %v1289, %v1289
  %v1306 = vpack.c.bf16 %v1290, %v1290
  %v1307 = vpack.c.bf16 %v1291, %v1291
  %v1308 = vpack.c.bf16 %v1292, %v1292
  %v1309 = vpack.c.bf16 %v1293, %v1293
  %v1310 = vpack.c.bf16 %v1294, %v1294
  %v1311 = vpack.c.bf16 %v1295, %v1295
  %v1312 = vpack.c.bf16 %v1296, %v1296
  %v1313 = vpack.c.bf16 %v1297, %v1297
  %v1314 = vpack.c.bf16 %v1298, %v1298
  %v1315 = vld [vmem:[#allocation2 + $0x4] sm:$0xf]
  %v1316 = vld [vmem:[#allocation2 + $0x8] sm:$0xf]
  %v1317 = vld [vmem:[#allocation2 + $0xc] sm:$0xf]
  %v1318 = vld [vmem:[#allocation2 + $0x10] sm:$0xf]
  %v1319 = vld [vmem:[#allocation2 + $0x14] sm:$0xf]
  %v1320 = vld [vmem:[#allocation2 + $0x18] sm:$0xf]
  %v1321 = vld [vmem:[#allocation2 + $0x1c] sm:$0xf]
  %v1322 = vld [vmem:[#allocation2 + $0x20] sm:$0xf]
  %v1323 = vld [vmem:[#allocation2 + $0x24] sm:$0xf]
  %v1324 = vld [vmem:[#allocation2 + $0x28] sm:$0xf]
  %v1325 = vld [vmem:[#allocation2 + $0x2c] sm:$0xf]
  %v1326 = vld [vmem:[#allocation2 + $0x30] sm:$0xf]
  %v1327 = vld [vmem:[#allocation2 + $0x34] sm:$0xf]
  %v1328 = vld [vmem:[#allocation2 + $0x38] sm:$0xf]
  %v1329 = vld [vmem:[#allocation2 + $0x3c] sm:$0xf]
  %v1330 = vld [vmem:[#allocation2 + $0x40] sm:$0xf]
  %v1331 = vld [vmem:[#allocation2 + $0x44] sm:$0x1]
  %1333 = vset.pattern.permute.xlu0 0
  %1334 = vperm.xlu0 %1333, %v1299
  %v1335 = vpop.permute.xlu0 %1334
  %v1338 = vunpack.c.l.s4 839922192
  %v1339 = vunpack.c.0.s8 %v1338
  %v1340 = vperm.slane %v1335, %v1339
  %1342 = vset.pattern.permute.xlu0 0
  %1343 = vperm.xlu0 %1342, %v1300
  %v1344 = vpop.permute.xlu0 %1343
  %v1347 = vunpack.c.l.s4 839922192
  %v1348 = vunpack.c.0.s8 %v1347
  %v1349 = vperm.slane %v1344, %v1348
  %1351 = vset.pattern.permute.xlu0 0
  %1352 = vperm.xlu0 %1351, %v1301
  %v1353 = vpop.permute.xlu0 %1352
  %v1356 = vunpack.c.l.s4 839922192
  %v1357 = vunpack.c.0.s8 %v1356
  %v1358 = vperm.slane %v1353, %v1357
  %1360 = vset.pattern.permute.xlu0 0
  %1361 = vperm.xlu0 %1360, %v1302
  %v1362 = vpop.permute.xlu0 %1361
  %v1365 = vunpack.c.l.s4 839922192
  %v1366 = vunpack.c.0.s8 %v1365
  %v1367 = vperm.slane %v1362, %v1366
  %1369 = vset.pattern.permute.xlu0 0
  %1370 = vperm.xlu0 %1369, %v1303
  %v1371 = vpop.permute.xlu0 %1370
  %v1374 = vunpack.c.l.s4 839922192
  %v1375 = vunpack.c.0.s8 %v1374
  %v1376 = vperm.slane %v1371, %v1375
  %1378 = vset.pattern.permute.xlu0 0
  %1379 = vperm.xlu0 %1378, %v1304
  %v1380 = vpop.permute.xlu0 %1379
  %v1383 = vunpack.c.l.s4 839922192
  %v1384 = vunpack.c.0.s8 %v1383
  %v1385 = vperm.slane %v1380, %v1384
  %1387 = vset.pattern.permute.xlu0 0
  %1388 = vperm.xlu0 %1387, %v1305
  %v1389 = vpop.permute.xlu0 %1388
  %v1392 = vunpack.c.l.s4 839922192
  %v1393 = vunpack.c.0.s8 %v1392
  %v1394 = vperm.slane %v1389, %v1393
  %1396 = vset.pattern.permute.xlu0 0
  %1397 = vperm.xlu0 %1396, %v1306
  %v1398 = vpop.permute.xlu0 %1397
  %v1401 = vunpack.c.l.s4 839922192
  %v1402 = vunpack.c.0.s8 %v1401
  %v1403 = vperm.slane %v1398, %v1402
  %1405 = vset.pattern.permute.xlu0 0
  %1406 = vperm.xlu0 %1405, %v1307
  %v1407 = vpop.permute.xlu0 %1406
  %v1410 = vunpack.c.l.s4 839922192
  %v1411 = vunpack.c.0.s8 %v1410
  %v1412 = vperm.slane %v1407, %v1411
  %1414 = vset.pattern.permute.xlu0 0
  %1415 = vperm.xlu0 %1414, %v1308
  %v1416 = vpop.permute.xlu0 %1415
  %v1419 = vunpack.c.l.s4 839922192
  %v1420 = vunpack.c.0.s8 %v1419
  %v1421 = vperm.slane %v1416, %v1420
  %1423 = vset.pattern.permute.xlu0 0
  %1424 = vperm.xlu0 %1423, %v1309
  %v1425 = vpop.permute.xlu0 %1424
  %v1428 = vunpack.c.l.s4 839922192
  %v1429 = vunpack.c.0.s8 %v1428
  %v1430 = vperm.slane %v1425, %v1429
  %1432 = vset.pattern.permute.xlu0 0
  %1433 = vperm.xlu0 %1432, %v1310
  %v1434 = vpop.permute.xlu0 %1433
  %v1437 = vunpack.c.l.s4 839922192
  %v1438 = vunpack.c.0.s8 %v1437
  %v1439 = vperm.slane %v1434, %v1438
  %1441 = vset.pattern.permute.xlu0 0
  %1442 = vperm.xlu0 %1441, %v1311
  %v1443 = vpop.permute.xlu0 %1442
  %v1446 = vunpack.c.l.s4 839922192
  %v1447 = vunpack.c.0.s8 %v1446
  %v1448 = vperm.slane %v1443, %v1447
  %1450 = vset.pattern.permute.xlu0 0
  %1451 = vperm.xlu0 %1450, %v1312
  %v1452 = vpop.permute.xlu0 %1451
  %v1455 = vunpack.c.l.s4 839922192
  %v1456 = vunpack.c.0.s8 %v1455
  %v1457 = vperm.slane %v1452, %v1456
  %1459 = vset.pattern.permute.xlu0 0
  %1460 = vperm.xlu0 %1459, %v1313
  %v1461 = vpop.permute.xlu0 %1460
  %v1464 = vunpack.c.l.s4 839922192
  %v1465 = vunpack.c.0.s8 %v1464
  %v1466 = vperm.slane %v1461, %v1465
  %1468 = vset.pattern.permute.xlu0 0
  %1469 = vperm.xlu0 %1468, %v1314
  %v1470 = vpop.permute.xlu0 %1469
  %v1473 = vunpack.c.l.s4 839922192
  %v1474 = vunpack.c.0.s8 %v1473
  %v1475 = vperm.slane %v1470, %v1474
  %v1476 = vunpack.c.l.bf16 %v1315
  %v1477 = vunpack.c.l.bf16 %v1316
  %v1478 = vunpack.c.l.bf16 %v1317
  %v1479 = vunpack.c.l.bf16 %v1318
  %v1480 = vunpack.c.l.bf16 %v1319
  %v1481 = vunpack.c.l.bf16 %v1320
  %v1482 = vunpack.c.l.bf16 %v1321
  %v1483 = vunpack.c.l.bf16 %v1322
  %v1484 = vunpack.c.l.bf16 %v1323
  %v1485 = vunpack.c.l.bf16 %v1324
  %v1486 = vunpack.c.l.bf16 %v1325
  %v1487 = vunpack.c.l.bf16 %v1326
  %v1488 = vunpack.c.l.bf16 %v1327
  %v1489 = vunpack.c.l.bf16 %v1328
  %v1490 = vunpack.c.l.bf16 %v1329
  %v1491 = vunpack.c.l.bf16 %v1330
  %v1492 = vunpack.c.l.bf16 %v1331
  %v1493 = vunpack.c.l.bf16 %v1340
  %v1494 = vunpack.c.l.bf16 %v1349
  %v1495 = vunpack.c.l.bf16 %v1358
  %v1496 = vunpack.c.l.bf16 %v1367
  %v1497 = vunpack.c.l.bf16 %v1376
  %v1498 = vunpack.c.l.bf16 %v1385
  %v1499 = vunpack.c.l.bf16 %v1394
  %v1500 = vunpack.c.l.bf16 %v1403
  %v1501 = vunpack.c.l.bf16 %v1412
  %v1502 = vunpack.c.l.bf16 %v1421
  %v1503 = vunpack.c.l.bf16 %v1430
  %v1504 = vunpack.c.l.bf16 %v1439
  %v1505 = vunpack.c.l.bf16 %v1448
  %v1506 = vunpack.c.l.bf16 %v1457
  %v1507 = vunpack.c.l.bf16 %v1466
  %v1508 = vunpack.c.l.bf16 %v1475
  %vm1525 = vcmask 1040384
  %v1526 = vrot.slane %v1493, 7
  %v1527 = vrot.slane %v1494, 7
  %v1528 = vsel %vm1525, %v1526, %v1527
  %v1529 = vrot.slane %v1495, 7
  %v1530 = vsel %vm1525, %v1527, %v1529
  %v1531 = vrot.slane %v1496, 7
  %v1532 = vsel %vm1525, %v1529, %v1531
  %v1533 = vrot.slane %v1497, 7
  %v1534 = vsel %vm1525, %v1531, %v1533
  %v1535 = vrot.slane %v1498, 7
  %v1536 = vsel %vm1525, %v1533, %v1535
  %v1537 = vrot.slane %v1499, 7
  %v1538 = vsel %vm1525, %v1535, %v1537
  %v1539 = vrot.slane %v1500, 7
  %v1540 = vsel %vm1525, %v1537, %v1539
  %v1541 = vrot.slane %v1501, 7
  %v1542 = vsel %vm1525, %v1539, %v1541
  %v1543 = vrot.slane %v1502, 7
  %v1544 = vsel %vm1525, %v1541, %v1543
  %v1545 = vrot.slane %v1503, 7
  %v1546 = vsel %vm1525, %v1543, %v1545
  %v1547 = vrot.slane %v1504, 7
  %v1548 = vsel %vm1525, %v1545, %v1547
  %v1549 = vrot.slane %v1505, 7
  %v1550 = vsel %vm1525, %v1547, %v1549
  %v1551 = vrot.slane %v1506, 7
  %v1552 = vsel %vm1525, %v1549, %v1551
  %v1553 = vrot.slane %v1507, 7
  %v1554 = vsel %vm1525, %v1551, %v1553
  %v1555 = vrot.slane %v1508, 7
  %v1556 = vsel %vm1525, %v1553, %v1555
  %v1574 = vmul.f32 %v1476, %v1526
  %v1575 = vmul.f32 %v1477, %v1528
  %v1576 = vmul.f32 %v1478, %v1530
  %v1577 = vmul.f32 %v1479, %v1532
  %v1578 = vmul.f32 %v1480, %v1534
  %v1579 = vmul.f32 %v1481, %v1536
  %v1580 = vmul.f32 %v1482, %v1538
  %v1581 = vmul.f32 %v1483, %v1540
  %v1582 = vmul.f32 %v1484, %v1542
  %v1583 = vmul.f32 %v1485, %v1544
  %v1584 = vmul.f32 %v1486, %v1546
  %v1585 = vmul.f32 %v1487, %v1548
  %v1586 = vmul.f32 %v1488, %v1550
  %v1587 = vmul.f32 %v1489, %v1552
  %v1588 = vmul.f32 %v1490, %v1554
  %v1589 = vmul.f32 %v1491, %v1556
  %v1590 = vmul.f32 %v1492, %v1555
  %v1591 = vpack.c.bf16 %v1575, %v1574
  %v1592 = vpack.c.bf16 %v1577, %v1576
  %v1593 = vpack.c.bf16 %v1579, %v1578
  %v1594 = vpack.c.bf16 %v1581, %v1580
  %v1595 = vpack.c.bf16 %v1583, %v1582
  %v1596 = vpack.c.bf16 %v1585, %v1584
  %v1597 = vpack.c.bf16 %v1587, %v1586
  %v1598 = vpack.c.bf16 %v1589, %v1588
  %v1599 = vpack.c.bf16 %v1590, %v1590
  %s1600 = scalar_lea.vmem %s4, 128
  %v1601 = vld [vmem:[%s1600] sm:$0xf]
  %v1602 = vld [vmem:[%s1600 + $0x4] sm:$0xf]
  %v1603 = vld [vmem:[%s1600 + $0x8] sm:$0xf]
  %v1604 = vld [vmem:[%s1600 + $0xc] sm:$0xf]
  %v1605 = vld [vmem:[%s1600 + $0x10] sm:$0xf]
  %v1606 = vld [vmem:[%s1600 + $0x14] sm:$0xf]
  %v1607 = vld [vmem:[%s1600 + $0x18] sm:$0xf]
  %v1608 = vld [vmem:[%s1600 + $0x1c] sm:$0xf]
  %v1609 = vld [vmem:[%s1600 + $0x20] sm:$0xf]
  %v1610 = vld [vmem:[%s1600 + $0x24] sm:$0xf]
  %v1611 = vld [vmem:[%s1600 + $0x28] sm:$0xf]
  %v1612 = vld [vmem:[%s1600 + $0x2c] sm:$0xf]
  %v1613 = vld [vmem:[%s1600 + $0x30] sm:$0xf]
  %v1614 = vld [vmem:[%s1600 + $0x34] sm:$0xf]
  %v1615 = vld [vmem:[%s1600 + $0x38] sm:$0xf]
  %v1616 = vld [vmem:[%s1600 + $0x3c] sm:$0xf]
  %vm1617 = vsmask.f32 7424
  %v1619 = vshrl.u32 %v1591, 16
  %v1621 = vshll.u32 %v1591, 16
  %v1623 = vrot.slane %v1621, 1
  %v1624 = vor.u32 %v1619, %v1623
  %v1626 = vshll.u32 %v1592, 16
  %v1628 = vrot.slane %v1626, 1
  %v1629 = vsel %vm1617, %v1624, %v1628
  %v1630 = vshrl.u32 %v1592, 16
  %v1632 = vor.u32 %v1630, %v1628
  %v1634 = vshll.u32 %v1593, 16
  %v1636 = vrot.slane %v1634, 1
  %v1637 = vsel %vm1617, %v1632, %v1636
  %v1638 = vshrl.u32 %v1593, 16
  %v1640 = vor.u32 %v1638, %v1636
  %v1642 = vshll.u32 %v1594, 16
  %v1644 = vrot.slane %v1642, 1
  %v1645 = vsel %vm1617, %v1640, %v1644
  %v1646 = vshrl.u32 %v1594, 16
  %v1648 = vor.u32 %v1646, %v1644
  %v1650 = vshll.u32 %v1595, 16
  %v1652 = vrot.slane %v1650, 1
  %v1653 = vsel %vm1617, %v1648, %v1652
  %v1654 = vshrl.u32 %v1595, 16
  %v1656 = vor.u32 %v1654, %v1652
  %v1658 = vshll.u32 %v1596, 16
  %v1660 = vrot.slane %v1658, 1
  %v1661 = vsel %vm1617, %v1656, %v1660
  %v1662 = vshrl.u32 %v1596, 16
  %v1664 = vor.u32 %v1662, %v1660
  %v1666 = vshll.u32 %v1597, 16
  %v1668 = vrot.slane %v1666, 1
  %v1669 = vsel %vm1617, %v1664, %v1668
  %v1670 = vshrl.u32 %v1597, 16
  %v1672 = vor.u32 %v1670, %v1668
  %v1674 = vshll.u32 %v1598, 16
  %v1676 = vrot.slane %v1674, 1
  %v1677 = vsel %vm1617, %v1672, %v1676
  %v1678 = vshrl.u32 %v1598, 16
  %v1680 = vor.u32 %v1678, %v1676
  %v1682 = vshll.u32 %v1599, 16
  %v1684 = vrot.slane %v1682, 1
  %v1685 = vsel %vm1617, %v1680, %v1684
  %v1710 = vunpack.c.l.b16 %v1601
  %v1711 = vunpack.c.l.b16 %v1602
  %v1712 = vunpack.c.l.b16 %v1603
  %v1713 = vunpack.c.l.b16 %v1604
  %v1714 = vunpack.c.l.b16 %v1605
  %v1715 = vunpack.c.l.b16 %v1606
  %v1716 = vunpack.c.l.b16 %v1607
  %v1717 = vunpack.c.l.b16 %v1608
  %v1718 = vunpack.c.l.b16 %v1609
  %v1719 = vunpack.c.l.b16 %v1610
  %v1720 = vunpack.c.l.b16 %v1611
  %v1721 = vunpack.c.l.b16 %v1612
  %v1722 = vunpack.c.l.b16 %v1613
  %v1723 = vunpack.c.l.b16 %v1614
  %v1724 = vunpack.c.l.b16 %v1615
  %v1725 = vunpack.c.l.b16 %v1616
  %v1726 = vpack.c.b16 %v1711, %v1710
  %v1727 = vpack.c.b16 %v1713, %v1712
  %v1728 = vpack.c.b16 %v1715, %v1714
  %v1729 = vpack.c.b16 %v1717, %v1716
  %v1730 = vpack.c.b16 %v1719, %v1718
  %v1731 = vpack.c.b16 %v1721, %v1720
  %v1732 = vpack.c.b16 %v1723, %v1722
  %v1733 = vpack.c.b16 %v1725, %v1724
  %1742 = vmatpush.bf16.msra.mxu0 %v1733
  %1743 = vmatpush.bf16.msra.mxu0 %v1732
  %1744 = vmatpush.bf16.msra.mxu0 %v1731
  %1745 = vmatpush.bf16.msra.mxu0 %v1730
  %1746 = vmatpush.bf16.msra.mxu0 %v1729
  %1747 = vmatpush.bf16.msra.mxu0 %v1728
  %1748 = vmatpush.bf16.msra.mxu0 %v1727
  %1749 = vmatpush.bf16.msra.mxu0 %v1726
  %1750 = vmatmul.bf16.gmra.mxu0 %v1629
  %v1751 = vpop.f32.mrf.mxu0
  %v1752 = vadd.f32 0.0, %v1751
  %v1753 = vpop.f32.mrf.mxu0
  %v1754 = vadd.f32 0.0, %v1753
  %1755 = vmatmul.bf16.gmra.mxu0 %v1637
  %v1756 = vpop.f32.mrf.mxu0
  %v1757 = vadd.f32 0.0, %v1756
  %v1758 = vpop.f32.mrf.mxu0
  %v1759 = vadd.f32 0.0, %v1758
  %1760 = vmatmul.bf16.gmra.mxu0 %v1645
  %v1761 = vpop.f32.mrf.mxu0
  %v1762 = vadd.f32 0.0, %v1761
  %v1763 = vpop.f32.mrf.mxu0
  %v1764 = vadd.f32 0.0, %v1763
  %1765 = vmatmul.bf16.gmra.mxu0 %v1653
  %v1766 = vpop.f32.mrf.mxu0
  %v1767 = vadd.f32 0.0, %v1766
  %v1768 = vpop.f32.mrf.mxu0
  %v1769 = vadd.f32 0.0, %v1768
  %1770 = vmatmul.bf16.gmra.mxu0 %v1661
  %v1771 = vpop.f32.mrf.mxu0
  %v1772 = vadd.f32 0.0, %v1771
  %v1773 = vpop.f32.mrf.mxu0
  %v1774 = vadd.f32 0.0, %v1773
  %1775 = vmatmul.bf16.gmra.mxu0 %v1669
  %v1776 = vpop.f32.mrf.mxu0
  %v1777 = vadd.f32 0.0, %v1776
  %v1778 = vpop.f32.mrf.mxu0
  %v1779 = vadd.f32 0.0, %v1778
  %1780 = vmatmul.bf16.gmra.mxu0 %v1677
  %v1781 = vpop.f32.mrf.mxu0
  %v1782 = vadd.f32 0.0, %v1781
  %v1783 = vpop.f32.mrf.mxu0
  %v1784 = vadd.f32 0.0, %v1783
  %1785 = vmatmul.bf16.gmra.mxu0 %v1685
  %v1786 = vpop.f32.mrf.mxu0
  %v1787 = vadd.f32 0.0, %v1786
  %v1788 = vpop.f32.mrf.mxu0
  %v1789 = vadd.f32 0.0, %v1788
  %1790 = vdwg.mxu0
  %v1791 = vadd.f32 %v1243, %v1752
  %v1792 = vadd.f32 %v1245, %v1754
  %v1793 = vadd.f32 %v1248, %v1757
  %v1794 = vadd.f32 %v1250, %v1759
  %v1795 = vadd.f32 %v1253, %v1762
  %v1796 = vadd.f32 %v1255, %v1764
  %v1797 = vadd.f32 %v1258, %v1767
  %v1798 = vadd.f32 %v1260, %v1769
  %v1799 = vadd.f32 %v1263, %v1772
  %v1800 = vadd.f32 %v1265, %v1774
  %v1801 = vadd.f32 %v1268, %v1777
  %v1802 = vadd.f32 %v1270, %v1779
  %v1803 = vadd.f32 %v1273, %v1782
  %v1804 = vadd.f32 %v1275, %v1784
  %v1805 = vadd.f32 %v1278, %v1787
  %v1806 = vadd.f32 %v1280, %v1789
  %s1807 = scalar_lea.vmem %s11, 384
  %v1808 = vld [vmem:[%s1807] sm:$0xff]
  %v1809 = vld [vmem:[%s1807 + $0x8] sm:$0xff]
  %v1810 = vld [vmem:[%s1807 + $0x10] sm:$0xff]
  %v1811 = vld [vmem:[%s1807 + $0x18] sm:$0xff]
  %v1812 = vld [vmem:[%s1807 + $0x20] sm:$0xff]
  %v1813 = vld [vmem:[%s1807 + $0x28] sm:$0xff]
  %v1814 = vld [vmem:[%s1807 + $0x30] sm:$0xff]
  %v1815 = vld [vmem:[%s1807 + $0x38] sm:$0xff]
  %v1816 = vld [vmem:[%s1807 + $0x40] sm:$0xff]
  %v1817 = vld [vmem:[%s1807 + $0x48] sm:$0xff]
  %v1818 = vld [vmem:[%s1807 + $0x50] sm:$0xff]
  %v1819 = vld [vmem:[%s1807 + $0x58] sm:$0xff]
  %v1820 = vld [vmem:[%s1807 + $0x60] sm:$0xff]
  %v1821 = vld [vmem:[%s1807 + $0x68] sm:$0xff]
  %v1822 = vld [vmem:[%s1807 + $0x70] sm:$0xff]
  %v1823 = vld [vmem:[%s1807 + $0x78] sm:$0xff]
  %v1824 = vpack.c.bf16 %v1808, %v1808
  %v1825 = vpack.c.bf16 %v1809, %v1809
  %v1826 = vpack.c.bf16 %v1810, %v1810
  %v1827 = vpack.c.bf16 %v1811, %v1811
  %v1828 = vpack.c.bf16 %v1812, %v1812
  %v1829 = vpack.c.bf16 %v1813, %v1813
  %v1830 = vpack.c.bf16 %v1814, %v1814
  %v1831 = vpack.c.bf16 %v1815, %v1815
  %v1832 = vpack.c.bf16 %v1816, %v1816
  %v1833 = vpack.c.bf16 %v1817, %v1817
  %v1834 = vpack.c.bf16 %v1818, %v1818
  %v1835 = vpack.c.bf16 %v1819, %v1819
  %v1836 = vpack.c.bf16 %v1820, %v1820
  %v1837 = vpack.c.bf16 %v1821, %v1821
  %v1838 = vpack.c.bf16 %v1822, %v1822
  %v1839 = vpack.c.bf16 %v1823, %v1823
  %v1840 = vld [vmem:[#allocation2 + $0x4] sm:$0x8]
  %v1841 = vld [vmem:[#allocation2 + $0x44] sm:$0xf]
  %1843 = vset.pattern.permute.xlu0 0
  %1844 = vperm.xlu0 %1843, %v1824
  %v1845 = vpop.permute.xlu0 %1844
  %v1848 = vunpack.c.l.s4 839922192
  %v1849 = vunpack.c.0.s8 %v1848
  %v1850 = vperm.slane %v1845, %v1849
  %1852 = vset.pattern.permute.xlu0 0
  %1853 = vperm.xlu0 %1852, %v1825
  %v1854 = vpop.permute.xlu0 %1853
  %v1857 = vunpack.c.l.s4 839922192
  %v1858 = vunpack.c.0.s8 %v1857
  %v1859 = vperm.slane %v1854, %v1858
  %1861 = vset.pattern.permute.xlu0 0
  %1862 = vperm.xlu0 %1861, %v1826
  %v1863 = vpop.permute.xlu0 %1862
  %v1866 = vunpack.c.l.s4 839922192
  %v1867 = vunpack.c.0.s8 %v1866
  %v1868 = vperm.slane %v1863, %v1867
  %1870 = vset.pattern.permute.xlu0 0
  %1871 = vperm.xlu0 %1870, %v1827
  %v1872 = vpop.permute.xlu0 %1871
  %v1875 = vunpack.c.l.s4 839922192
  %v1876 = vunpack.c.0.s8 %v1875
  %v1877 = vperm.slane %v1872, %v1876
  %1879 = vset.pattern.permute.xlu0 0
  %1880 = vperm.xlu0 %1879, %v1828
  %v1881 = vpop.permute.xlu0 %1880
  %v1884 = vunpack.c.l.s4 839922192
  %v1885 = vunpack.c.0.s8 %v1884
  %v1886 = vperm.slane %v1881, %v1885
  %1888 = vset.pattern.permute.xlu0 0
  %1889 = vperm.xlu0 %1888, %v1829
  %v1890 = vpop.permute.xlu0 %1889
  %v1893 = vunpack.c.l.s4 839922192
  %v1894 = vunpack.c.0.s8 %v1893
  %v1895 = vperm.slane %v1890, %v1894
  %1897 = vset.pattern.permute.xlu0 0
  %1898 = vperm.xlu0 %1897, %v1830
  %v1899 = vpop.permute.xlu0 %1898
  %v1902 = vunpack.c.l.s4 839922192
  %v1903 = vunpack.c.0.s8 %v1902
  %v1904 = vperm.slane %v1899, %v1903
  %1906 = vset.pattern.permute.xlu0 0
  %1907 = vperm.xlu0 %1906, %v1831
  %v1908 = vpop.permute.xlu0 %1907
  %v1911 = vunpack.c.l.s4 839922192
  %v1912 = vunpack.c.0.s8 %v1911
  %v1913 = vperm.slane %v1908, %v1912
  %1915 = vset.pattern.permute.xlu0 0
  %1916 = vperm.xlu0 %1915, %v1832
  %v1917 = vpop.permute.xlu0 %1916
  %v1920 = vunpack.c.l.s4 839922192
  %v1921 = vunpack.c.0.s8 %v1920
  %v1922 = vperm.slane %v1917, %v1921
  %1924 = vset.pattern.permute.xlu0 0
  %1925 = vperm.xlu0 %1924, %v1833
  %v1926 = vpop.permute.xlu0 %1925
  %v1929 = vunpack.c.l.s4 839922192
  %v1930 = vunpack.c.0.s8 %v1929
  %v1931 = vperm.slane %v1926, %v1930
  %1933 = vset.pattern.permute.xlu0 0
  %1934 = vperm.xlu0 %1933, %v1834
  %v1935 = vpop.permute.xlu0 %1934
  %v1938 = vunpack.c.l.s4 839922192
  %v1939 = vunpack.c.0.s8 %v1938
  %v1940 = vperm.slane %v1935, %v1939
  %1942 = vset.pattern.permute.xlu0 0
  %1943 = vperm.xlu0 %1942, %v1835
  %v1944 = vpop.permute.xlu0 %1943
  %v1947 = vunpack.c.l.s4 839922192
  %v1948 = vunpack.c.0.s8 %v1947
  %v1949 = vperm.slane %v1944, %v1948
  %1951 = vset.pattern.permute.xlu0 0
  %1952 = vperm.xlu0 %1951, %v1836
  %v1953 = vpop.permute.xlu0 %1952
  %v1956 = vunpack.c.l.s4 839922192
  %v1957 = vunpack.c.0.s8 %v1956
  %v1958 = vperm.slane %v1953, %v1957
  %1960 = vset.pattern.permute.xlu0 0
  %1961 = vperm.xlu0 %1960, %v1837
  %v1962 = vpop.permute.xlu0 %1961
  %v1965 = vunpack.c.l.s4 839922192
  %v1966 = vunpack.c.0.s8 %v1965
  %v1967 = vperm.slane %v1962, %v1966
  %1969 = vset.pattern.permute.xlu0 0
  %1970 = vperm.xlu0 %1969, %v1838
  %v1971 = vpop.permute.xlu0 %1970
  %v1974 = vunpack.c.l.s4 839922192
  %v1975 = vunpack.c.0.s8 %v1974
  %v1976 = vperm.slane %v1971, %v1975
  %1978 = vset.pattern.permute.xlu0 0
  %1979 = vperm.xlu0 %1978, %v1839
  %v1980 = vpop.permute.xlu0 %1979
  %v1983 = vunpack.c.l.s4 839922192
  %v1984 = vunpack.c.0.s8 %v1983
  %v1985 = vperm.slane %v1980, %v1984
  %v1986 = vunpack.c.l.bf16 %v1840
  %v1987 = vunpack.c.l.bf16 %v1841
  %v1988 = vunpack.c.l.bf16 %v1850
  %v1989 = vunpack.c.l.bf16 %v1859
  %v1990 = vunpack.c.l.bf16 %v1868
  %v1991 = vunpack.c.l.bf16 %v1877
  %v1992 = vunpack.c.l.bf16 %v1886
  %v1993 = vunpack.c.l.bf16 %v1895
  %v1994 = vunpack.c.l.bf16 %v1904
  %v1995 = vunpack.c.l.bf16 %v1913
  %v1996 = vunpack.c.l.bf16 %v1922
  %v1997 = vunpack.c.l.bf16 %v1931
  %v1998 = vunpack.c.l.bf16 %v1940
  %v1999 = vunpack.c.l.bf16 %v1949
  %v2000 = vunpack.c.l.bf16 %v1958
  %v2001 = vunpack.c.l.bf16 %v1967
  %v2002 = vunpack.c.l.bf16 %v1976
  %v2003 = vunpack.c.l.bf16 %v1985
  %v2020 = vrot.slane %v1988, 1
  %v2021 = vrot.slane %v1989, 1
  %v2022 = vsel %vm674, %v2020, %v2021
  %v2023 = vrot.slane %v1990, 1
  %v2024 = vsel %vm674, %v2021, %v2023
  %v2025 = vrot.slane %v1991, 1
  %v2026 = vsel %vm674, %v2023, %v2025
  %v2027 = vrot.slane %v1992, 1
  %v2028 = vsel %vm674, %v2025, %v2027
  %v2029 = vrot.slane %v1993, 1
  %v2030 = vsel %vm674, %v2027, %v2029
  %v2031 = vrot.slane %v1994, 1
  %v2032 = vsel %vm674, %v2029, %v2031
  %v2033 = vrot.slane %v1995, 1
  %v2034 = vsel %vm674, %v2031, %v2033
  %v2035 = vrot.slane %v1996, 1
  %v2036 = vsel %vm674, %v2033, %v2035
  %v2037 = vrot.slane %v1997, 1
  %v2038 = vsel %vm674, %v2035, %v2037
  %v2039 = vrot.slane %v1998, 1
  %v2040 = vsel %vm674, %v2037, %v2039
  %v2041 = vrot.slane %v1999, 1
  %v2042 = vsel %vm674, %v2039, %v2041
  %v2043 = vrot.slane %v2000, 1
  %v2044 = vsel %vm674, %v2041, %v2043
  %v2045 = vrot.slane %v2001, 1
  %v2046 = vsel %vm674, %v2043, %v2045
  %v2047 = vrot.slane %v2002, 1
  %v2048 = vsel %vm674, %v2045, %v2047
  %v2049 = vrot.slane %v2003, 1
  %v2050 = vsel %vm674, %v2047, %v2049
  %v2068 = vmul.f32 %v1986, %v2020
  %v2069 = vmul.f32 %v1477, %v2022
  %v2070 = vmul.f32 %v1478, %v2024
  %v2071 = vmul.f32 %v1479, %v2026
  %v2072 = vmul.f32 %v1480, %v2028
  %v2073 = vmul.f32 %v1481, %v2030
  %v2074 = vmul.f32 %v1482, %v2032
  %v2075 = vmul.f32 %v1483, %v2034
  %v2076 = vmul.f32 %v1484, %v2036
  %v2077 = vmul.f32 %v1485, %v2038
  %v2078 = vmul.f32 %v1486, %v2040
  %v2079 = vmul.f32 %v1487, %v2042
  %v2080 = vmul.f32 %v1488, %v2044
  %v2081 = vmul.f32 %v1489, %v2046
  %v2082 = vmul.f32 %v1490, %v2048
  %v2083 = vmul.f32 %v1491, %v2050
  %v2084 = vmul.f32 %v1987, %v2049
  %v2085 = vpack.c.bf16 %v2069, %v2068
  %v2086 = vpack.c.bf16 %v2071, %v2070
  %v2087 = vpack.c.bf16 %v2073, %v2072
  %v2088 = vpack.c.bf16 %v2075, %v2074
  %v2089 = vpack.c.bf16 %v2077, %v2076
  %v2090 = vpack.c.bf16 %v2079, %v2078
  %v2091 = vpack.c.bf16 %v2081, %v2080
  %v2092 = vpack.c.bf16 %v2083, %v2082
  %v2093 = vpack.c.bf16 %v2084, %v2084
  %s2094 = scalar_lea.vmem %s4, 192
  %v2095 = vld [vmem:[%s2094] sm:$0xf]
  %v2096 = vld [vmem:[%s2094 + $0x4] sm:$0xf]
  %v2097 = vld [vmem:[%s2094 + $0x8] sm:$0xf]
  %v2098 = vld [vmem:[%s2094 + $0xc] sm:$0xf]
  %v2099 = vld [vmem:[%s2094 + $0x10] sm:$0xf]
  %v2100 = vld [vmem:[%s2094 + $0x14] sm:$0xf]
  %v2101 = vld [vmem:[%s2094 + $0x18] sm:$0xf]
  %v2102 = vld [vmem:[%s2094 + $0x1c] sm:$0xf]
  %v2103 = vld [vmem:[%s2094 + $0x20] sm:$0xf]
  %v2104 = vld [vmem:[%s2094 + $0x24] sm:$0xf]
  %v2105 = vld [vmem:[%s2094 + $0x28] sm:$0xf]
  %v2106 = vld [vmem:[%s2094 + $0x2c] sm:$0xf]
  %v2107 = vld [vmem:[%s2094 + $0x30] sm:$0xf]
  %v2108 = vld [vmem:[%s2094 + $0x34] sm:$0xf]
  %v2109 = vld [vmem:[%s2094 + $0x38] sm:$0xf]
  %v2110 = vld [vmem:[%s2094 + $0x3c] sm:$0xf]
  %v2112 = vshrl.u32 %v2085, 16
  %v2114 = vrot.slane %v2112, 3
  %v2115 = vshll.u32 %v2085, 16
  %v2117 = vrot.slane %v2115, 4
  %v2118 = vor.u32 %v2114, %v2117
  %v2120 = vshrl.u32 %v2086, 16
  %v2122 = vrot.slane %v2120, 3
  %v2123 = vshll.u32 %v2086, 16
  %v2125 = vrot.slane %v2123, 4
  %v2126 = vor.u32 %v2122, %v2125
  %v2127 = vsel %vm1096, %v2118, %v2126
  %v2129 = vshrl.u32 %v2087, 16
  %v2131 = vrot.slane %v2129, 3
  %v2132 = vshll.u32 %v2087, 16
  %v2134 = vrot.slane %v2132, 4
  %v2135 = vor.u32 %v2131, %v2134
  %v2136 = vsel %vm1096, %v2126, %v2135
  %v2138 = vshrl.u32 %v2088, 16
  %v2140 = vrot.slane %v2138, 3
  %v2141 = vshll.u32 %v2088, 16
  %v2143 = vrot.slane %v2141, 4
  %v2144 = vor.u32 %v2140, %v2143
  %v2145 = vsel %vm1096, %v2135, %v2144
  %v2147 = vshrl.u32 %v2089, 16
  %v2149 = vrot.slane %v2147, 3
  %v2150 = vshll.u32 %v2089, 16
  %v2152 = vrot.slane %v2150, 4
  %v2153 = vor.u32 %v2149, %v2152
  %v2154 = vsel %vm1096, %v2144, %v2153
  %v2156 = vshrl.u32 %v2090, 16
  %v2158 = vrot.slane %v2156, 3
  %v2159 = vshll.u32 %v2090, 16
  %v2161 = vrot.slane %v2159, 4
  %v2162 = vor.u32 %v2158, %v2161
  %v2163 = vsel %vm1096, %v2153, %v2162
  %v2165 = vshrl.u32 %v2091, 16
  %v2167 = vrot.slane %v2165, 3
  %v2168 = vshll.u32 %v2091, 16
  %v2170 = vrot.slane %v2168, 4
  %v2171 = vor.u32 %v2167, %v2170
  %v2172 = vsel %vm1096, %v2162, %v2171
  %v2174 = vshrl.u32 %v2092, 16
  %v2176 = vrot.slane %v2174, 3
  %v2177 = vshll.u32 %v2092, 16
  %v2179 = vrot.slane %v2177, 4
  %v2180 = vor.u32 %v2176, %v2179
  %v2181 = vsel %vm1096, %v2171, %v2180
  %v2183 = vshrl.u32 %v2093, 16
  %v2185 = vrot.slane %v2183, 3
  %v2186 = vshll.u32 %v2093, 16
  %v2188 = vrot.slane %v2186, 4
  %v2189 = vor.u32 %v2185, %v2188
  %v2190 = vsel %vm1096, %v2180, %v2189
  %v2215 = vunpack.c.l.b16 %v2095
  %v2216 = vunpack.c.l.b16 %v2096
  %v2217 = vunpack.c.l.b16 %v2097
  %v2218 = vunpack.c.l.b16 %v2098
  %v2219 = vunpack.c.l.b16 %v2099
  %v2220 = vunpack.c.l.b16 %v2100
  %v2221 = vunpack.c.l.b16 %v2101
  %v2222 = vunpack.c.l.b16 %v2102
  %v2223 = vunpack.c.l.b16 %v2103
  %v2224 = vunpack.c.l.b16 %v2104
  %v2225 = vunpack.c.l.b16 %v2105
  %v2226 = vunpack.c.l.b16 %v2106
  %v2227 = vunpack.c.l.b16 %v2107
  %v2228 = vunpack.c.l.b16 %v2108
  %v2229 = vunpack.c.l.b16 %v2109
  %v2230 = vunpack.c.l.b16 %v2110
  %v2231 = vpack.c.b16 %v2216, %v2215
  %v2232 = vpack.c.b16 %v2218, %v2217
  %v2233 = vpack.c.b16 %v2220, %v2219
  %v2234 = vpack.c.b16 %v2222, %v2221
  %v2235 = vpack.c.b16 %v2224, %v2223
  %v2236 = vpack.c.b16 %v2226, %v2225
  %v2237 = vpack.c.b16 %v2228, %v2227
  %v2238 = vpack.c.b16 %v2230, %v2229
  %2247 = vmatpush.bf16.msra.mxu0 %v2238
  %2248 = vmatpush.bf16.msra.mxu0 %v2237
  %2249 = vmatpush.bf16.msra.mxu0 %v2236
  %2250 = vmatpush.bf16.msra.mxu0 %v2235
  %2251 = vmatpush.bf16.msra.mxu0 %v2234
  %2252 = vmatpush.bf16.msra.mxu0 %v2233
  %2253 = vmatpush.bf16.msra.mxu0 %v2232
  %2254 = vmatpush.bf16.msra.mxu0 %v2231
  %2255 = vmatmul.bf16.gmra.mxu0 %v2127
  %v2256 = vpop.f32.mrf.mxu0
  %v2257 = vadd.f32 0.0, %v2256
  %v2258 = vpop.f32.mrf.mxu0
  %v2259 = vadd.f32 0.0, %v2258
  %2260 = vmatmul.bf16.gmra.mxu0 %v2136
  %v2261 = vpop.f32.mrf.mxu0
  %v2262 = vadd.f32 0.0, %v2261
  %v2263 = vpop.f32.mrf.mxu0
  %v2264 = vadd.f32 0.0, %v2263
  %2265 = vmatmul.bf16.gmra.mxu0 %v2145
  %v2266 = vpop.f32.mrf.mxu0
  %v2267 = vadd.f32 0.0, %v2266
  %v2268 = vpop.f32.mrf.mxu0
  %v2269 = vadd.f32 0.0, %v2268
  %2270 = vmatmul.bf16.gmra.mxu0 %v2154
  %v2271 = vpop.f32.mrf.mxu0
  %v2272 = vadd.f32 0.0, %v2271
  %v2273 = vpop.f32.mrf.mxu0
  %v2274 = vadd.f32 0.0, %v2273
  %2275 = vmatmul.bf16.gmra.mxu0 %v2163
  %v2276 = vpop.f32.mrf.mxu0
  %v2277 = vadd.f32 0.0, %v2276
  %v2278 = vpop.f32.mrf.mxu0
  %v2279 = vadd.f32 0.0, %v2278
  %2280 = vmatmul.bf16.gmra.mxu0 %v2172
  %v2281 = vpop.f32.mrf.mxu0
  %v2282 = vadd.f32 0.0, %v2281
  %v2283 = vpop.f32.mrf.mxu0
  %v2284 = vadd.f32 0.0, %v2283
  %2285 = vmatmul.bf16.gmra.mxu0 %v2181
  %v2286 = vpop.f32.mrf.mxu0
  %v2287 = vadd.f32 0.0, %v2286
  %v2288 = vpop.f32.mrf.mxu0
  %v2289 = vadd.f32 0.0, %v2288
  %2290 = vmatmul.bf16.gmra.mxu0 %v2190
  %v2291 = vpop.f32.mrf.mxu0
  %v2292 = vadd.f32 0.0, %v2291
  %v2293 = vpop.f32.mrf.mxu0
  %v2294 = vadd.f32 0.0, %v2293
  %2295 = vdwg.mxu0
  %v2296 = vadd.f32 %v1791, %v2257
  %v2297 = vadd.f32 %v1792, %v2259
  %v2298 = vadd.f32 %v1793, %v2262
  %v2299 = vadd.f32 %v1794, %v2264
  %v2300 = vadd.f32 %v1795, %v2267
  %v2301 = vadd.f32 %v1796, %v2269
  %v2302 = vadd.f32 %v1797, %v2272
  %v2303 = vadd.f32 %v1798, %v2274
  %v2304 = vadd.f32 %v1799, %v2277
  %v2305 = vadd.f32 %v1800, %v2279
  %v2306 = vadd.f32 %v1801, %v2282
  %v2307 = vadd.f32 %v1802, %v2284
  %v2308 = vadd.f32 %v1803, %v2287
  %v2309 = vadd.f32 %v1804, %v2289
  %v2310 = vadd.f32 %v1805, %v2292
  %v2311 = vadd.f32 %v1806, %v2294
  %s2312 = scalar_lea.vmem %s11, 512
  %v2313 = vld [vmem:[%s2312] sm:$0xff]
  %v2314 = vld [vmem:[%s2312 + $0x8] sm:$0xff]
  %v2315 = vld [vmem:[%s2312 + $0x10] sm:$0xff]
  %v2316 = vld [vmem:[%s2312 + $0x18] sm:$0xff]
  %v2317 = vld [vmem:[%s2312 + $0x20] sm:$0xff]
  %v2318 = vld [vmem:[%s2312 + $0x28] sm:$0xff]
  %v2319 = vld [vmem:[%s2312 + $0x30] sm:$0xff]
  %v2320 = vld [vmem:[%s2312 + $0x38] sm:$0xff]
  %v2321 = vld [vmem:[%s2312 + $0x40] sm:$0xff]
  %v2322 = vld [vmem:[%s2312 + $0x48] sm:$0xff]
  %v2323 = vld [vmem:[%s2312 + $0x50] sm:$0xff]
  %v2324 = vld [vmem:[%s2312 + $0x58] sm:$0xff]
  %v2325 = vld [vmem:[%s2312 + $0x60] sm:$0xff]
  %v2326 = vld [vmem:[%s2312 + $0x68] sm:$0xff]
  %v2327 = vld [vmem:[%s2312 + $0x70] sm:$0xff]
  %v2328 = vld [vmem:[%s2312 + $0x78] sm:$0xff]
  %v2329 = vpack.c.bf16 %v2313, %v2313
  %v2330 = vpack.c.bf16 %v2314, %v2314
  %v2331 = vpack.c.bf16 %v2315, %v2315
  %v2332 = vpack.c.bf16 %v2316, %v2316
  %v2333 = vpack.c.bf16 %v2317, %v2317
  %v2334 = vpack.c.bf16 %v2318, %v2318
  %v2335 = vpack.c.bf16 %v2319, %v2319
  %v2336 = vpack.c.bf16 %v2320, %v2320
  %v2337 = vpack.c.bf16 %v2321, %v2321
  %v2338 = vpack.c.bf16 %v2322, %v2322
  %v2339 = vpack.c.bf16 %v2323, %v2323
  %v2340 = vpack.c.bf16 %v2324, %v2324
  %v2341 = vpack.c.bf16 %v2325, %v2325
  %v2342 = vpack.c.bf16 %v2326, %v2326
  %v2343 = vpack.c.bf16 %v2327, %v2327
  %v2344 = vpack.c.bf16 %v2328, %v2328
  %2346 = vset.pattern.permute.xlu0 0
  %2347 = vperm.xlu0 %2346, %v2329
  %v2348 = vpop.permute.xlu0 %2347
  %v2351 = vunpack.c.l.s4 839922192
  %v2352 = vunpack.c.0.s8 %v2351
  %v2353 = vperm.slane %v2348, %v2352
  %2355 = vset.pattern.permute.xlu0 0
  %2356 = vperm.xlu0 %2355, %v2330
  %v2357 = vpop.permute.xlu0 %2356
  %v2360 = vunpack.c.l.s4 839922192
  %v2361 = vunpack.c.0.s8 %v2360
  %v2362 = vperm.slane %v2357, %v2361
  %2364 = vset.pattern.permute.xlu0 0
  %2365 = vperm.xlu0 %2364, %v2331
  %v2366 = vpop.permute.xlu0 %2365
  %v2369 = vunpack.c.l.s4 839922192
  %v2370 = vunpack.c.0.s8 %v2369
  %v2371 = vperm.slane %v2366, %v2370
  %2373 = vset.pattern.permute.xlu0 0
  %2374 = vperm.xlu0 %2373, %v2332
  %v2375 = vpop.permute.xlu0 %2374
  %v2378 = vunpack.c.l.s4 839922192
  %v2379 = vunpack.c.0.s8 %v2378
  %v2380 = vperm.slane %v2375, %v2379
  %2382 = vset.pattern.permute.xlu0 0
  %2383 = vperm.xlu0 %2382, %v2333
  %v2384 = vpop.permute.xlu0 %2383
  %v2387 = vunpack.c.l.s4 839922192
  %v2388 = vunpack.c.0.s8 %v2387
  %v2389 = vperm.slane %v2384, %v2388
  %2391 = vset.pattern.permute.xlu0 0
  %2392 = vperm.xlu0 %2391, %v2334
  %v2393 = vpop.permute.xlu0 %2392
  %v2396 = vunpack.c.l.s4 839922192
  %v2397 = vunpack.c.0.s8 %v2396
  %v2398 = vperm.slane %v2393, %v2397
  %2400 = vset.pattern.permute.xlu0 0
  %2401 = vperm.xlu0 %2400, %v2335
  %v2402 = vpop.permute.xlu0 %2401
  %v2405 = vunpack.c.l.s4 839922192
  %v2406 = vunpack.c.0.s8 %v2405
  %v2407 = vperm.slane %v2402, %v2406
  %2409 = vset.pattern.permute.xlu0 0
  %2410 = vperm.xlu0 %2409, %v2336
  %v2411 = vpop.permute.xlu0 %2410
  %v2414 = vunpack.c.l.s4 839922192
  %v2415 = vunpack.c.0.s8 %v2414
  %v2416 = vperm.slane %v2411, %v2415
  %2418 = vset.pattern.permute.xlu0 0
  %2419 = vperm.xlu0 %2418, %v2337
  %v2420 = vpop.permute.xlu0 %2419
  %v2423 = vunpack.c.l.s4 839922192
  %v2424 = vunpack.c.0.s8 %v2423
  %v2425 = vperm.slane %v2420, %v2424
  %2427 = vset.pattern.permute.xlu0 0
  %2428 = vperm.xlu0 %2427, %v2338
  %v2429 = vpop.permute.xlu0 %2428
  %v2432 = vunpack.c.l.s4 839922192
  %v2433 = vunpack.c.0.s8 %v2432
  %v2434 = vperm.slane %v2429, %v2433
  %2436 = vset.pattern.permute.xlu0 0
  %2437 = vperm.xlu0 %2436, %v2339
  %v2438 = vpop.permute.xlu0 %2437
  %v2441 = vunpack.c.l.s4 839922192
  %v2442 = vunpack.c.0.s8 %v2441
  %v2443 = vperm.slane %v2438, %v2442
  %2445 = vset.pattern.permute.xlu0 0
  %2446 = vperm.xlu0 %2445, %v2340
  %v2447 = vpop.permute.xlu0 %2446
  %v2450 = vunpack.c.l.s4 839922192
  %v2451 = vunpack.c.0.s8 %v2450
  %v2452 = vperm.slane %v2447, %v2451
  %2454 = vset.pattern.permute.xlu0 0
  %2455 = vperm.xlu0 %2454, %v2341
  %v2456 = vpop.permute.xlu0 %2455
  %v2459 = vunpack.c.l.s4 839922192
  %v2460 = vunpack.c.0.s8 %v2459
  %v2461 = vperm.slane %v2456, %v2460
  %2463 = vset.pattern.permute.xlu0 0
  %2464 = vperm.xlu0 %2463, %v2342
  %v2465 = vpop.permute.xlu0 %2464
  %v2468 = vunpack.c.l.s4 839922192
  %v2469 = vunpack.c.0.s8 %v2468
  %v2470 = vperm.slane %v2465, %v2469
  %2472 = vset.pattern.permute.xlu0 0
  %2473 = vperm.xlu0 %2472, %v2343
  %v2474 = vpop.permute.xlu0 %2473
  %v2477 = vunpack.c.l.s4 839922192
  %v2478 = vunpack.c.0.s8 %v2477
  %v2479 = vperm.slane %v2474, %v2478
  %2481 = vset.pattern.permute.xlu0 0
  %2482 = vperm.xlu0 %2481, %v2344
  %v2483 = vpop.permute.xlu0 %2482
  %v2486 = vunpack.c.l.s4 839922192
  %v2487 = vunpack.c.0.s8 %v2486
  %v2488 = vperm.slane %v2483, %v2487
  %v2489 = vunpack.c.l.bf16 %v2353
  %v2490 = vunpack.c.l.bf16 %v2362
  %v2491 = vunpack.c.l.bf16 %v2371
  %v2492 = vunpack.c.l.bf16 %v2380
  %v2493 = vunpack.c.l.bf16 %v2389
  %v2494 = vunpack.c.l.bf16 %v2398
  %v2495 = vunpack.c.l.bf16 %v2407
  %v2496 = vunpack.c.l.bf16 %v2416
  %v2497 = vunpack.c.l.bf16 %v2425
  %v2498 = vunpack.c.l.bf16 %v2434
  %v2499 = vunpack.c.l.bf16 %v2443
  %v2500 = vunpack.c.l.bf16 %v2452
  %v2501 = vunpack.c.l.bf16 %v2461
  %v2502 = vunpack.c.l.bf16 %v2470
  %v2503 = vunpack.c.l.bf16 %v2479
  %v2504 = vunpack.c.l.bf16 %v2488
  %v2505 = vmul.f32 %v1477, %v2489
  %v2506 = vmul.f32 %v1478, %v2490
  %v2507 = vmul.f32 %v1479, %v2491
  %v2508 = vmul.f32 %v1480, %v2492
  %v2509 = vmul.f32 %v1481, %v2493
  %v2510 = vmul.f32 %v1482, %v2494
  %v2511 = vmul.f32 %v1483, %v2495
  %v2512 = vmul.f32 %v1484, %v2496
  %v2513 = vmul.f32 %v1485, %v2497
  %v2514 = vmul.f32 %v1486, %v2498
  %v2515 = vmul.f32 %v1487, %v2499
  %v2516 = vmul.f32 %v1488, %v2500
  %v2517 = vmul.f32 %v1489, %v2501
  %v2518 = vmul.f32 %v1490, %v2502
  %v2519 = vmul.f32 %v1491, %v2503
  %v2520 = vmul.f32 %v1987, %v2504
  %v2521 = vpack.c.bf16 %v2506, %v2505
  %v2522 = vpack.c.bf16 %v2508, %v2507
  %v2523 = vpack.c.bf16 %v2510, %v2509
  %v2524 = vpack.c.bf16 %v2512, %v2511
  %v2525 = vpack.c.bf16 %v2514, %v2513
  %v2526 = vpack.c.bf16 %v2516, %v2515
  %v2527 = vpack.c.bf16 %v2518, %v2517
  %v2528 = vpack.c.bf16 %v2520, %v2519
  %s2529 = scalar_lea.vmem %s4, 256
  %v2530 = vld [vmem:[%s2529] sm:$0xf]
  %v2531 = vld [vmem:[%s2529 + $0x4] sm:$0xf]
  %v2532 = vld [vmem:[%s2529 + $0x8] sm:$0xf]
  %v2533 = vld [vmem:[%s2529 + $0xc] sm:$0xf]
  %v2534 = vld [vmem:[%s2529 + $0x10] sm:$0xf]
  %v2535 = vld [vmem:[%s2529 + $0x14] sm:$0xf]
  %v2536 = vld [vmem:[%s2529 + $0x18] sm:$0xf]
  %v2537 = vld [vmem:[%s2529 + $0x1c] sm:$0xf]
  %v2538 = vld [vmem:[%s2529 + $0x20] sm:$0xf]
  %v2539 = vld [vmem:[%s2529 + $0x24] sm:$0xf]
  %v2540 = vld [vmem:[%s2529 + $0x28] sm:$0xf]
  %v2541 = vld [vmem:[%s2529 + $0x2c] sm:$0xf]
  %v2542 = vld [vmem:[%s2529 + $0x30] sm:$0xf]
  %v2543 = vld [vmem:[%s2529 + $0x34] sm:$0xf]
  %v2544 = vld [vmem:[%s2529 + $0x38] sm:$0xf]
  %v2545 = vld [vmem:[%s2529 + $0x3c] sm:$0xf]
  %v2562 = vunpack.c.l.b16 %v2530
  %v2563 = vunpack.c.l.b16 %v2531
  %v2564 = vunpack.c.l.b16 %v2532
  %v2565 = vunpack.c.l.b16 %v2533
  %v2566 = vunpack.c.l.b16 %v2534
  %v2567 = vunpack.c.l.b16 %v2535
  %v2568 = vunpack.c.l.b16 %v2536
  %v2569 = vunpack.c.l.b16 %v2537
  %v2570 = vunpack.c.l.b16 %v2538
  %v2571 = vunpack.c.l.b16 %v2539
  %v2572 = vunpack.c.l.b16 %v2540
  %v2573 = vunpack.c.l.b16 %v2541
  %v2574 = vunpack.c.l.b16 %v2542
  %v2575 = vunpack.c.l.b16 %v2543
  %v2576 = vunpack.c.l.b16 %v2544
  %v2577 = vunpack.c.l.b16 %v2545
  %v2578 = vpack.c.b16 %v2563, %v2562
  %v2579 = vpack.c.b16 %v2565, %v2564
  %v2580 = vpack.c.b16 %v2567, %v2566
  %v2581 = vpack.c.b16 %v2569, %v2568
  %v2582 = vpack.c.b16 %v2571, %v2570
  %v2583 = vpack.c.b16 %v2573, %v2572
  %v2584 = vpack.c.b16 %v2575, %v2574
  %v2585 = vpack.c.b16 %v2577, %v2576
  %2594 = vmatpush.bf16.msra.mxu0 %v2585
  %2595 = vmatpush.bf16.msra.mxu0 %v2584
  %2596 = vmatpush.bf16.msra.mxu0 %v2583
  %2597 = vmatpush.bf16.msra.mxu0 %v2582
  %2598 = vmatpush.bf16.msra.mxu0 %v2581
  %2599 = vmatpush.bf16.msra.mxu0 %v2580
  %2600 = vmatpush.bf16.msra.mxu0 %v2579
  %2601 = vmatpush.bf16.msra.mxu0 %v2578
  %2602 = vmatmul.bf16.gmra.mxu0 %v2521
  %v2603 = vpop.f32.mrf.mxu0
  %v2604 = vadd.f32 0.0, %v2603
  %v2605 = vpop.f32.mrf.mxu0
  %v2606 = vadd.f32 0.0, %v2605
  %2607 = vmatmul.bf16.gmra.mxu0 %v2522
  %v2608 = vpop.f32.mrf.mxu0
  %v2609 = vadd.f32 0.0, %v2608
  %v2610 = vpop.f32.mrf.mxu0
  %v2611 = vadd.f32 0.0, %v2610
  %2612 = vmatmul.bf16.gmra.mxu0 %v2523
  %v2613 = vpop.f32.mrf.mxu0
  %v2614 = vadd.f32 0.0, %v2613
  %v2615 = vpop.f32.mrf.mxu0
  %v2616 = vadd.f32 0.0, %v2615
  %2617 = vmatmul.bf16.gmra.mxu0 %v2524
  %v2618 = vpop.f32.mrf.mxu0
  %v2619 = vadd.f32 0.0, %v2618
  %v2620 = vpop.f32.mrf.mxu0
  %v2621 = vadd.f32 0.0, %v2620
  %2622 = vmatmul.bf16.gmra.mxu0 %v2525
  %v2623 = vpop.f32.mrf.mxu0
  %v2624 = vadd.f32 0.0, %v2623
  %v2625 = vpop.f32.mrf.mxu0
  %v2626 = vadd.f32 0.0, %v2625
  %2627 = vmatmul.bf16.gmra.mxu0 %v2526
  %v2628 = vpop.f32.mrf.mxu0
  %v2629 = vadd.f32 0.0, %v2628
  %v2630 = vpop.f32.mrf.mxu0
  %v2631 = vadd.f32 0.0, %v2630
  %2632 = vmatmul.bf16.gmra.mxu0 %v2527
  %v2633 = vpop.f32.mrf.mxu0
  %v2634 = vadd.f32 0.0, %v2633
  %v2635 = vpop.f32.mrf.mxu0
  %v2636 = vadd.f32 0.0, %v2635
  %2637 = vmatmul.bf16.gmra.mxu0 %v2528
  %v2638 = vpop.f32.mrf.mxu0
  %v2639 = vadd.f32 0.0, %v2638
  %v2640 = vpop.f32.mrf.mxu0
  %v2641 = vadd.f32 0.0, %v2640
  %2642 = vdwg.mxu0
  %v2643 = vadd.f32 %v2296, %v2604
  %v2644 = vadd.f32 %v2297, %v2606
  %v2645 = vadd.f32 %v2298, %v2609
  %v2646 = vadd.f32 %v2299, %v2611
  %v2647 = vadd.f32 %v2300, %v2614
  %v2648 = vadd.f32 %v2301, %v2616
  %v2649 = vadd.f32 %v2302, %v2619
  %v2650 = vadd.f32 %v2303, %v2621
  %v2651 = vadd.f32 %v2304, %v2624
  %v2652 = vadd.f32 %v2305, %v2626
  %v2653 = vadd.f32 %v2306, %v2629
  %v2654 = vadd.f32 %v2307, %v2631
  %v2655 = vadd.f32 %v2308, %v2634
  %v2656 = vadd.f32 %v2309, %v2636
  %v2657 = vadd.f32 %v2310, %v2639
  %v2658 = vadd.f32 %v2311, %v2641
  %s2659 = scalar_lea.vmem %s11, 640
  %v2660 = vld [vmem:[%s2659] sm:$0xff]
  %v2661 = vld [vmem:[%s2659 + $0x8] sm:$0xff]
  %v2662 = vld [vmem:[%s2659 + $0x10] sm:$0xff]
  %v2663 = vld [vmem:[%s2659 + $0x18] sm:$0xff]
  %v2664 = vld [vmem:[%s2659 + $0x20] sm:$0xff]
  %v2665 = vld [vmem:[%s2659 + $0x28] sm:$0xff]
  %v2666 = vld [vmem:[%s2659 + $0x30] sm:$0xff]
  %v2667 = vld [vmem:[%s2659 + $0x38] sm:$0xff]
  %v2668 = vld [vmem:[%s2659 + $0x40] sm:$0xff]
  %v2669 = vld [vmem:[%s2659 + $0x48] sm:$0xff]
  %v2670 = vld [vmem:[%s2659 + $0x50] sm:$0xff]
  %v2671 = vld [vmem:[%s2659 + $0x58] sm:$0xff]
  %v2672 = vld [vmem:[%s2659 + $0x60] sm:$0xff]
  %v2673 = vld [vmem:[%s2659 + $0x68] sm:$0xff]
  %v2674 = vld [vmem:[%s2659 + $0x70] sm:$0xff]
  %v2675 = vld [vmem:[%s2659 + $0x78] sm:$0xff]
  %v2676 = vpack.c.bf16 %v2660, %v2660
  %v2677 = vpack.c.bf16 %v2661, %v2661
  %v2678 = vpack.c.bf16 %v2662, %v2662
  %v2679 = vpack.c.bf16 %v2663, %v2663
  %v2680 = vpack.c.bf16 %v2664, %v2664
  %v2681 = vpack.c.bf16 %v2665, %v2665
  %v2682 = vpack.c.bf16 %v2666, %v2666
  %v2683 = vpack.c.bf16 %v2667, %v2667
  %v2684 = vpack.c.bf16 %v2668, %v2668
  %v2685 = vpack.c.bf16 %v2669, %v2669
  %v2686 = vpack.c.bf16 %v2670, %v2670
  %v2687 = vpack.c.bf16 %v2671, %v2671
  %v2688 = vpack.c.bf16 %v2672, %v2672
  %v2689 = vpack.c.bf16 %v2673, %v2673
  %v2690 = vpack.c.bf16 %v2674, %v2674
  %v2691 = vpack.c.bf16 %v2675, %v2675
  %v2692 = vld [vmem:[#allocation2 + $0x8] sm:$0xf]
  %v2693 = vld [vmem:[#allocation2 + $0xc] sm:$0xf]
  %v2694 = vld [vmem:[#allocation2 + $0x10] sm:$0xf]
  %v2695 = vld [vmem:[#allocation2 + $0x14] sm:$0xf]
  %v2696 = vld [vmem:[#allocation2 + $0x18] sm:$0xf]
  %v2697 = vld [vmem:[#allocation2 + $0x1c] sm:$0xf]
  %v2698 = vld [vmem:[#allocation2 + $0x20] sm:$0xf]
  %v2699 = vld [vmem:[#allocation2 + $0x24] sm:$0xf]
  %v2700 = vld [vmem:[#allocation2 + $0x28] sm:$0xf]
  %v2701 = vld [vmem:[#allocation2 + $0x2c] sm:$0xf]
  %v2702 = vld [vmem:[#allocation2 + $0x30] sm:$0xf]
  %v2703 = vld [vmem:[#allocation2 + $0x34] sm:$0xf]
  %v2704 = vld [vmem:[#allocation2 + $0x38] sm:$0xf]
  %v2705 = vld [vmem:[#allocation2 + $0x3c] sm:$0xf]
  %v2706 = vld [vmem:[#allocation2 + $0x40] sm:$0xf]
  %v2707 = vld [vmem:[#allocation2 + $0x44] sm:$0xf]
  %v2708 = vld [vmem:[#allocation2 + $0x48] sm:$0x1]
  %2710 = vset.pattern.permute.xlu0 0
  %2711 = vperm.xlu0 %2710, %v2676
  %v2712 = vpop.permute.xlu0 %2711
  %v2715 = vunpack.c.l.s4 839922192
  %v2716 = vunpack.c.0.s8 %v2715
  %v2717 = vperm.slane %v2712, %v2716
  %2719 = vset.pattern.permute.xlu0 0
  %2720 = vperm.xlu0 %2719, %v2677
  %v2721 = vpop.permute.xlu0 %2720
  %v2724 = vunpack.c.l.s4 839922192
  %v2725 = vunpack.c.0.s8 %v2724
  %v2726 = vperm.slane %v2721, %v2725
  %2728 = vset.pattern.permute.xlu0 0
  %2729 = vperm.xlu0 %2728, %v2678
  %v2730 = vpop.permute.xlu0 %2729
  %v2733 = vunpack.c.l.s4 839922192
  %v2734 = vunpack.c.0.s8 %v2733
  %v2735 = vperm.slane %v2730, %v2734
  %2737 = vset.pattern.permute.xlu0 0
  %2738 = vperm.xlu0 %2737, %v2679
  %v2739 = vpop.permute.xlu0 %2738
  %v2742 = vunpack.c.l.s4 839922192
  %v2743 = vunpack.c.0.s8 %v2742
  %v2744 = vperm.slane %v2739, %v2743
  %2746 = vset.pattern.permute.xlu0 0
  %2747 = vperm.xlu0 %2746, %v2680
  %v2748 = vpop.permute.xlu0 %2747
  %v2751 = vunpack.c.l.s4 839922192
  %v2752 = vunpack.c.0.s8 %v2751
  %v2753 = vperm.slane %v2748, %v2752
  %2755 = vset.pattern.permute.xlu0 0
  %2756 = vperm.xlu0 %2755, %v2681
  %v2757 = vpop.permute.xlu0 %2756
  %v2760 = vunpack.c.l.s4 839922192
  %v2761 = vunpack.c.0.s8 %v2760
  %v2762 = vperm.slane %v2757, %v2761
  %2764 = vset.pattern.permute.xlu0 0
  %2765 = vperm.xlu0 %2764, %v2682
  %v2766 = vpop.permute.xlu0 %2765
  %v2769 = vunpack.c.l.s4 839922192
  %v2770 = vunpack.c.0.s8 %v2769
  %v2771 = vperm.slane %v2766, %v2770
  %2773 = vset.pattern.permute.xlu0 0
  %2774 = vperm.xlu0 %2773, %v2683
  %v2775 = vpop.permute.xlu0 %2774
  %v2778 = vunpack.c.l.s4 839922192
  %v2779 = vunpack.c.0.s8 %v2778
  %v2780 = vperm.slane %v2775, %v2779
  %2782 = vset.pattern.permute.xlu0 0
  %2783 = vperm.xlu0 %2782, %v2684
  %v2784 = vpop.permute.xlu0 %2783
  %v2787 = vunpack.c.l.s4 839922192
  %v2788 = vunpack.c.0.s8 %v2787
  %v2789 = vperm.slane %v2784, %v2788
  %2791 = vset.pattern.permute.xlu0 0
  %2792 = vperm.xlu0 %2791, %v2685
  %v2793 = vpop.permute.xlu0 %2792
  %v2796 = vunpack.c.l.s4 839922192
  %v2797 = vunpack.c.0.s8 %v2796
  %v2798 = vperm.slane %v2793, %v2797
  %2800 = vset.pattern.permute.xlu0 0
  %2801 = vperm.xlu0 %2800, %v2686
  %v2802 = vpop.permute.xlu0 %2801
  %v2805 = vunpack.c.l.s4 839922192
  %v2806 = vunpack.c.0.s8 %v2805
  %v2807 = vperm.slane %v2802, %v2806
  %2809 = vset.pattern.permute.xlu0 0
  %2810 = vperm.xlu0 %2809, %v2687
  %v2811 = vpop.permute.xlu0 %2810
  %v2814 = vunpack.c.l.s4 839922192
  %v2815 = vunpack.c.0.s8 %v2814
  %v2816 = vperm.slane %v2811, %v2815
  %2818 = vset.pattern.permute.xlu0 0
  %2819 = vperm.xlu0 %2818, %v2688
  %v2820 = vpop.permute.xlu0 %2819
  %v2823 = vunpack.c.l.s4 839922192
  %v2824 = vunpack.c.0.s8 %v2823
  %v2825 = vperm.slane %v2820, %v2824
  %2827 = vset.pattern.permute.xlu0 0
  %2828 = vperm.xlu0 %2827, %v2689
  %v2829 = vpop.permute.xlu0 %2828
  %v2832 = vunpack.c.l.s4 839922192
  %v2833 = vunpack.c.0.s8 %v2832
  %v2834 = vperm.slane %v2829, %v2833
  %2836 = vset.pattern.permute.xlu0 0
  %2837 = vperm.xlu0 %2836, %v2690
  %v2838 = vpop.permute.xlu0 %2837
  %v2841 = vunpack.c.l.s4 839922192
  %v2842 = vunpack.c.0.s8 %v2841
  %v2843 = vperm.slane %v2838, %v2842
  %2845 = vset.pattern.permute.xlu0 0
  %2846 = vperm.xlu0 %2845, %v2691
  %v2847 = vpop.permute.xlu0 %2846
  %v2850 = vunpack.c.l.s4 839922192
  %v2851 = vunpack.c.0.s8 %v2850
  %v2852 = vperm.slane %v2847, %v2851
  %v2853 = vunpack.c.l.bf16 %v2692
  %v2854 = vunpack.c.l.bf16 %v2693
  %v2855 = vunpack.c.l.bf16 %v2694
  %v2856 = vunpack.c.l.bf16 %v2695
  %v2857 = vunpack.c.l.bf16 %v2696
  %v2858 = vunpack.c.l.bf16 %v2697
  %v2859 = vunpack.c.l.bf16 %v2698
  %v2860 = vunpack.c.l.bf16 %v2699
  %v2861 = vunpack.c.l.bf16 %v2700
  %v2862 = vunpack.c.l.bf16 %v2701
  %v2863 = vunpack.c.l.bf16 %v2702
  %v2864 = vunpack.c.l.bf16 %v2703
  %v2865 = vunpack.c.l.bf16 %v2704
  %v2866 = vunpack.c.l.bf16 %v2705
  %v2867 = vunpack.c.l.bf16 %v2706
  %v2868 = vunpack.c.l.bf16 %v2707
  %v2869 = vunpack.c.l.bf16 %v2708
  %v2870 = vunpack.c.l.bf16 %v2717
  %v2871 = vunpack.c.l.bf16 %v2726
  %v2872 = vunpack.c.l.bf16 %v2735
  %v2873 = vunpack.c.l.bf16 %v2744
  %v2874 = vunpack.c.l.bf16 %v2753
  %v2875 = vunpack.c.l.bf16 %v2762
  %v2876 = vunpack.c.l.bf16 %v2771
  %v2877 = vunpack.c.l.bf16 %v2780
  %v2878 = vunpack.c.l.bf16 %v2789
  %v2879 = vunpack.c.l.bf16 %v2798
  %v2880 = vunpack.c.l.bf16 %v2807
  %v2881 = vunpack.c.l.bf16 %v2816
  %v2882 = vunpack.c.l.bf16 %v2825
  %v2883 = vunpack.c.l.bf16 %v2834
  %v2884 = vunpack.c.l.bf16 %v2843
  %v2885 = vunpack.c.l.bf16 %v2852
  %v2902 = vrot.slane %v2870, 7
  %v2903 = vrot.slane %v2871, 7
  %v2904 = vsel %vm1525, %v2902, %v2903
  %v2905 = vrot.slane %v2872, 7
  %v2906 = vsel %vm1525, %v2903, %v2905
  %v2907 = vrot.slane %v2873, 7
  %v2908 = vsel %vm1525, %v2905, %v2907
  %v2909 = vrot.slane %v2874, 7
  %v2910 = vsel %vm1525, %v2907, %v2909
  %v2911 = vrot.slane %v2875, 7
  %v2912 = vsel %vm1525, %v2909, %v2911
  %v2913 = vrot.slane %v2876, 7
  %v2914 = vsel %vm1525, %v2911, %v2913
  %v2915 = vrot.slane %v2877, 7
  %v2916 = vsel %vm1525, %v2913, %v2915
  %v2917 = vrot.slane %v2878, 7
  %v2918 = vsel %vm1525, %v2915, %v2917
  %v2919 = vrot.slane %v2879, 7
  %v2920 = vsel %vm1525, %v2917, %v2919
  %v2921 = vrot.slane %v2880, 7
  %v2922 = vsel %vm1525, %v2919, %v2921
  %v2923 = vrot.slane %v2881, 7
  %v2924 = vsel %vm1525, %v2921, %v2923
  %v2925 = vrot.slane %v2882, 7
  %v2926 = vsel %vm1525, %v2923, %v2925
  %v2927 = vrot.slane %v2883, 7
  %v2928 = vsel %vm1525, %v2925, %v2927
  %v2929 = vrot.slane %v2884, 7
  %v2930 = vsel %vm1525, %v2927, %v2929
  %v2931 = vrot.slane %v2885, 7
  %v2932 = vsel %vm1525, %v2929, %v2931
  %v2950 = vmul.f32 %v2853, %v2902
  %v2951 = vmul.f32 %v2854, %v2904
  %v2952 = vmul.f32 %v2855, %v2906
  %v2953 = vmul.f32 %v2856, %v2908
  %v2954 = vmul.f32 %v2857, %v2910
  %v2955 = vmul.f32 %v2858, %v2912
  %v2956 = vmul.f32 %v2859, %v2914
  %v2957 = vmul.f32 %v2860, %v2916
  %v2958 = vmul.f32 %v2861, %v2918
  %v2959 = vmul.f32 %v2862, %v2920
  %v2960 = vmul.f32 %v2863, %v2922
  %v2961 = vmul.f32 %v2864, %v2924
  %v2962 = vmul.f32 %v2865, %v2926
  %v2963 = vmul.f32 %v2866, %v2928
  %v2964 = vmul.f32 %v2867, %v2930
  %v2965 = vmul.f32 %v2868, %v2932
  %v2966 = vmul.f32 %v2869, %v2931
  %v2967 = vpack.c.bf16 %v2951, %v2950
  %v2968 = vpack.c.bf16 %v2953, %v2952
  %v2969 = vpack.c.bf16 %v2955, %v2954
  %v2970 = vpack.c.bf16 %v2957, %v2956
  %v2971 = vpack.c.bf16 %v2959, %v2958
  %v2972 = vpack.c.bf16 %v2961, %v2960
  %v2973 = vpack.c.bf16 %v2963, %v2962
  %v2974 = vpack.c.bf16 %v2965, %v2964
  %v2975 = vpack.c.bf16 %v2966, %v2966
  %s2976 = scalar_lea.vmem %s4, 320
  %v2977 = vld [vmem:[%s2976] sm:$0xf]
  %v2978 = vld [vmem:[%s2976 + $0x4] sm:$0xf]
  %v2979 = vld [vmem:[%s2976 + $0x8] sm:$0xf]
  %v2980 = vld [vmem:[%s2976 + $0xc] sm:$0xf]
  %v2981 = vld [vmem:[%s2976 + $0x10] sm:$0xf]
  %v2982 = vld [vmem:[%s2976 + $0x14] sm:$0xf]
  %v2983 = vld [vmem:[%s2976 + $0x18] sm:$0xf]
  %v2984 = vld [vmem:[%s2976 + $0x1c] sm:$0xf]
  %v2985 = vld [vmem:[%s2976 + $0x20] sm:$0xf]
  %v2986 = vld [vmem:[%s2976 + $0x24] sm:$0xf]
  %v2987 = vld [vmem:[%s2976 + $0x28] sm:$0xf]
  %v2988 = vld [vmem:[%s2976 + $0x2c] sm:$0xf]
  %v2989 = vld [vmem:[%s2976 + $0x30] sm:$0xf]
  %v2990 = vld [vmem:[%s2976 + $0x34] sm:$0xf]
  %v2991 = vld [vmem:[%s2976 + $0x38] sm:$0xf]
  %v2992 = vld [vmem:[%s2976 + $0x3c] sm:$0xf]
  %v2994 = vshrl.u32 %v2967, 16
  %v2996 = vshll.u32 %v2967, 16
  %v2998 = vrot.slane %v2996, 1
  %v2999 = vor.u32 %v2994, %v2998
  %v3001 = vshll.u32 %v2968, 16
  %v3003 = vrot.slane %v3001, 1
  %v3004 = vsel %vm1617, %v2999, %v3003
  %v3005 = vshrl.u32 %v2968, 16
  %v3007 = vor.u32 %v3005, %v3003
  %v3009 = vshll.u32 %v2969, 16
  %v3011 = vrot.slane %v3009, 1
  %v3012 = vsel %vm1617, %v3007, %v3011
  %v3013 = vshrl.u32 %v2969, 16
  %v3015 = vor.u32 %v3013, %v3011
  %v3017 = vshll.u32 %v2970, 16
  %v3019 = vrot.slane %v3017, 1
  %v3020 = vsel %vm1617, %v3015, %v3019
  %v3021 = vshrl.u32 %v2970, 16
  %v3023 = vor.u32 %v3021, %v3019
  %v3025 = vshll.u32 %v2971, 16
  %v3027 = vrot.slane %v3025, 1
  %v3028 = vsel %vm1617, %v3023, %v3027
  %v3029 = vshrl.u32 %v2971, 16
  %v3031 = vor.u32 %v3029, %v3027
  %v3033 = vshll.u32 %v2972, 16
  %v3035 = vrot.slane %v3033, 1
  %v3036 = vsel %vm1617, %v3031, %v3035
  %v3037 = vshrl.u32 %v2972, 16
  %v3039 = vor.u32 %v3037, %v3035
  %v3041 = vshll.u32 %v2973, 16
  %v3043 = vrot.slane %v3041, 1
  %v3044 = vsel %vm1617, %v3039, %v3043
  %v3045 = vshrl.u32 %v2973, 16
  %v3047 = vor.u32 %v3045, %v3043
  %v3049 = vshll.u32 %v2974, 16
  %v3051 = vrot.slane %v3049, 1
  %v3052 = vsel %vm1617, %v3047, %v3051
  %v3053 = vshrl.u32 %v2974, 16
  %v3055 = vor.u32 %v3053, %v3051
  %v3057 = vshll.u32 %v2975, 16
  %v3059 = vrot.slane %v3057, 1
  %v3060 = vsel %vm1617, %v3055, %v3059
  %v3085 = vunpack.c.l.b16 %v2977
  %v3086 = vunpack.c.l.b16 %v2978
  %v3087 = vunpack.c.l.b16 %v2979
  %v3088 = vunpack.c.l.b16 %v2980
  %v3089 = vunpack.c.l.b16 %v2981
  %v3090 = vunpack.c.l.b16 %v2982
  %v3091 = vunpack.c.l.b16 %v2983
  %v3092 = vunpack.c.l.b16 %v2984
  %v3093 = vunpack.c.l.b16 %v2985
  %v3094 = vunpack.c.l.b16 %v2986
  %v3095 = vunpack.c.l.b16 %v2987
  %v3096 = vunpack.c.l.b16 %v2988
  %v3097 = vunpack.c.l.b16 %v2989
  %v3098 = vunpack.c.l.b16 %v2990
  %v3099 = vunpack.c.l.b16 %v2991
  %v3100 = vunpack.c.l.b16 %v2992
  %v3101 = vpack.c.b16 %v3086, %v3085
  %v3102 = vpack.c.b16 %v3088, %v3087
  %v3103 = vpack.c.b16 %v3090, %v3089
  %v3104 = vpack.c.b16 %v3092, %v3091
  %v3105 = vpack.c.b16 %v3094, %v3093
  %v3106 = vpack.c.b16 %v3096, %v3095
  %v3107 = vpack.c.b16 %v3098, %v3097
  %v3108 = vpack.c.b16 %v3100, %v3099
  %3117 = vmatpush.bf16.msra.mxu0 %v3108
  %3118 = vmatpush.bf16.msra.mxu0 %v3107
  %3119 = vmatpush.bf16.msra.mxu0 %v3106
  %3120 = vmatpush.bf16.msra.mxu0 %v3105
  %3121 = vmatpush.bf16.msra.mxu0 %v3104
  %3122 = vmatpush.bf16.msra.mxu0 %v3103
  %3123 = vmatpush.bf16.msra.mxu0 %v3102
  %3124 = vmatpush.bf16.msra.mxu0 %v3101
  %3125 = vmatmul.bf16.gmra.mxu0 %v3004
  %v3126 = vpop.f32.mrf.mxu0
  %v3127 = vadd.f32 0.0, %v3126
  %v3128 = vpop.f32.mrf.mxu0
  %v3129 = vadd.f32 0.0, %v3128
  %3130 = vmatmul.bf16.gmra.mxu0 %v3012
  %v3131 = vpop.f32.mrf.mxu0
  %v3132 = vadd.f32 0.0, %v3131
  %v3133 = vpop.f32.mrf.mxu0
  %v3134 = vadd.f32 0.0, %v3133
  %3135 = vmatmul.bf16.gmra.mxu0 %v3020
  %v3136 = vpop.f32.mrf.mxu0
  %v3137 = vadd.f32 0.0, %v3136
  %v3138 = vpop.f32.mrf.mxu0
  %v3139 = vadd.f32 0.0, %v3138
  %3140 = vmatmul.bf16.gmra.mxu0 %v3028
  %v3141 = vpop.f32.mrf.mxu0
  %v3142 = vadd.f32 0.0, %v3141
  %v3143 = vpop.f32.mrf.mxu0
  %v3144 = vadd.f32 0.0, %v3143
  %3145 = vmatmul.bf16.gmra.mxu0 %v3036
  %v3146 = vpop.f32.mrf.mxu0
  %v3147 = vadd.f32 0.0, %v3146
  %v3148 = vpop.f32.mrf.mxu0
  %v3149 = vadd.f32 0.0, %v3148
  %3150 = vmatmul.bf16.gmra.mxu0 %v3044
  %v3151 = vpop.f32.mrf.mxu0
  %v3152 = vadd.f32 0.0, %v3151
  %v3153 = vpop.f32.mrf.mxu0
  %v3154 = vadd.f32 0.0, %v3153
  %3155 = vmatmul.bf16.gmra.mxu0 %v3052
  %v3156 = vpop.f32.mrf.mxu0
  %v3157 = vadd.f32 0.0, %v3156
  %v3158 = vpop.f32.mrf.mxu0
  %v3159 = vadd.f32 0.0, %v3158
  %3160 = vmatmul.bf16.gmra.mxu0 %v3060
  %v3161 = vpop.f32.mrf.mxu0
  %v3162 = vadd.f32 0.0, %v3161
  %v3163 = vpop.f32.mrf.mxu0
  %v3164 = vadd.f32 0.0, %v3163
  %3165 = vdwg.mxu0
  %v3166 = vadd.f32 %v2643, %v3127
  %v3167 = vadd.f32 %v2644, %v3129
  %v3168 = vadd.f32 %v2645, %v3132
  %v3169 = vadd.f32 %v2646, %v3134
  %v3170 = vadd.f32 %v2647, %v3137
  %v3171 = vadd.f32 %v2648, %v3139
  %v3172 = vadd.f32 %v2649, %v3142
  %v3173 = vadd.f32 %v2650, %v3144
  %v3174 = vadd.f32 %v2651, %v3147
  %v3175 = vadd.f32 %v2652, %v3149
  %v3176 = vadd.f32 %v2653, %v3152
  %v3177 = vadd.f32 %v2654, %v3154
  %v3178 = vadd.f32 %v2655, %v3157
  %v3179 = vadd.f32 %v2656, %v3159
  %v3180 = vadd.f32 %v2657, %v3162
  %v3181 = vadd.f32 %v2658, %v3164
  %s3182 = scalar_lea.vmem %s11, 768
  %v3183 = vld [vmem:[%s3182] sm:$0xff]
  %v3184 = vld [vmem:[%s3182 + $0x8] sm:$0xff]
  %v3185 = vld [vmem:[%s3182 + $0x10] sm:$0xff]
  %v3186 = vld [vmem:[%s3182 + $0x18] sm:$0xff]
  %v3187 = vld [vmem:[%s3182 + $0x20] sm:$0xff]
  %v3188 = vld [vmem:[%s3182 + $0x28] sm:$0xff]
  %v3189 = vld [vmem:[%s3182 + $0x30] sm:$0xff]
  %v3190 = vld [vmem:[%s3182 + $0x38] sm:$0xff]
  %v3191 = vld [vmem:[%s3182 + $0x40] sm:$0xff]
  %v3192 = vld [vmem:[%s3182 + $0x48] sm:$0xff]
  %v3193 = vld [vmem:[%s3182 + $0x50] sm:$0xff]
  %v3194 = vld [vmem:[%s3182 + $0x58] sm:$0xff]
  %v3195 = vld [vmem:[%s3182 + $0x60] sm:$0xff]
  %v3196 = vld [vmem:[%s3182 + $0x68] sm:$0xff]
  %v3197 = vld [vmem:[%s3182 + $0x70] sm:$0xff]
  %v3198 = vld [vmem:[%s3182 + $0x78] sm:$0xff]
  %v3199 = vpack.c.bf16 %v3183, %v3183
  %v3200 = vpack.c.bf16 %v3184, %v3184
  %v3201 = vpack.c.bf16 %v3185, %v3185
  %v3202 = vpack.c.bf16 %v3186, %v3186
  %v3203 = vpack.c.bf16 %v3187, %v3187
  %v3204 = vpack.c.bf16 %v3188, %v3188
  %v3205 = vpack.c.bf16 %v3189, %v3189
  %v3206 = vpack.c.bf16 %v3190, %v3190
  %v3207 = vpack.c.bf16 %v3191, %v3191
  %v3208 = vpack.c.bf16 %v3192, %v3192
  %v3209 = vpack.c.bf16 %v3193, %v3193
  %v3210 = vpack.c.bf16 %v3194, %v3194
  %v3211 = vpack.c.bf16 %v3195, %v3195
  %v3212 = vpack.c.bf16 %v3196, %v3196
  %v3213 = vpack.c.bf16 %v3197, %v3197
  %v3214 = vpack.c.bf16 %v3198, %v3198
  %v3215 = vld [vmem:[#allocation2 + $0x8] sm:$0x8]
  %v3216 = vld [vmem:[#allocation2 + $0x48] sm:$0xf]
  %3218 = vset.pattern.permute.xlu0 0
  %3219 = vperm.xlu0 %3218, %v3199
  %v3220 = vpop.permute.xlu0 %3219
  %v3223 = vunpack.c.l.s4 839922192
  %v3224 = vunpack.c.0.s8 %v3223
  %v3225 = vperm.slane %v3220, %v3224
  %3227 = vset.pattern.permute.xlu0 0
  %3228 = vperm.xlu0 %3227, %v3200
  %v3229 = vpop.permute.xlu0 %3228
  %v3232 = vunpack.c.l.s4 839922192
  %v3233 = vunpack.c.0.s8 %v3232
  %v3234 = vperm.slane %v3229, %v3233
  %3236 = vset.pattern.permute.xlu0 0
  %3237 = vperm.xlu0 %3236, %v3201
  %v3238 = vpop.permute.xlu0 %3237
  %v3241 = vunpack.c.l.s4 839922192
  %v3242 = vunpack.c.0.s8 %v3241
  %v3243 = vperm.slane %v3238, %v3242
  %3245 = vset.pattern.permute.xlu0 0
  %3246 = vperm.xlu0 %3245, %v3202
  %v3247 = vpop.permute.xlu0 %3246
  %v3250 = vunpack.c.l.s4 839922192
  %v3251 = vunpack.c.0.s8 %v3250
  %v3252 = vperm.slane %v3247, %v3251
  %3254 = vset.pattern.permute.xlu0 0
  %3255 = vperm.xlu0 %3254, %v3203
  %v3256 = vpop.permute.xlu0 %3255
  %v3259 = vunpack.c.l.s4 839922192
  %v3260 = vunpack.c.0.s8 %v3259
  %v3261 = vperm.slane %v3256, %v3260
  %3263 = vset.pattern.permute.xlu0 0
  %3264 = vperm.xlu0 %3263, %v3204
  %v3265 = vpop.permute.xlu0 %3264
  %v3268 = vunpack.c.l.s4 839922192
  %v3269 = vunpack.c.0.s8 %v3268
  %v3270 = vperm.slane %v3265, %v3269
  %3272 = vset.pattern.permute.xlu0 0
  %3273 = vperm.xlu0 %3272, %v3205
  %v3274 = vpop.permute.xlu0 %3273
  %v3277 = vunpack.c.l.s4 839922192
  %v3278 = vunpack.c.0.s8 %v3277
  %v3279 = vperm.slane %v3274, %v3278
  %3281 = vset.pattern.permute.xlu0 0
  %3282 = vperm.xlu0 %3281, %v3206
  %v3283 = vpop.permute.xlu0 %3282
  %v3286 = vunpack.c.l.s4 839922192
  %v3287 = vunpack.c.0.s8 %v3286
  %v3288 = vperm.slane %v3283, %v3287
  %3290 = vset.pattern.permute.xlu0 0
  %3291 = vperm.xlu0 %3290, %v3207
  %v3292 = vpop.permute.xlu0 %3291
  %v3295 = vunpack.c.l.s4 839922192
  %v3296 = vunpack.c.0.s8 %v3295
  %v3297 = vperm.slane %v3292, %v3296
  %3299 = vset.pattern.permute.xlu0 0
  %3300 = vperm.xlu0 %3299, %v3208
  %v3301 = vpop.permute.xlu0 %3300
  %v3304 = vunpack.c.l.s4 839922192
  %v3305 = vunpack.c.0.s8 %v3304
  %v3306 = vperm.slane %v3301, %v3305
  %3308 = vset.pattern.permute.xlu0 0
  %3309 = vperm.xlu0 %3308, %v3209
  %v3310 = vpop.permute.xlu0 %3309
  %v3313 = vunpack.c.l.s4 839922192
  %v3314 = vunpack.c.0.s8 %v3313
  %v3315 = vperm.slane %v3310, %v3314
  %3317 = vset.pattern.permute.xlu0 0
  %3318 = vperm.xlu0 %3317, %v3210
  %v3319 = vpop.permute.xlu0 %3318
  %v3322 = vunpack.c.l.s4 839922192
  %v3323 = vunpack.c.0.s8 %v3322
  %v3324 = vperm.slane %v3319, %v3323
  %3326 = vset.pattern.permute.xlu0 0
  %3327 = vperm.xlu0 %3326, %v3211
  %v3328 = vpop.permute.xlu0 %3327
  %v3331 = vunpack.c.l.s4 839922192
  %v3332 = vunpack.c.0.s8 %v3331
  %v3333 = vperm.slane %v3328, %v3332
  %3335 = vset.pattern.permute.xlu0 0
  %3336 = vperm.xlu0 %3335, %v3212
  %v3337 = vpop.permute.xlu0 %3336
  %v3340 = vunpack.c.l.s4 839922192
  %v3341 = vunpack.c.0.s8 %v3340
  %v3342 = vperm.slane %v3337, %v3341
  %3344 = vset.pattern.permute.xlu0 0
  %3345 = vperm.xlu0 %3344, %v3213
  %v3346 = vpop.permute.xlu0 %3345
  %v3349 = vunpack.c.l.s4 839922192
  %v3350 = vunpack.c.0.s8 %v3349
  %v3351 = vperm.slane %v3346, %v3350
  %3353 = vset.pattern.permute.xlu0 0
  %3354 = vperm.xlu0 %3353, %v3214
  %v3355 = vpop.permute.xlu0 %3354
  %v3358 = vunpack.c.l.s4 839922192
  %v3359 = vunpack.c.0.s8 %v3358
  %v3360 = vperm.slane %v3355, %v3359
  %v3361 = vunpack.c.l.bf16 %v3215
  %v3362 = vunpack.c.l.bf16 %v3216
  %v3363 = vunpack.c.l.bf16 %v3225
  %v3364 = vunpack.c.l.bf16 %v3234
  %v3365 = vunpack.c.l.bf16 %v3243
  %v3366 = vunpack.c.l.bf16 %v3252
  %v3367 = vunpack.c.l.bf16 %v3261
  %v3368 = vunpack.c.l.bf16 %v3270
  %v3369 = vunpack.c.l.bf16 %v3279
  %v3370 = vunpack.c.l.bf16 %v3288
  %v3371 = vunpack.c.l.bf16 %v3297
  %v3372 = vunpack.c.l.bf16 %v3306
  %v3373 = vunpack.c.l.bf16 %v3315
  %v3374 = vunpack.c.l.bf16 %v3324
  %v3375 = vunpack.c.l.bf16 %v3333
  %v3376 = vunpack.c.l.bf16 %v3342
  %v3377 = vunpack.c.l.bf16 %v3351
  %v3378 = vunpack.c.l.bf16 %v3360
  %v3395 = vrot.slane %v3363, 1
  %v3396 = vrot.slane %v3364, 1
  %v3397 = vsel %vm674, %v3395, %v3396
  %v3398 = vrot.slane %v3365, 1
  %v3399 = vsel %vm674, %v3396, %v3398
  %v3400 = vrot.slane %v3366, 1
  %v3401 = vsel %vm674, %v3398, %v3400
  %v3402 = vrot.slane %v3367, 1
  %v3403 = vsel %vm674, %v3400, %v3402
  %v3404 = vrot.slane %v3368, 1
  %v3405 = vsel %vm674, %v3402, %v3404
  %v3406 = vrot.slane %v3369, 1
  %v3407 = vsel %vm674, %v3404, %v3406
  %v3408 = vrot.slane %v3370, 1
  %v3409 = vsel %vm674, %v3406, %v3408
  %v3410 = vrot.slane %v3371, 1
  %v3411 = vsel %vm674, %v3408, %v3410
  %v3412 = vrot.slane %v3372, 1
  %v3413 = vsel %vm674, %v3410, %v3412
  %v3414 = vrot.slane %v3373, 1
  %v3415 = vsel %vm674, %v3412, %v3414
  %v3416 = vrot.slane %v3374, 1
  %v3417 = vsel %vm674, %v3414, %v3416
  %v3418 = vrot.slane %v3375, 1
  %v3419 = vsel %vm674, %v3416, %v3418
  %v3420 = vrot.slane %v3376, 1
  %v3421 = vsel %vm674, %v3418, %v3420
  %v3422 = vrot.slane %v3377, 1
  %v3423 = vsel %vm674, %v3420, %v3422
  %v3424 = vrot.slane %v3378, 1
  %v3425 = vsel %vm674, %v3422, %v3424
  %v3443 = vmul.f32 %v3361, %v3395
  %v3444 = vmul.f32 %v2854, %v3397
  %v3445 = vmul.f32 %v2855, %v3399
  %v3446 = vmul.f32 %v2856, %v3401
  %v3447 = vmul.f32 %v2857, %v3403
  %v3448 = vmul.f32 %v2858, %v3405
  %v3449 = vmul.f32 %v2859, %v3407
  %v3450 = vmul.f32 %v2860, %v3409
  %v3451 = vmul.f32 %v2861, %v3411
  %v3452 = vmul.f32 %v2862, %v3413
  %v3453 = vmul.f32 %v2863, %v3415
  %v3454 = vmul.f32 %v2864, %v3417
  %v3455 = vmul.f32 %v2865, %v3419
  %v3456 = vmul.f32 %v2866, %v3421
  %v3457 = vmul.f32 %v2867, %v3423
  %v3458 = vmul.f32 %v2868, %v3425
  %v3459 = vmul.f32 %v3362, %v3424
  %v3460 = vpack.c.bf16 %v3444, %v3443
  %v3461 = vpack.c.bf16 %v3446, %v3445
  %v3462 = vpack.c.bf16 %v3448, %v3447
  %v3463 = vpack.c.bf16 %v3450, %v3449
  %v3464 = vpack.c.bf16 %v3452, %v3451
  %v3465 = vpack.c.bf16 %v3454, %v3453
  %v3466 = vpack.c.bf16 %v3456, %v3455
  %v3467 = vpack.c.bf16 %v3458, %v3457
  %v3468 = vpack.c.bf16 %v3459, %v3459
  %s3469 = scalar_lea.vmem %s4, 384
  %v3470 = vld [vmem:[%s3469] sm:$0xf]
  %v3471 = vld [vmem:[%s3469 + $0x4] sm:$0xf]
  %v3472 = vld [vmem:[%s3469 + $0x8] sm:$0xf]
  %v3473 = vld [vmem:[%s3469 + $0xc] sm:$0xf]
  %v3474 = vld [vmem:[%s3469 + $0x10] sm:$0xf]
  %v3475 = vld [vmem:[%s3469 + $0x14] sm:$0xf]
  %v3476 = vld [vmem:[%s3469 + $0x18] sm:$0xf]
  %v3477 = vld [vmem:[%s3469 + $0x1c] sm:$0xf]
  %v3478 = vld [vmem:[%s3469 + $0x20] sm:$0xf]
  %v3479 = vld [vmem:[%s3469 + $0x24] sm:$0xf]
  %v3480 = vld [vmem:[%s3469 + $0x28] sm:$0xf]
  %v3481 = vld [vmem:[%s3469 + $0x2c] sm:$0xf]
  %v3482 = vld [vmem:[%s3469 + $0x30] sm:$0xf]
  %v3483 = vld [vmem:[%s3469 + $0x34] sm:$0xf]
  %v3484 = vld [vmem:[%s3469 + $0x38] sm:$0xf]
  %v3485 = vld [vmem:[%s3469 + $0x3c] sm:$0xf]
  %v3487 = vshrl.u32 %v3460, 16
  %v3489 = vrot.slane %v3487, 3
  %v3490 = vshll.u32 %v3460, 16
  %v3492 = vrot.slane %v3490, 4
  %v3493 = vor.u32 %v3489, %v3492
  %v3495 = vshrl.u32 %v3461, 16
  %v3497 = vrot.slane %v3495, 3
  %v3498 = vshll.u32 %v3461, 16
  %v3500 = vrot.slane %v3498, 4
  %v3501 = vor.u32 %v3497, %v3500
  %v3502 = vsel %vm1096, %v3493, %v3501
  %v3504 = vshrl.u32 %v3462, 16
  %v3506 = vrot.slane %v3504, 3
  %v3507 = vshll.u32 %v3462, 16
  %v3509 = vrot.slane %v3507, 4
  %v3510 = vor.u32 %v3506, %v3509
  %v3511 = vsel %vm1096, %v3501, %v3510
  %v3513 = vshrl.u32 %v3463, 16
  %v3515 = vrot.slane %v3513, 3
  %v3516 = vshll.u32 %v3463, 16
  %v3518 = vrot.slane %v3516, 4
  %v3519 = vor.u32 %v3515, %v3518
  %v3520 = vsel %vm1096, %v3510, %v3519
  %v3522 = vshrl.u32 %v3464, 16
  %v3524 = vrot.slane %v3522, 3
  %v3525 = vshll.u32 %v3464, 16
  %v3527 = vrot.slane %v3525, 4
  %v3528 = vor.u32 %v3524, %v3527
  %v3529 = vsel %vm1096, %v3519, %v3528
  %v3531 = vshrl.u32 %v3465, 16
  %v3533 = vrot.slane %v3531, 3
  %v3534 = vshll.u32 %v3465, 16
  %v3536 = vrot.slane %v3534, 4
  %v3537 = vor.u32 %v3533, %v3536
  %v3538 = vsel %vm1096, %v3528, %v3537
  %v3540 = vshrl.u32 %v3466, 16
  %v3542 = vrot.slane %v3540, 3
  %v3543 = vshll.u32 %v3466, 16
  %v3545 = vrot.slane %v3543, 4
  %v3546 = vor.u32 %v3542, %v3545
  %v3547 = vsel %vm1096, %v3537, %v3546
  %v3549 = vshrl.u32 %v3467, 16
  %v3551 = vrot.slane %v3549, 3
  %v3552 = vshll.u32 %v3467, 16
  %v3554 = vrot.slane %v3552, 4
  %v3555 = vor.u32 %v3551, %v3554
  %v3556 = vsel %vm1096, %v3546, %v3555
  %v3558 = vshrl.u32 %v3468, 16
  %v3560 = vrot.slane %v3558, 3
  %v3561 = vshll.u32 %v3468, 16
  %v3563 = vrot.slane %v3561, 4
  %v3564 = vor.u32 %v3560, %v3563
  %v3565 = vsel %vm1096, %v3555, %v3564
  %v3590 = vunpack.c.l.b16 %v3470
  %v3591 = vunpack.c.l.b16 %v3471
  %v3592 = vunpack.c.l.b16 %v3472
  %v3593 = vunpack.c.l.b16 %v3473
  %v3594 = vunpack.c.l.b16 %v3474
  %v3595 = vunpack.c.l.b16 %v3475
  %v3596 = vunpack.c.l.b16 %v3476
  %v3597 = vunpack.c.l.b16 %v3477
  %v3598 = vunpack.c.l.b16 %v3478
  %v3599 = vunpack.c.l.b16 %v3479
  %v3600 = vunpack.c.l.b16 %v3480
  %v3601 = vunpack.c.l.b16 %v3481
  %v3602 = vunpack.c.l.b16 %v3482
  %v3603 = vunpack.c.l.b16 %v3483
  %v3604 = vunpack.c.l.b16 %v3484
  %v3605 = vunpack.c.l.b16 %v3485
  %v3606 = vpack.c.b16 %v3591, %v3590
  %v3607 = vpack.c.b16 %v3593, %v3592
  %v3608 = vpack.c.b16 %v3595, %v3594
  %v3609 = vpack.c.b16 %v3597, %v3596
  %v3610 = vpack.c.b16 %v3599, %v3598
  %v3611 = vpack.c.b16 %v3601, %v3600
  %v3612 = vpack.c.b16 %v3603, %v3602
  %v3613 = vpack.c.b16 %v3605, %v3604
  %3622 = vmatpush.bf16.msra.mxu0 %v3613
  %3623 = vmatpush.bf16.msra.mxu0 %v3612
  %3624 = vmatpush.bf16.msra.mxu0 %v3611
  %3625 = vmatpush.bf16.msra.mxu0 %v3610
  %3626 = vmatpush.bf16.msra.mxu0 %v3609
  %3627 = vmatpush.bf16.msra.mxu0 %v3608
  %3628 = vmatpush.bf16.msra.mxu0 %v3607
  %3629 = vmatpush.bf16.msra.mxu0 %v3606
  %3630 = vmatmul.bf16.gmra.mxu0 %v3502
  %v3631 = vpop.f32.mrf.mxu0
  %v3632 = vadd.f32 0.0, %v3631
  %v3633 = vpop.f32.mrf.mxu0
  %v3634 = vadd.f32 0.0, %v3633
  %3635 = vmatmul.bf16.gmra.mxu0 %v3511
  %v3636 = vpop.f32.mrf.mxu0
  %v3637 = vadd.f32 0.0, %v3636
  %v3638 = vpop.f32.mrf.mxu0
  %v3639 = vadd.f32 0.0, %v3638
  %3640 = vmatmul.bf16.gmra.mxu0 %v3520
  %v3641 = vpop.f32.mrf.mxu0
  %v3642 = vadd.f32 0.0, %v3641
  %v3643 = vpop.f32.mrf.mxu0
  %v3644 = vadd.f32 0.0, %v3643
  %3645 = vmatmul.bf16.gmra.mxu0 %v3529
  %v3646 = vpop.f32.mrf.mxu0
  %v3647 = vadd.f32 0.0, %v3646
  %v3648 = vpop.f32.mrf.mxu0
  %v3649 = vadd.f32 0.0, %v3648
  %3650 = vmatmul.bf16.gmra.mxu0 %v3538
  %v3651 = vpop.f32.mrf.mxu0
  %v3652 = vadd.f32 0.0, %v3651
  %v3653 = vpop.f32.mrf.mxu0
  %v3654 = vadd.f32 0.0, %v3653
  %3655 = vmatmul.bf16.gmra.mxu0 %v3547
  %v3656 = vpop.f32.mrf.mxu0
  %v3657 = vadd.f32 0.0, %v3656
  %v3658 = vpop.f32.mrf.mxu0
  %v3659 = vadd.f32 0.0, %v3658
  %3660 = vmatmul.bf16.gmra.mxu0 %v3556
  %v3661 = vpop.f32.mrf.mxu0
  %v3662 = vadd.f32 0.0, %v3661
  %v3663 = vpop.f32.mrf.mxu0
  %v3664 = vadd.f32 0.0, %v3663
  %3665 = vmatmul.bf16.gmra.mxu0 %v3565
  %v3666 = vpop.f32.mrf.mxu0
  %v3667 = vadd.f32 0.0, %v3666
  %v3668 = vpop.f32.mrf.mxu0
  %v3669 = vadd.f32 0.0, %v3668
  %3670 = vdwg.mxu0
  %v3671 = vadd.f32 %v3166, %v3632
  %v3672 = vadd.f32 %v3167, %v3634
  %v3673 = vadd.f32 %v3168, %v3637
  %v3674 = vadd.f32 %v3169, %v3639
  %v3675 = vadd.f32 %v3170, %v3642
  %v3676 = vadd.f32 %v3171, %v3644
  %v3677 = vadd.f32 %v3172, %v3647
  %v3678 = vadd.f32 %v3173, %v3649
  %v3679 = vadd.f32 %v3174, %v3652
  %v3680 = vadd.f32 %v3175, %v3654
  %v3681 = vadd.f32 %v3176, %v3657
  %v3682 = vadd.f32 %v3177, %v3659
  %v3683 = vadd.f32 %v3178, %v3662
  %v3684 = vadd.f32 %v3179, %v3664
  %v3685 = vadd.f32 %v3180, %v3667
  %v3686 = vadd.f32 %v3181, %v3669
  %s3687 = scalar_lea.vmem %s11, 896
  %v3688 = vld [vmem:[%s3687] sm:$0xff]
  %v3689 = vld [vmem:[%s3687 + $0x8] sm:$0xff]
  %v3690 = vld [vmem:[%s3687 + $0x10] sm:$0xff]
  %v3691 = vld [vmem:[%s3687 + $0x18] sm:$0xff]
  %v3692 = vld [vmem:[%s3687 + $0x20] sm:$0xff]
  %v3693 = vld [vmem:[%s3687 + $0x28] sm:$0xff]
  %v3694 = vld [vmem:[%s3687 + $0x30] sm:$0xff]
  %v3695 = vld [vmem:[%s3687 + $0x38] sm:$0xff]
  %v3696 = vld [vmem:[%s3687 + $0x40] sm:$0xff]
  %v3697 = vld [vmem:[%s3687 + $0x48] sm:$0xff]
  %v3698 = vld [vmem:[%s3687 + $0x50] sm:$0xff]
  %v3699 = vld [vmem:[%s3687 + $0x58] sm:$0xff]
  %v3700 = vld [vmem:[%s3687 + $0x60] sm:$0xff]
  %v3701 = vld [vmem:[%s3687 + $0x68] sm:$0xff]
  %v3702 = vld [vmem:[%s3687 + $0x70] sm:$0xff]
  %v3703 = vld [vmem:[%s3687 + $0x78] sm:$0xff]
  %v3704 = vpack.c.bf16 %v3688, %v3688
  %v3705 = vpack.c.bf16 %v3689, %v3689
  %v3706 = vpack.c.bf16 %v3690, %v3690
  %v3707 = vpack.c.bf16 %v3691, %v3691
  %v3708 = vpack.c.bf16 %v3692, %v3692
  %v3709 = vpack.c.bf16 %v3693, %v3693
  %v3710 = vpack.c.bf16 %v3694, %v3694
  %v3711 = vpack.c.bf16 %v3695, %v3695
  %v3712 = vpack.c.bf16 %v3696, %v3696
  %v3713 = vpack.c.bf16 %v3697, %v3697
  %v3714 = vpack.c.bf16 %v3698, %v3698
  %v3715 = vpack.c.bf16 %v3699, %v3699
  %v3716 = vpack.c.bf16 %v3700, %v3700
  %v3717 = vpack.c.bf16 %v3701, %v3701
  %v3718 = vpack.c.bf16 %v3702, %v3702
  %v3719 = vpack.c.bf16 %v3703, %v3703
  %3721 = vset.pattern.permute.xlu0 0
  %3722 = vperm.xlu0 %3721, %v3704
  %v3723 = vpop.permute.xlu0 %3722
  %v3726 = vunpack.c.l.s4 839922192
  %v3727 = vunpack.c.0.s8 %v3726
  %v3728 = vperm.slane %v3723, %v3727
  %3730 = vset.pattern.permute.xlu0 0
  %3731 = vperm.xlu0 %3730, %v3705
  %v3732 = vpop.permute.xlu0 %3731
  %v3735 = vunpack.c.l.s4 839922192
  %v3736 = vunpack.c.0.s8 %v3735
  %v3737 = vperm.slane %v3732, %v3736
  %3739 = vset.pattern.permute.xlu0 0
  %3740 = vperm.xlu0 %3739, %v3706
  %v3741 = vpop.permute.xlu0 %3740
  %v3744 = vunpack.c.l.s4 839922192
  %v3745 = vunpack.c.0.s8 %v3744
  %v3746 = vperm.slane %v3741, %v3745
  %3748 = vset.pattern.permute.xlu0 0
  %3749 = vperm.xlu0 %3748, %v3707
  %v3750 = vpop.permute.xlu0 %3749
  %v3753 = vunpack.c.l.s4 839922192
  %v3754 = vunpack.c.0.s8 %v3753
  %v3755 = vperm.slane %v3750, %v3754
  %3757 = vset.pattern.permute.xlu0 0
  %3758 = vperm.xlu0 %3757, %v3708
  %v3759 = vpop.permute.xlu0 %3758
  %v3762 = vunpack.c.l.s4 839922192
  %v3763 = vunpack.c.0.s8 %v3762
  %v3764 = vperm.slane %v3759, %v3763
  %3766 = vset.pattern.permute.xlu0 0
  %3767 = vperm.xlu0 %3766, %v3709
  %v3768 = vpop.permute.xlu0 %3767
  %v3771 = vunpack.c.l.s4 839922192
  %v3772 = vunpack.c.0.s8 %v3771
  %v3773 = vperm.slane %v3768, %v3772
  %3775 = vset.pattern.permute.xlu0 0
  %3776 = vperm.xlu0 %3775, %v3710
  %v3777 = vpop.permute.xlu0 %3776
  %v3780 = vunpack.c.l.s4 839922192
  %v3781 = vunpack.c.0.s8 %v3780
  %v3782 = vperm.slane %v3777, %v3781
  %3784 = vset.pattern.permute.xlu0 0
  %3785 = vperm.xlu0 %3784, %v3711
  %v3786 = vpop.permute.xlu0 %3785
  %v3789 = vunpack.c.l.s4 839922192
  %v3790 = vunpack.c.0.s8 %v3789
  %v3791 = vperm.slane %v3786, %v3790
  %3793 = vset.pattern.permute.xlu0 0
  %3794 = vperm.xlu0 %3793, %v3712
  %v3795 = vpop.permute.xlu0 %3794
  %v3798 = vunpack.c.l.s4 839922192
  %v3799 = vunpack.c.0.s8 %v3798
  %v3800 = vperm.slane %v3795, %v3799
  %3802 = vset.pattern.permute.xlu0 0
  %3803 = vperm.xlu0 %3802, %v3713
  %v3804 = vpop.permute.xlu0 %3803
  %v3807 = vunpack.c.l.s4 839922192
  %v3808 = vunpack.c.0.s8 %v3807
  %v3809 = vperm.slane %v3804, %v3808
  %3811 = vset.pattern.permute.xlu0 0
  %3812 = vperm.xlu0 %3811, %v3714
  %v3813 = vpop.permute.xlu0 %3812
  %v3816 = vunpack.c.l.s4 839922192
  %v3817 = vunpack.c.0.s8 %v3816
  %v3818 = vperm.slane %v3813, %v3817
  %3820 = vset.pattern.permute.xlu0 0
  %3821 = vperm.xlu0 %3820, %v3715
  %v3822 = vpop.permute.xlu0 %3821
  %v3825 = vunpack.c.l.s4 839922192
  %v3826 = vunpack.c.0.s8 %v3825
  %v3827 = vperm.slane %v3822, %v3826
  %3829 = vset.pattern.permute.xlu0 0
  %3830 = vperm.xlu0 %3829, %v3716
  %v3831 = vpop.permute.xlu0 %3830
  %v3834 = vunpack.c.l.s4 839922192
  %v3835 = vunpack.c.0.s8 %v3834
  %v3836 = vperm.slane %v3831, %v3835
  %3838 = vset.pattern.permute.xlu0 0
  %3839 = vperm.xlu0 %3838, %v3717
  %v3840 = vpop.permute.xlu0 %3839
  %v3843 = vunpack.c.l.s4 839922192
  %v3844 = vunpack.c.0.s8 %v3843
  %v3845 = vperm.slane %v3840, %v3844
  %3847 = vset.pattern.permute.xlu0 0
  %3848 = vperm.xlu0 %3847, %v3718
  %v3849 = vpop.permute.xlu0 %3848
  %v3852 = vunpack.c.l.s4 839922192
  %v3853 = vunpack.c.0.s8 %v3852
  %v3854 = vperm.slane %v3849, %v3853
  %3856 = vset.pattern.permute.xlu0 0
  %3857 = vperm.xlu0 %3856, %v3719
  %v3858 = vpop.permute.xlu0 %3857
  %v3861 = vunpack.c.l.s4 839922192
  %v3862 = vunpack.c.0.s8 %v3861
  %v3863 = vperm.slane %v3858, %v3862
  %v3864 = vunpack.c.l.bf16 %v3728
  %v3865 = vunpack.c.l.bf16 %v3737
  %v3866 = vunpack.c.l.bf16 %v3746
  %v3867 = vunpack.c.l.bf16 %v3755
  %v3868 = vunpack.c.l.bf16 %v3764
  %v3869 = vunpack.c.l.bf16 %v3773
  %v3870 = vunpack.c.l.bf16 %v3782
  %v3871 = vunpack.c.l.bf16 %v3791
  %v3872 = vunpack.c.l.bf16 %v3800
  %v3873 = vunpack.c.l.bf16 %v3809
  %v3874 = vunpack.c.l.bf16 %v3818
  %v3875 = vunpack.c.l.bf16 %v3827
  %v3876 = vunpack.c.l.bf16 %v3836
  %v3877 = vunpack.c.l.bf16 %v3845
  %v3878 = vunpack.c.l.bf16 %v3854
  %v3879 = vunpack.c.l.bf16 %v3863
  %v3880 = vmul.f32 %v2854, %v3864
  %v3881 = vmul.f32 %v2855, %v3865
  %v3882 = vmul.f32 %v2856, %v3866
  %v3883 = vmul.f32 %v2857, %v3867
  %v3884 = vmul.f32 %v2858, %v3868
  %v3885 = vmul.f32 %v2859, %v3869
  %v3886 = vmul.f32 %v2860, %v3870
  %v3887 = vmul.f32 %v2861, %v3871
  %v3888 = vmul.f32 %v2862, %v3872
  %v3889 = vmul.f32 %v2863, %v3873
  %v3890 = vmul.f32 %v2864, %v3874
  %v3891 = vmul.f32 %v2865, %v3875
  %v3892 = vmul.f32 %v2866, %v3876
  %v3893 = vmul.f32 %v2867, %v3877
  %v3894 = vmul.f32 %v2868, %v3878
  %v3895 = vmul.f32 %v3362, %v3879
  %v3896 = vpack.c.bf16 %v3881, %v3880
  %v3897 = vpack.c.bf16 %v3883, %v3882
  %v3898 = vpack.c.bf16 %v3885, %v3884
  %v3899 = vpack.c.bf16 %v3887, %v3886
  %v3900 = vpack.c.bf16 %v3889, %v3888
  %v3901 = vpack.c.bf16 %v3891, %v3890
  %v3902 = vpack.c.bf16 %v3893, %v3892
  %v3903 = vpack.c.bf16 %v3895, %v3894
  %s3904 = scalar_lea.vmem %s4, 448
  %v3905 = vld [vmem:[%s3904] sm:$0xf]
  %v3906 = vld [vmem:[%s3904 + $0x4] sm:$0xf]
  %v3907 = vld [vmem:[%s3904 + $0x8] sm:$0xf]
  %v3908 = vld [vmem:[%s3904 + $0xc] sm:$0xf]
  %v3909 = vld [vmem:[%s3904 + $0x10] sm:$0xf]
  %v3910 = vld [vmem:[%s3904 + $0x14] sm:$0xf]
  %v3911 = vld [vmem:[%s3904 + $0x18] sm:$0xf]
  %v3912 = vld [vmem:[%s3904 + $0x1c] sm:$0xf]
  %v3913 = vld [vmem:[%s3904 + $0x20] sm:$0xf]
  %v3914 = vld [vmem:[%s3904 + $0x24] sm:$0xf]
  %v3915 = vld [vmem:[%s3904 + $0x28] sm:$0xf]
  %v3916 = vld [vmem:[%s3904 + $0x2c] sm:$0xf]
  %v3917 = vld [vmem:[%s3904 + $0x30] sm:$0xf]
  %v3918 = vld [vmem:[%s3904 + $0x34] sm:$0xf]
  %v3919 = vld [vmem:[%s3904 + $0x38] sm:$0xf]
  %v3920 = vld [vmem:[%s3904 + $0x3c] sm:$0xf]
  %v3937 = vunpack.c.l.b16 %v3905
  %v3938 = vunpack.c.l.b16 %v3906
  %v3939 = vunpack.c.l.b16 %v3907
  %v3940 = vunpack.c.l.b16 %v3908
  %v3941 = vunpack.c.l.b16 %v3909
  %v3942 = vunpack.c.l.b16 %v3910
  %v3943 = vunpack.c.l.b16 %v3911
  %v3944 = vunpack.c.l.b16 %v3912
  %v3945 = vunpack.c.l.b16 %v3913
  %v3946 = vunpack.c.l.b16 %v3914
  %v3947 = vunpack.c.l.b16 %v3915
  %v3948 = vunpack.c.l.b16 %v3916
  %v3949 = vunpack.c.l.b16 %v3917
  %v3950 = vunpack.c.l.b16 %v3918
  %v3951 = vunpack.c.l.b16 %v3919
  %v3952 = vunpack.c.l.b16 %v3920
  %v3953 = vpack.c.b16 %v3938, %v3937
  %v3954 = vpack.c.b16 %v3940, %v3939
  %v3955 = vpack.c.b16 %v3942, %v3941
  %v3956 = vpack.c.b16 %v3944, %v3943
  %v3957 = vpack.c.b16 %v3946, %v3945
  %v3958 = vpack.c.b16 %v3948, %v3947
  %v3959 = vpack.c.b16 %v3950, %v3949
  %v3960 = vpack.c.b16 %v3952, %v3951
  %3969 = vmatpush.bf16.msra.mxu0 %v3960
  %3970 = vmatpush.bf16.msra.mxu0 %v3959
  %3971 = vmatpush.bf16.msra.mxu0 %v3958
  %3972 = vmatpush.bf16.msra.mxu0 %v3957
  %3973 = vmatpush.bf16.msra.mxu0 %v3956
  %3974 = vmatpush.bf16.msra.mxu0 %v3955
  %3975 = vmatpush.bf16.msra.mxu0 %v3954
  %3976 = vmatpush.bf16.msra.mxu0 %v3953
  %3977 = vmatmul.bf16.gmra.mxu0 %v3896
  %v3978 = vpop.f32.mrf.mxu0
  %v3979 = vadd.f32 0.0, %v3978
  %v3980 = vpop.f32.mrf.mxu0
  %v3981 = vadd.f32 0.0, %v3980
  %3982 = vmatmul.bf16.gmra.mxu0 %v3897
  %v3983 = vpop.f32.mrf.mxu0
  %v3984 = vadd.f32 0.0, %v3983
  %v3985 = vpop.f32.mrf.mxu0
  %v3986 = vadd.f32 0.0, %v3985
  %3987 = vmatmul.bf16.gmra.mxu0 %v3898
  %v3988 = vpop.f32.mrf.mxu0
  %v3989 = vadd.f32 0.0, %v3988
  %v3990 = vpop.f32.mrf.mxu0
  %v3991 = vadd.f32 0.0, %v3990
  %3992 = vmatmul.bf16.gmra.mxu0 %v3899
  %v3993 = vpop.f32.mrf.mxu0
  %v3994 = vadd.f32 0.0, %v3993
  %v3995 = vpop.f32.mrf.mxu0
  %v3996 = vadd.f32 0.0, %v3995
  %3997 = vmatmul.bf16.gmra.mxu0 %v3900
  %v3998 = vpop.f32.mrf.mxu0
  %v3999 = vadd.f32 0.0, %v3998
  %v4000 = vpop.f32.mrf.mxu0
  %v4001 = vadd.f32 0.0, %v4000
  %4002 = vmatmul.bf16.gmra.mxu0 %v3901
  %v4003 = vpop.f32.mrf.mxu0
  %v4004 = vadd.f32 0.0, %v4003
  %v4005 = vpop.f32.mrf.mxu0
  %v4006 = vadd.f32 0.0, %v4005
  %4007 = vmatmul.bf16.gmra.mxu0 %v3902
  %v4008 = vpop.f32.mrf.mxu0
  %v4009 = vadd.f32 0.0, %v4008
  %v4010 = vpop.f32.mrf.mxu0
  %v4011 = vadd.f32 0.0, %v4010
  %4012 = vmatmul.bf16.gmra.mxu0 %v3903
  %v4013 = vpop.f32.mrf.mxu0
  %v4014 = vadd.f32 0.0, %v4013
  %v4015 = vpop.f32.mrf.mxu0
  %v4016 = vadd.f32 0.0, %v4015
  %4017 = vdwg.mxu0
  %v4018 = vadd.f32 %v3671, %v3979
  %v4019 = vadd.f32 %v3672, %v3981
  %v4020 = vadd.f32 %v3673, %v3984
  %v4021 = vadd.f32 %v3674, %v3986
  %v4022 = vadd.f32 %v3675, %v3989
  %v4023 = vadd.f32 %v3676, %v3991
  %v4024 = vadd.f32 %v3677, %v3994
  %v4025 = vadd.f32 %v3678, %v3996
  %v4026 = vadd.f32 %v3679, %v3999
  %v4027 = vadd.f32 %v3680, %v4001
  %v4028 = vadd.f32 %v3681, %v4004
  %v4029 = vadd.f32 %v3682, %v4006
  %v4030 = vadd.f32 %v3683, %v4009
  %v4031 = vadd.f32 %v3684, %v4011
  %v4032 = vadd.f32 %v3685, %v4014
  %v4033 = vadd.f32 %v3686, %v4016
  %s4034 = scalar_lea.vmem %s11, 1024
  %v4035 = vld [vmem:[%s4034] sm:$0xff]
  %v4036 = vld [vmem:[%s4034 + $0x8] sm:$0xff]
  %v4037 = vld [vmem:[%s4034 + $0x10] sm:$0xff]
  %v4038 = vld [vmem:[%s4034 + $0x18] sm:$0xff]
  %v4039 = vld [vmem:[%s4034 + $0x20] sm:$0xff]
  %v4040 = vld [vmem:[%s4034 + $0x28] sm:$0xff]
  %v4041 = vld [vmem:[%s4034 + $0x30] sm:$0xff]
  %v4042 = vld [vmem:[%s4034 + $0x38] sm:$0xff]
  %v4043 = vld [vmem:[%s4034 + $0x40] sm:$0xff]
  %v4044 = vld [vmem:[%s4034 + $0x48] sm:$0xff]
  %v4045 = vld [vmem:[%s4034 + $0x50] sm:$0xff]
  %v4046 = vld [vmem:[%s4034 + $0x58] sm:$0xff]
  %v4047 = vld [vmem:[%s4034 + $0x60] sm:$0xff]
  %v4048 = vld [vmem:[%s4034 + $0x68] sm:$0xff]
  %v4049 = vld [vmem:[%s4034 + $0x70] sm:$0xff]
  %v4050 = vld [vmem:[%s4034 + $0x78] sm:$0xff]
  %v4051 = vpack.c.bf16 %v4035, %v4035
  %v4052 = vpack.c.bf16 %v4036, %v4036
  %v4053 = vpack.c.bf16 %v4037, %v4037
  %v4054 = vpack.c.bf16 %v4038, %v4038
  %v4055 = vpack.c.bf16 %v4039, %v4039
  %v4056 = vpack.c.bf16 %v4040, %v4040
  %v4057 = vpack.c.bf16 %v4041, %v4041
  %v4058 = vpack.c.bf16 %v4042, %v4042
  %v4059 = vpack.c.bf16 %v4043, %v4043
  %v4060 = vpack.c.bf16 %v4044, %v4044
  %v4061 = vpack.c.bf16 %v4045, %v4045
  %v4062 = vpack.c.bf16 %v4046, %v4046
  %v4063 = vpack.c.bf16 %v4047, %v4047
  %v4064 = vpack.c.bf16 %v4048, %v4048
  %v4065 = vpack.c.bf16 %v4049, %v4049
  %v4066 = vpack.c.bf16 %v4050, %v4050
  %v4067 = vld [vmem:[#allocation2 + $0xc] sm:$0xf]
  %v4068 = vld [vmem:[#allocation2 + $0x10] sm:$0xf]
  %v4069 = vld [vmem:[#allocation2 + $0x14] sm:$0xf]
  %v4070 = vld [vmem:[#allocation2 + $0x18] sm:$0xf]
  %v4071 = vld [vmem:[#allocation2 + $0x1c] sm:$0xf]
  %v4072 = vld [vmem:[#allocation2 + $0x20] sm:$0xf]
  %v4073 = vld [vmem:[#allocation2 + $0x24] sm:$0xf]
  %v4074 = vld [vmem:[#allocation2 + $0x28] sm:$0xf]
  %v4075 = vld [vmem:[#allocation2 + $0x2c] sm:$0xf]
  %v4076 = vld [vmem:[#allocation2 + $0x30] sm:$0xf]
  %v4077 = vld [vmem:[#allocation2 + $0x34] sm:$0xf]
  %v4078 = vld [vmem:[#allocation2 + $0x38] sm:$0xf]
  %v4079 = vld [vmem:[#allocation2 + $0x3c] sm:$0xf]
  %v4080 = vld [vmem:[#allocation2 + $0x40] sm:$0xf]
  %v4081 = vld [vmem:[#allocation2 + $0x44] sm:$0xf]
  %v4082 = vld [vmem:[#allocation2 + $0x48] sm:$0xf]
  %v4083 = vld [vmem:[#allocation2 + $0x4c] sm:$0x1]
  %4085 = vset.pattern.permute.xlu0 0
  %4086 = vperm.xlu0 %4085, %v4051
  %v4087 = vpop.permute.xlu0 %4086
  %v4090 = vunpack.c.l.s4 839922192
  %v4091 = vunpack.c.0.s8 %v4090
  %v4092 = vperm.slane %v4087, %v4091
  %4094 = vset.pattern.permute.xlu0 0
  %4095 = vperm.xlu0 %4094, %v4052
  %v4096 = vpop.permute.xlu0 %4095
  %v4099 = vunpack.c.l.s4 839922192
  %v4100 = vunpack.c.0.s8 %v4099
  %v4101 = vperm.slane %v4096, %v4100
  %4103 = vset.pattern.permute.xlu0 0
  %4104 = vperm.xlu0 %4103, %v4053
  %v4105 = vpop.permute.xlu0 %4104
  %v4108 = vunpack.c.l.s4 839922192
  %v4109 = vunpack.c.0.s8 %v4108
  %v4110 = vperm.slane %v4105, %v4109
  %4112 = vset.pattern.permute.xlu0 0
  %4113 = vperm.xlu0 %4112, %v4054
  %v4114 = vpop.permute.xlu0 %4113
  %v4117 = vunpack.c.l.s4 839922192
  %v4118 = vunpack.c.0.s8 %v4117
  %v4119 = vperm.slane %v4114, %v4118
  %4121 = vset.pattern.permute.xlu0 0
  %4122 = vperm.xlu0 %4121, %v4055
  %v4123 = vpop.permute.xlu0 %4122
  %v4126 = vunpack.c.l.s4 839922192
  %v4127 = vunpack.c.0.s8 %v4126
  %v4128 = vperm.slane %v4123, %v4127
  %4130 = vset.pattern.permute.xlu0 0
  %4131 = vperm.xlu0 %4130, %v4056
  %v4132 = vpop.permute.xlu0 %4131
  %v4135 = vunpack.c.l.s4 839922192
  %v4136 = vunpack.c.0.s8 %v4135
  %v4137 = vperm.slane %v4132, %v4136
  %4139 = vset.pattern.permute.xlu0 0
  %4140 = vperm.xlu0 %4139, %v4057
  %v4141 = vpop.permute.xlu0 %4140
  %v4144 = vunpack.c.l.s4 839922192
  %v4145 = vunpack.c.0.s8 %v4144
  %v4146 = vperm.slane %v4141, %v4145
  %4148 = vset.pattern.permute.xlu0 0
  %4149 = vperm.xlu0 %4148, %v4058
  %v4150 = vpop.permute.xlu0 %4149
  %v4153 = vunpack.c.l.s4 839922192
  %v4154 = vunpack.c.0.s8 %v4153
  %v4155 = vperm.slane %v4150, %v4154
  %4157 = vset.pattern.permute.xlu0 0
  %4158 = vperm.xlu0 %4157, %v4059
  %v4159 = vpop.permute.xlu0 %4158
  %v4162 = vunpack.c.l.s4 839922192
  %v4163 = vunpack.c.0.s8 %v4162
  %v4164 = vperm.slane %v4159, %v4163
  %4166 = vset.pattern.permute.xlu0 0
  %4167 = vperm.xlu0 %4166, %v4060
  %v4168 = vpop.permute.xlu0 %4167
  %v4171 = vunpack.c.l.s4 839922192
  %v4172 = vunpack.c.0.s8 %v4171
  %v4173 = vperm.slane %v4168, %v4172
  %4175 = vset.pattern.permute.xlu0 0
  %4176 = vperm.xlu0 %4175, %v4061
  %v4177 = vpop.permute.xlu0 %4176
  %v4180 = vunpack.c.l.s4 839922192
  %v4181 = vunpack.c.0.s8 %v4180
  %v4182 = vperm.slane %v4177, %v4181
  %4184 = vset.pattern.permute.xlu0 0
  %4185 = vperm.xlu0 %4184, %v4062
  %v4186 = vpop.permute.xlu0 %4185
  %v4189 = vunpack.c.l.s4 839922192
  %v4190 = vunpack.c.0.s8 %v4189
  %v4191 = vperm.slane %v4186, %v4190
  %4193 = vset.pattern.permute.xlu0 0
  %4194 = vperm.xlu0 %4193, %v4063
  %v4195 = vpop.permute.xlu0 %4194
  %v4198 = vunpack.c.l.s4 839922192
  %v4199 = vunpack.c.0.s8 %v4198
  %v4200 = vperm.slane %v4195, %v4199
  %4202 = vset.pattern.permute.xlu0 0
  %4203 = vperm.xlu0 %4202, %v4064
  %v4204 = vpop.permute.xlu0 %4203
  %v4207 = vunpack.c.l.s4 839922192
  %v4208 = vunpack.c.0.s8 %v4207
  %v4209 = vperm.slane %v4204, %v4208
  %4211 = vset.pattern.permute.xlu0 0
  %4212 = vperm.xlu0 %4211, %v4065
  %v4213 = vpop.permute.xlu0 %4212
  %v4216 = vunpack.c.l.s4 839922192
  %v4217 = vunpack.c.0.s8 %v4216
  %v4218 = vperm.slane %v4213, %v4217
  %4220 = vset.pattern.permute.xlu0 0
  %4221 = vperm.xlu0 %4220, %v4066
  %v4222 = vpop.permute.xlu0 %4221
  %v4225 = vunpack.c.l.s4 839922192
  %v4226 = vunpack.c.0.s8 %v4225
  %v4227 = vperm.slane %v4222, %v4226
  %v4228 = vunpack.c.l.bf16 %v4067
  %v4229 = vunpack.c.l.bf16 %v4068
  %v4230 = vunpack.c.l.bf16 %v4069
  %v4231 = vunpack.c.l.bf16 %v4070
  %v4232 = vunpack.c.l.bf16 %v4071
  %v4233 = vunpack.c.l.bf16 %v4072
  %v4234 = vunpack.c.l.bf16 %v4073
  %v4235 = vunpack.c.l.bf16 %v4074
  %v4236 = vunpack.c.l.bf16 %v4075
  %v4237 = vunpack.c.l.bf16 %v4076
  %v4238 = vunpack.c.l.bf16 %v4077
  %v4239 = vunpack.c.l.bf16 %v4078
  %v4240 = vunpack.c.l.bf16 %v4079
  %v4241 = vunpack.c.l.bf16 %v4080
  %v4242 = vunpack.c.l.bf16 %v4081
  %v4243 = vunpack.c.l.bf16 %v4082
  %v4244 = vunpack.c.l.bf16 %v4083
  %v4245 = vunpack.c.l.bf16 %v4092
  %v4246 = vunpack.c.l.bf16 %v4101
  %v4247 = vunpack.c.l.bf16 %v4110
  %v4248 = vunpack.c.l.bf16 %v4119
  %v4249 = vunpack.c.l.bf16 %v4128
  %v4250 = vunpack.c.l.bf16 %v4137
  %v4251 = vunpack.c.l.bf16 %v4146
  %v4252 = vunpack.c.l.bf16 %v4155
  %v4253 = vunpack.c.l.bf16 %v4164
  %v4254 = vunpack.c.l.bf16 %v4173
  %v4255 = vunpack.c.l.bf16 %v4182
  %v4256 = vunpack.c.l.bf16 %v4191
  %v4257 = vunpack.c.l.bf16 %v4200
  %v4258 = vunpack.c.l.bf16 %v4209
  %v4259 = vunpack.c.l.bf16 %v4218
  %v4260 = vunpack.c.l.bf16 %v4227
  %v4277 = vrot.slane %v4245, 7
  %v4278 = vrot.slane %v4246, 7
  %v4279 = vsel %vm1525, %v4277, %v4278
  %v4280 = vrot.slane %v4247, 7
  %v4281 = vsel %vm1525, %v4278, %v4280
  %v4282 = vrot.slane %v4248, 7
  %v4283 = vsel %vm1525, %v4280, %v4282
  %v4284 = vrot.slane %v4249, 7
  %v4285 = vsel %vm1525, %v4282, %v4284
  %v4286 = vrot.slane %v4250, 7
  %v4287 = vsel %vm1525, %v4284, %v4286
  %v4288 = vrot.slane %v4251, 7
  %v4289 = vsel %vm1525, %v4286, %v4288
  %v4290 = vrot.slane %v4252, 7
  %v4291 = vsel %vm1525, %v4288, %v4290
  %v4292 = vrot.slane %v4253, 7
  %v4293 = vsel %vm1525, %v4290, %v4292
  %v4294 = vrot.slane %v4254, 7
  %v4295 = vsel %vm1525, %v4292, %v4294
  %v4296 = vrot.slane %v4255, 7
  %v4297 = vsel %vm1525, %v4294, %v4296
  %v4298 = vrot.slane %v4256, 7
  %v4299 = vsel %vm1525, %v4296, %v4298
  %v4300 = vrot.slane %v4257, 7
  %v4301 = vsel %vm1525, %v4298, %v4300
  %v4302 = vrot.slane %v4258, 7
  %v4303 = vsel %vm1525, %v4300, %v4302
  %v4304 = vrot.slane %v4259, 7
  %v4305 = vsel %vm1525, %v4302, %v4304
  %v4306 = vrot.slane %v4260, 7
  %v4307 = vsel %vm1525, %v4304, %v4306
  %v4325 = vmul.f32 %v4228, %v4277
  %v4326 = vmul.f32 %v4229, %v4279
  %v4327 = vmul.f32 %v4230, %v4281
  %v4328 = vmul.f32 %v4231, %v4283
  %v4329 = vmul.f32 %v4232, %v4285
  %v4330 = vmul.f32 %v4233, %v4287
  %v4331 = vmul.f32 %v4234, %v4289
  %v4332 = vmul.f32 %v4235, %v4291
  %v4333 = vmul.f32 %v4236, %v4293
  %v4334 = vmul.f32 %v4237, %v4295
  %v4335 = vmul.f32 %v4238, %v4297
  %v4336 = vmul.f32 %v4239, %v4299
  %v4337 = vmul.f32 %v4240, %v4301
  %v4338 = vmul.f32 %v4241, %v4303
  %v4339 = vmul.f32 %v4242, %v4305
  %v4340 = vmul.f32 %v4243, %v4307
  %v4341 = vmul.f32 %v4244, %v4306
  %v4342 = vpack.c.bf16 %v4326, %v4325
  %v4343 = vpack.c.bf16 %v4328, %v4327
  %v4344 = vpack.c.bf16 %v4330, %v4329
  %v4345 = vpack.c.bf16 %v4332, %v4331
  %v4346 = vpack.c.bf16 %v4334, %v4333
  %v4347 = vpack.c.bf16 %v4336, %v4335
  %v4348 = vpack.c.bf16 %v4338, %v4337
  %v4349 = vpack.c.bf16 %v4340, %v4339
  %v4350 = vpack.c.bf16 %v4341, %v4341
  %s4351 = scalar_lea.vmem %s4, 512
  %v4352 = vld [vmem:[%s4351] sm:$0xf]
  %v4353 = vld [vmem:[%s4351 + $0x4] sm:$0xf]
  %v4354 = vld [vmem:[%s4351 + $0x8] sm:$0xf]
  %v4355 = vld [vmem:[%s4351 + $0xc] sm:$0xf]
  %v4356 = vld [vmem:[%s4351 + $0x10] sm:$0xf]
  %v4357 = vld [vmem:[%s4351 + $0x14] sm:$0xf]
  %v4358 = vld [vmem:[%s4351 + $0x18] sm:$0xf]
  %v4359 = vld [vmem:[%s4351 + $0x1c] sm:$0xf]
  %v4360 = vld [vmem:[%s4351 + $0x20] sm:$0xf]
  %v4361 = vld [vmem:[%s4351 + $0x24] sm:$0xf]
  %v4362 = vld [vmem:[%s4351 + $0x28] sm:$0xf]
  %v4363 = vld [vmem:[%s4351 + $0x2c] sm:$0xf]
  %v4364 = vld [vmem:[%s4351 + $0x30] sm:$0xf]
  %v4365 = vld [vmem:[%s4351 + $0x34] sm:$0xf]
  %v4366 = vld [vmem:[%s4351 + $0x38] sm:$0xf]
  %v4367 = vld [vmem:[%s4351 + $0x3c] sm:$0xf]
  %v4369 = vshrl.u32 %v4342, 16
  %v4371 = vshll.u32 %v4342, 16
  %v4373 = vrot.slane %v4371, 1
  %v4374 = vor.u32 %v4369, %v4373
  %v4376 = vshll.u32 %v4343, 16
  %v4378 = vrot.slane %v4376, 1
  %v4379 = vsel %vm1617, %v4374, %v4378
  %v4380 = vshrl.u32 %v4343, 16
  %v4382 = vor.u32 %v4380, %v4378
  %v4384 = vshll.u32 %v4344, 16
  %v4386 = vrot.slane %v4384, 1
  %v4387 = vsel %vm1617, %v4382, %v4386
  %v4388 = vshrl.u32 %v4344, 16
  %v4390 = vor.u32 %v4388, %v4386
  %v4392 = vshll.u32 %v4345, 16
  %v4394 = vrot.slane %v4392, 1
  %v4395 = vsel %vm1617, %v4390, %v4394
  %v4396 = vshrl.u32 %v4345, 16
  %v4398 = vor.u32 %v4396, %v4394
  %v4400 = vshll.u32 %v4346, 16
  %v4402 = vrot.slane %v4400, 1
  %v4403 = vsel %vm1617, %v4398, %v4402
  %v4404 = vshrl.u32 %v4346, 16
  %v4406 = vor.u32 %v4404, %v4402
  %v4408 = vshll.u32 %v4347, 16
  %v4410 = vrot.slane %v4408, 1
  %v4411 = vsel %vm1617, %v4406, %v4410
  %v4412 = vshrl.u32 %v4347, 16
  %v4414 = vor.u32 %v4412, %v4410
  %v4416 = vshll.u32 %v4348, 16
  %v4418 = vrot.slane %v4416, 1
  %v4419 = vsel %vm1617, %v4414, %v4418
  %v4420 = vshrl.u32 %v4348, 16
  %v4422 = vor.u32 %v4420, %v4418
  %v4424 = vshll.u32 %v4349, 16
  %v4426 = vrot.slane %v4424, 1
  %v4427 = vsel %vm1617, %v4422, %v4426
  %v4428 = vshrl.u32 %v4349, 16
  %v4430 = vor.u32 %v4428, %v4426
  %v4432 = vshll.u32 %v4350, 16
  %v4434 = vrot.slane %v4432, 1
  %v4435 = vsel %vm1617, %v4430, %v4434
  %v4460 = vunpack.c.l.b16 %v4352
  %v4461 = vunpack.c.l.b16 %v4353
  %v4462 = vunpack.c.l.b16 %v4354
  %v4463 = vunpack.c.l.b16 %v4355
  %v4464 = vunpack.c.l.b16 %v4356
  %v4465 = vunpack.c.l.b16 %v4357
  %v4466 = vunpack.c.l.b16 %v4358
  %v4467 = vunpack.c.l.b16 %v4359
  %v4468 = vunpack.c.l.b16 %v4360
  %v4469 = vunpack.c.l.b16 %v4361
  %v4470 = vunpack.c.l.b16 %v4362
  %v4471 = vunpack.c.l.b16 %v4363
  %v4472 = vunpack.c.l.b16 %v4364
  %v4473 = vunpack.c.l.b16 %v4365
  %v4474 = vunpack.c.l.b16 %v4366
  %v4475 = vunpack.c.l.b16 %v4367
  %v4476 = vpack.c.b16 %v4461, %v4460
  %v4477 = vpack.c.b16 %v4463, %v4462
  %v4478 = vpack.c.b16 %v4465, %v4464
  %v4479 = vpack.c.b16 %v4467, %v4466
  %v4480 = vpack.c.b16 %v4469, %v4468
  %v4481 = vpack.c.b16 %v4471, %v4470
  %v4482 = vpack.c.b16 %v4473, %v4472
  %v4483 = vpack.c.b16 %v4475, %v4474
  %4492 = vmatpush.bf16.msra.mxu0 %v4483
  %4493 = vmatpush.bf16.msra.mxu0 %v4482
  %4494 = vmatpush.bf16.msra.mxu0 %v4481
  %4495 = vmatpush.bf16.msra.mxu0 %v4480
  %4496 = vmatpush.bf16.msra.mxu0 %v4479
  %4497 = vmatpush.bf16.msra.mxu0 %v4478
  %4498 = vmatpush.bf16.msra.mxu0 %v4477
  %4499 = vmatpush.bf16.msra.mxu0 %v4476
  %4500 = vmatmul.bf16.gmra.mxu0 %v4379
  %v4501 = vpop.f32.mrf.mxu0
  %v4502 = vadd.f32 0.0, %v4501
  %v4503 = vpop.f32.mrf.mxu0
  %v4504 = vadd.f32 0.0, %v4503
  %4505 = vmatmul.bf16.gmra.mxu0 %v4387
  %v4506 = vpop.f32.mrf.mxu0
  %v4507 = vadd.f32 0.0, %v4506
  %v4508 = vpop.f32.mrf.mxu0
  %v4509 = vadd.f32 0.0, %v4508
  %4510 = vmatmul.bf16.gmra.mxu0 %v4395
  %v4511 = vpop.f32.mrf.mxu0
  %v4512 = vadd.f32 0.0, %v4511
  %v4513 = vpop.f32.mrf.mxu0
  %v4514 = vadd.f32 0.0, %v4513
  %4515 = vmatmul.bf16.gmra.mxu0 %v4403
  %v4516 = vpop.f32.mrf.mxu0
  %v4517 = vadd.f32 0.0, %v4516
  %v4518 = vpop.f32.mrf.mxu0
  %v4519 = vadd.f32 0.0, %v4518
  %4520 = vmatmul.bf16.gmra.mxu0 %v4411
  %v4521 = vpop.f32.mrf.mxu0
  %v4522 = vadd.f32 0.0, %v4521
  %v4523 = vpop.f32.mrf.mxu0
  %v4524 = vadd.f32 0.0, %v4523
  %4525 = vmatmul.bf16.gmra.mxu0 %v4419
  %v4526 = vpop.f32.mrf.mxu0
  %v4527 = vadd.f32 0.0, %v4526
  %v4528 = vpop.f32.mrf.mxu0
  %v4529 = vadd.f32 0.0, %v4528
  %4530 = vmatmul.bf16.gmra.mxu0 %v4427
  %v4531 = vpop.f32.mrf.mxu0
  %v4532 = vadd.f32 0.0, %v4531
  %v4533 = vpop.f32.mrf.mxu0
  %v4534 = vadd.f32 0.0, %v4533
  %4535 = vmatmul.bf16.gmra.mxu0 %v4435
  %v4536 = vpop.f32.mrf.mxu0
  %v4537 = vadd.f32 0.0, %v4536
  %v4538 = vpop.f32.mrf.mxu0
  %v4539 = vadd.f32 0.0, %v4538
  %4540 = vdwg.mxu0
  %v4541 = vadd.f32 %v4018, %v4502
  %v4542 = vadd.f32 %v4019, %v4504
  %v4543 = vadd.f32 %v4020, %v4507
  %v4544 = vadd.f32 %v4021, %v4509
  %v4545 = vadd.f32 %v4022, %v4512
  %v4546 = vadd.f32 %v4023, %v4514
  %v4547 = vadd.f32 %v4024, %v4517
  %v4548 = vadd.f32 %v4025, %v4519
  %v4549 = vadd.f32 %v4026, %v4522
  %v4550 = vadd.f32 %v4027, %v4524
  %v4551 = vadd.f32 %v4028, %v4527
  %v4552 = vadd.f32 %v4029, %v4529
  %v4553 = vadd.f32 %v4030, %v4532
  %v4554 = vadd.f32 %v4031, %v4534
  %v4555 = vadd.f32 %v4032, %v4537
  %v4556 = vadd.f32 %v4033, %v4539
  %v4557 = vld [vmem:[%s5] sm:$0x1]
  %v4558 = vld [vmem:[%s6] sm:$0x1]
  %v4559 = vadd.f32 %v4541, %v4542
  %v4560 = vadd.f32 %v4559, %v4543
  %v4561 = vadd.f32 %v4560, %v4544
  %v4562 = vadd.f32 %v4561, %v4545
  %v4563 = vadd.f32 %v4562, %v4546
  %v4564 = vadd.f32 %v4563, %v4547
  %v4565 = vadd.f32 %v4564, %v4548
  %v4566 = vadd.f32 %v4565, %v4549
  %v4567 = vadd.f32 %v4566, %v4550
  %v4568 = vadd.f32 %v4567, %v4551
  %v4569 = vadd.f32 %v4568, %v4552
  %v4570 = vadd.f32 %v4569, %v4553
  %v4571 = vadd.f32 %v4570, %v4554
  %v4572 = vadd.f32 %v4571, %v4555
  %v4573 = vadd.f32 %v4572, %v4556
  %v4574 = vrot.slane %v4573, 4
  %v4575 = vadd.f32 %v4573, %v4574
  %v4576 = vrot.slane %v4575, 2
  %v4577 = vadd.f32 %v4575, %v4576
  %v4578 = vrot.slane %v4577, 1
  %v4579 = vadd.f32 %v4577, %v4578
  %v4580 = vmul.f32 %v4579, 0.0078125
  %v4581 = vmul.f32 %v4541, %v4541
  %v4582 = vmul.f32 %v4542, %v4542
  %v4583 = vmul.f32 %v4543, %v4543
  %v4584 = vmul.f32 %v4544, %v4544
  %v4585 = vmul.f32 %v4545, %v4545
  %v4586 = vmul.f32 %v4546, %v4546
  %v4587 = vmul.f32 %v4547, %v4547
  %v4588 = vmul.f32 %v4548, %v4548
  %v4589 = vmul.f32 %v4549, %v4549
  %v4590 = vmul.f32 %v4550, %v4550
  %v4591 = vmul.f32 %v4551, %v4551
  %v4592 = vmul.f32 %v4552, %v4552
  %v4593 = vmul.f32 %v4553, %v4553
  %v4594 = vmul.f32 %v4554, %v4554
  %v4595 = vmul.f32 %v4555, %v4555
  %v4596 = vmul.f32 %v4556, %v4556
  %v4597 = vadd.f32 %v4581, %v4582
  %v4598 = vadd.f32 %v4597, %v4583
  %v4599 = vadd.f32 %v4598, %v4584
  %v4600 = vadd.f32 %v4599, %v4585
  %v4601 = vadd.f32 %v4600, %v4586
  %v4602 = vadd.f32 %v4601, %v4587
  %v4603 = vadd.f32 %v4602, %v4588
  %v4604 = vadd.f32 %v4603, %v4589
  %v4605 = vadd.f32 %v4604, %v4590
  %v4606 = vadd.f32 %v4605, %v4591
  %v4607 = vadd.f32 %v4606, %v4592
  %v4608 = vadd.f32 %v4607, %v4593
  %v4609 = vadd.f32 %v4608, %v4594
  %v4610 = vadd.f32 %v4609, %v4595
  %v4611 = vadd.f32 %v4610, %v4596
  %v4612 = vrot.slane %v4611, 4
  %v4613 = vadd.f32 %v4611, %v4612
  %v4614 = vrot.slane %v4613, 2
  %v4615 = vadd.f32 %v4613, %v4614
  %v4616 = vrot.slane %v4615, 1
  %v4617 = vadd.f32 %v4615, %v4616
  %v4618 = vmul.f32 %v4617, 0.0078125
  %v4619 = vmul.f32 %v4580, %v4580
  %v4620 = vsub.f32 %v4618, %v4619
  %v4621 = vsub.f32 %v4541, %v4580
  %v4622 = vsub.f32 %v4542, %v4580
  %v4623 = vsub.f32 %v4543, %v4580
  %v4624 = vsub.f32 %v4544, %v4580
  %v4625 = vsub.f32 %v4545, %v4580
  %v4626 = vsub.f32 %v4546, %v4580
  %v4627 = vsub.f32 %v4547, %v4580
  %v4628 = vsub.f32 %v4548, %v4580
  %v4629 = vsub.f32 %v4549, %v4580
  %v4630 = vsub.f32 %v4550, %v4580
  %v4631 = vsub.f32 %v4551, %v4580
  %v4632 = vsub.f32 %v4552, %v4580
  %v4633 = vsub.f32 %v4553, %v4580
  %v4634 = vsub.f32 %v4554, %v4580
  %v4635 = vsub.f32 %v4555, %v4580
  %v4636 = vsub.f32 %v4556, %v4580
  %v4637 = vadd.f32 %v4620, 1e-05
  %v4638 = vrsqrt.pop %v4637
  %v4639 = vmul.f32 %v4638, %v4637
  %v4640 = vmul.f32 %v4639, %v4638
  %v4641 = vmul.f32 0.5, %v4640
  %v4642 = vsub.f32 1.5, %v4641
  %v4643 = vmul.f32 %v4638, %v4642
  %vm4644 = vweird.f32 %v4637
  %vm4645 = vweird.f32 %v4638
  %vm4646 = vmor %vm4644, %vm4645
  %v4647 = vsel %vm4646, %v4638, %v4643
  %v4648 = vmul.f32 %v4621, %v4647
  %v4649 = vmul.f32 %v4622, %v4647
  %v4650 = vmul.f32 %v4623, %v4647
  %v4651 = vmul.f32 %v4624, %v4647
  %v4652 = vmul.f32 %v4625, %v4647
  %v4653 = vmul.f32 %v4626, %v4647
  %v4654 = vmul.f32 %v4627, %v4647
  %v4655 = vmul.f32 %v4628, %v4647
  %v4656 = vmul.f32 %v4629, %v4647
  %v4657 = vmul.f32 %v4630, %v4647
  %v4658 = vmul.f32 %v4631, %v4647
  %v4659 = vmul.f32 %v4632, %v4647
  %v4660 = vmul.f32 %v4633, %v4647
  %v4661 = vmul.f32 %v4634, %v4647
  %v4662 = vmul.f32 %v4635, %v4647
  %v4663 = vmul.f32 %v4636, %v4647
  %v4665 = vperm.slane %v4557, 0
  %v4667 = vmul.f32 %v4648, %v4665
  %v4668 = vmul.f32 %v4649, %v4665
  %v4669 = vmul.f32 %v4650, %v4665
  %v4670 = vmul.f32 %v4651, %v4665
  %v4671 = vmul.f32 %v4652, %v4665
  %v4672 = vmul.f32 %v4653, %v4665
  %v4673 = vmul.f32 %v4654, %v4665
  %v4674 = vmul.f32 %v4655, %v4665
  %v4675 = vmul.f32 %v4656, %v4665
  %v4676 = vmul.f32 %v4657, %v4665
  %v4677 = vmul.f32 %v4658, %v4665
  %v4678 = vmul.f32 %v4659, %v4665
  %v4679 = vmul.f32 %v4660, %v4665
  %v4680 = vmul.f32 %v4661, %v4665
  %v4681 = vmul.f32 %v4662, %v4665
  %v4682 = vmul.f32 %v4663, %v4665
  %v4684 = vperm.slane %v4558, 0
  %v4686 = vadd.f32 %v4667, %v4684
  %v4687 = vadd.f32 %v4668, %v4684
  %v4688 = vadd.f32 %v4669, %v4684
  %v4689 = vadd.f32 %v4670, %v4684
  %v4690 = vadd.f32 %v4671, %v4684
  %v4691 = vadd.f32 %v4672, %v4684
  %v4692 = vadd.f32 %v4673, %v4684
  %v4693 = vadd.f32 %v4674, %v4684
  %v4694 = vadd.f32 %v4675, %v4684
  %v4695 = vadd.f32 %v4676, %v4684
  %v4696 = vadd.f32 %v4677, %v4684
  %v4697 = vadd.f32 %v4678, %v4684
  %v4698 = vadd.f32 %v4679, %v4684
  %v4699 = vadd.f32 %v4680, %v4684
  %v4700 = vadd.f32 %v4681, %v4684
  %v4701 = vadd.f32 %v4682, %v4684
  %v4702 = vld [vmem:[%s7] sm:$0xf]
  %v4703 = vld [vmem:[%s7 + $0x4] sm:$0xf]
  %v4704 = vld [vmem:[%s7 + $0x8] sm:$0xf]
  %v4705 = vld [vmem:[%s7 + $0xc] sm:$0xf]
  %v4706 = vld [vmem:[%s7 + $0x10] sm:$0xf]
  %v4707 = vld [vmem:[%s7 + $0x14] sm:$0xf]
  %v4708 = vld [vmem:[%s7 + $0x18] sm:$0xf]
  %v4709 = vld [vmem:[%s7 + $0x1c] sm:$0xf]
  %v4710 = vld [vmem:[%s7 + $0x20] sm:$0xf]
  %v4711 = vld [vmem:[%s7 + $0x24] sm:$0xf]
  %v4712 = vld [vmem:[%s7 + $0x28] sm:$0xf]
  %v4713 = vld [vmem:[%s7 + $0x2c] sm:$0xf]
  %v4714 = vld [vmem:[%s7 + $0x30] sm:$0xf]
  %v4715 = vld [vmem:[%s7 + $0x34] sm:$0xf]
  %v4716 = vld [vmem:[%s7 + $0x38] sm:$0xf]
  %v4717 = vld [vmem:[%s7 + $0x3c] sm:$0xf]
  %v4718 = vld [vmem:[%s8] sm:$0xf]
  %v4719 = vld [vmem:[%s8 + $0x4] sm:$0xf]
  %v4720 = vld [vmem:[%s8 + $0x8] sm:$0xf]
  %v4721 = vld [vmem:[%s8 + $0xc] sm:$0xf]
  %v4722 = vld [vmem:[%s8 + $0x10] sm:$0xf]
  %v4723 = vld [vmem:[%s8 + $0x14] sm:$0xf]
  %v4724 = vld [vmem:[%s8 + $0x18] sm:$0xf]
  %v4725 = vld [vmem:[%s8 + $0x1c] sm:$0xf]
  %v4726 = vld [vmem:[%s8 + $0x20] sm:$0xf]
  %v4727 = vld [vmem:[%s8 + $0x24] sm:$0xf]
  %v4728 = vld [vmem:[%s8 + $0x28] sm:$0xf]
  %v4729 = vld [vmem:[%s8 + $0x2c] sm:$0xf]
  %v4730 = vld [vmem:[%s8 + $0x30] sm:$0xf]
  %v4731 = vld [vmem:[%s8 + $0x34] sm:$0xf]
  %v4732 = vld [vmem:[%s8 + $0x38] sm:$0xf]
  %v4733 = vld [vmem:[%s8 + $0x3c] sm:$0xf]
  %v4750 = vunpack.c.l.b16 %v4702
  %v4751 = vunpack.c.l.b16 %v4703
  %v4752 = vunpack.c.l.b16 %v4704
  %v4753 = vunpack.c.l.b16 %v4705
  %v4754 = vunpack.c.l.b16 %v4706
  %v4755 = vunpack.c.l.b16 %v4707
  %v4756 = vunpack.c.l.b16 %v4708
  %v4757 = vunpack.c.l.b16 %v4709
  %v4758 = vunpack.c.l.b16 %v4710
  %v4759 = vunpack.c.l.b16 %v4711
  %v4760 = vunpack.c.l.b16 %v4712
  %v4761 = vunpack.c.l.b16 %v4713
  %v4762 = vunpack.c.l.b16 %v4714
  %v4763 = vunpack.c.l.b16 %v4715
  %v4764 = vunpack.c.l.b16 %v4716
  %v4765 = vunpack.c.l.b16 %v4717
  %v4766 = vpack.c.b16 %v4751, %v4750
  %v4767 = vpack.c.b16 %v4753, %v4752
  %v4768 = vpack.c.b16 %v4755, %v4754
  %v4769 = vpack.c.b16 %v4757, %v4756
  %v4770 = vpack.c.b16 %v4759, %v4758
  %v4771 = vpack.c.b16 %v4761, %v4760
  %v4772 = vpack.c.b16 %v4763, %v4762
  %v4773 = vpack.c.b16 %v4765, %v4764
  %v4798 = vunpack.c.l.b16 %v4718
  %v4799 = vunpack.c.l.b16 %v4719
  %v4800 = vunpack.c.l.b16 %v4720
  %v4801 = vunpack.c.l.b16 %v4721
  %v4802 = vunpack.c.l.b16 %v4722
  %v4803 = vunpack.c.l.b16 %v4723
  %v4804 = vunpack.c.l.b16 %v4724
  %v4805 = vunpack.c.l.b16 %v4725
  %v4806 = vunpack.c.l.b16 %v4726
  %v4807 = vunpack.c.l.b16 %v4727
  %v4808 = vunpack.c.l.b16 %v4728
  %v4809 = vunpack.c.l.b16 %v4729
  %v4810 = vunpack.c.l.b16 %v4730
  %v4811 = vunpack.c.l.b16 %v4731
  %v4812 = vunpack.c.l.b16 %v4732
  %v4813 = vunpack.c.l.b16 %v4733
  %v4814 = vpack.c.b16 %v4799, %v4798
  %v4815 = vpack.c.b16 %v4801, %v4800
  %v4816 = vpack.c.b16 %v4803, %v4802
  %v4817 = vpack.c.b16 %v4805, %v4804
  %v4818 = vpack.c.b16 %v4807, %v4806
  %v4819 = vpack.c.b16 %v4809, %v4808
  %v4820 = vpack.c.b16 %v4811, %v4810
  %v4821 = vpack.c.b16 %v4813, %v4812
  %4830 = vmatpush.bf16.msra.mxu0 %v4821
  %4831 = vmatpush.bf16.msra.mxu0 %v4820
  %4832 = vmatpush.bf16.msra.mxu0 %v4819
  %4833 = vmatpush.bf16.msra.mxu0 %v4818
  %4834 = vmatpush.bf16.msra.mxu0 %v4817
  %4835 = vmatpush.bf16.msra.mxu0 %v4816
  %4836 = vmatpush.bf16.msra.mxu0 %v4815
  %4837 = vmatpush.bf16.msra.mxu0 %v4814
  %4838 = vmatmul.bf16.gmra.mxu0 %v4766
  %v4839 = vpop.f32.mrf.mxu0
  %v4840 = vadd.f32 0.0, %v4839
  %v4841 = vpop.f32.mrf.mxu0
  %v4842 = vadd.f32 0.0, %v4841
  %4843 = vmatmul.bf16.gmra.mxu0 %v4767
  %v4844 = vpop.f32.mrf.mxu0
  %v4845 = vadd.f32 0.0, %v4844
  %v4846 = vpop.f32.mrf.mxu0
  %v4847 = vadd.f32 0.0, %v4846
  %4848 = vmatmul.bf16.gmra.mxu0 %v4768
  %v4849 = vpop.f32.mrf.mxu0
  %v4850 = vadd.f32 0.0, %v4849
  %v4851 = vpop.f32.mrf.mxu0
  %v4852 = vadd.f32 0.0, %v4851
  %4853 = vmatmul.bf16.gmra.mxu0 %v4769
  %v4854 = vpop.f32.mrf.mxu0
  %v4855 = vadd.f32 0.0, %v4854
  %v4856 = vpop.f32.mrf.mxu0
  %v4857 = vadd.f32 0.0, %v4856
  %4858 = vmatmul.bf16.gmra.mxu0 %v4770
  %v4859 = vpop.f32.mrf.mxu0
  %v4860 = vadd.f32 0.0, %v4859
  %v4861 = vpop.f32.mrf.mxu0
  %v4862 = vadd.f32 0.0, %v4861
  %4863 = vmatmul.bf16.gmra.mxu0 %v4771
  %v4864 = vpop.f32.mrf.mxu0
  %v4865 = vadd.f32 0.0, %v4864
  %v4866 = vpop.f32.mrf.mxu0
  %v4867 = vadd.f32 0.0, %v4866
  %4868 = vmatmul.bf16.gmra.mxu0 %v4772
  %v4869 = vpop.f32.mrf.mxu0
  %v4870 = vadd.f32 0.0, %v4869
  %v4871 = vpop.f32.mrf.mxu0
  %v4872 = vadd.f32 0.0, %v4871
  %4873 = vmatmul.bf16.gmra.mxu0 %v4773
  %v4874 = vpop.f32.mrf.mxu0
  %v4875 = vadd.f32 0.0, %v4874
  %v4876 = vpop.f32.mrf.mxu0
  %v4877 = vadd.f32 0.0, %v4876
  %4878 = vdwg.mxu0
  %v4879 = vld [vmem:[%s9] sm:$0x1]
  %v4880 = vld [vmem:[%s10] sm:$0x1]
  %v4881 = vadd.f32 %v4840, %v4842
  %v4882 = vadd.f32 %v4881, %v4845
  %v4883 = vadd.f32 %v4882, %v4847
  %v4884 = vadd.f32 %v4883, %v4850
  %v4885 = vadd.f32 %v4884, %v4852
  %v4886 = vadd.f32 %v4885, %v4855
  %v4887 = vadd.f32 %v4886, %v4857
  %v4888 = vadd.f32 %v4887, %v4860
  %v4889 = vadd.f32 %v4888, %v4862
  %v4890 = vadd.f32 %v4889, %v4865
  %v4891 = vadd.f32 %v4890, %v4867
  %v4892 = vadd.f32 %v4891, %v4870
  %v4893 = vadd.f32 %v4892, %v4872
  %v4894 = vadd.f32 %v4893, %v4875
  %v4895 = vadd.f32 %v4894, %v4877
  %v4896 = vrot.slane %v4895, 4
  %v4897 = vadd.f32 %v4895, %v4896
  %v4898 = vrot.slane %v4897, 2
  %v4899 = vadd.f32 %v4897, %v4898
  %v4900 = vrot.slane %v4899, 1
  %v4901 = vadd.f32 %v4899, %v4900
  %v4902 = vmul.f32 %v4901, 0.0078125
  %v4903 = vmul.f32 %v4840, %v4840
  %v4904 = vmul.f32 %v4842, %v4842
  %v4905 = vmul.f32 %v4845, %v4845
  %v4906 = vmul.f32 %v4847, %v4847
  %v4907 = vmul.f32 %v4850, %v4850
  %v4908 = vmul.f32 %v4852, %v4852
  %v4909 = vmul.f32 %v4855, %v4855
  %v4910 = vmul.f32 %v4857, %v4857
  %v4911 = vmul.f32 %v4860, %v4860
  %v4912 = vmul.f32 %v4862, %v4862
  %v4913 = vmul.f32 %v4865, %v4865
  %v4914 = vmul.f32 %v4867, %v4867
  %v4915 = vmul.f32 %v4870, %v4870
  %v4916 = vmul.f32 %v4872, %v4872
  %v4917 = vmul.f32 %v4875, %v4875
  %v4918 = vmul.f32 %v4877, %v4877
  %v4919 = vadd.f32 %v4903, %v4904
  %v4920 = vadd.f32 %v4919, %v4905
  %v4921 = vadd.f32 %v4920, %v4906
  %v4922 = vadd.f32 %v4921, %v4907
  %v4923 = vadd.f32 %v4922, %v4908
  %v4924 = vadd.f32 %v4923, %v4909
  %v4925 = vadd.f32 %v4924, %v4910
  %v4926 = vadd.f32 %v4925, %v4911
  %v4927 = vadd.f32 %v4926, %v4912
  %v4928 = vadd.f32 %v4927, %v4913
  %v4929 = vadd.f32 %v4928, %v4914
  %v4930 = vadd.f32 %v4929, %v4915
  %v4931 = vadd.f32 %v4930, %v4916
  %v4932 = vadd.f32 %v4931, %v4917
  %v4933 = vadd.f32 %v4932, %v4918
  %v4934 = vrot.slane %v4933, 4
  %v4935 = vadd.f32 %v4933, %v4934
  %v4936 = vrot.slane %v4935, 2
  %v4937 = vadd.f32 %v4935, %v4936
  %v4938 = vrot.slane %v4937, 1
  %v4939 = vadd.f32 %v4937, %v4938
  %v4940 = vmul.f32 %v4939, 0.0078125
  %v4941 = vmul.f32 %v4902, %v4902
  %v4942 = vsub.f32 %v4940, %v4941
  %v4943 = vsub.f32 %v4840, %v4902
  %v4944 = vsub.f32 %v4842, %v4902
  %v4945 = vsub.f32 %v4845, %v4902
  %v4946 = vsub.f32 %v4847, %v4902
  %v4947 = vsub.f32 %v4850, %v4902
  %v4948 = vsub.f32 %v4852, %v4902
  %v4949 = vsub.f32 %v4855, %v4902
  %v4950 = vsub.f32 %v4857, %v4902
  %v4951 = vsub.f32 %v4860, %v4902
  %v4952 = vsub.f32 %v4862, %v4902
  %v4953 = vsub.f32 %v4865, %v4902
  %v4954 = vsub.f32 %v4867, %v4902
  %v4955 = vsub.f32 %v4870, %v4902
  %v4956 = vsub.f32 %v4872, %v4902
  %v4957 = vsub.f32 %v4875, %v4902
  %v4958 = vsub.f32 %v4877, %v4902
  %v4959 = vadd.f32 %v4942, 1e-05
  %v4960 = vrsqrt.pop %v4959
  %v4961 = vmul.f32 %v4960, %v4959
  %v4962 = vmul.f32 %v4961, %v4960
  %v4963 = vmul.f32 0.5, %v4962
  %v4964 = vsub.f32 1.5, %v4963
  %v4965 = vmul.f32 %v4960, %v4964
  %vm4966 = vweird.f32 %v4959
  %vm4967 = vweird.f32 %v4960
  %vm4968 = vmor %vm4966, %vm4967
  %v4969 = vsel %vm4968, %v4960, %v4965
  %v4970 = vmul.f32 %v4943, %v4969
  %v4971 = vmul.f32 %v4944, %v4969
  %v4972 = vmul.f32 %v4945, %v4969
  %v4973 = vmul.f32 %v4946, %v4969
  %v4974 = vmul.f32 %v4947, %v4969
  %v4975 = vmul.f32 %v4948, %v4969
  %v4976 = vmul.f32 %v4949, %v4969
  %v4977 = vmul.f32 %v4950, %v4969
  %v4978 = vmul.f32 %v4951, %v4969
  %v4979 = vmul.f32 %v4952, %v4969
  %v4980 = vmul.f32 %v4953, %v4969
  %v4981 = vmul.f32 %v4954, %v4969
  %v4982 = vmul.f32 %v4955, %v4969
  %v4983 = vmul.f32 %v4956, %v4969
  %v4984 = vmul.f32 %v4957, %v4969
  %v4985 = vmul.f32 %v4958, %v4969
  %v4987 = vperm.slane %v4879, 0
  %v4989 = vmul.f32 %v4970, %v4987
  %v4990 = vmul.f32 %v4971, %v4987
  %v4991 = vmul.f32 %v4972, %v4987
  %v4992 = vmul.f32 %v4973, %v4987
  %v4993 = vmul.f32 %v4974, %v4987
  %v4994 = vmul.f32 %v4975, %v4987
  %v4995 = vmul.f32 %v4976, %v4987
  %v4996 = vmul.f32 %v4977, %v4987
  %v4997 = vmul.f32 %v4978, %v4987
  %v4998 = vmul.f32 %v4979, %v4987
  %v4999 = vmul.f32 %v4980, %v4987
  %v5000 = vmul.f32 %v4981, %v4987
  %v5001 = vmul.f32 %v4982, %v4987
  %v5002 = vmul.f32 %v4983, %v4987
  %v5003 = vmul.f32 %v4984, %v4987
  %v5004 = vmul.f32 %v4985, %v4987
  %v5006 = vperm.slane %v4880, 0
  %v5008 = vadd.f32 %v4989, %v5006
  %v5009 = vadd.f32 %v4990, %v5006
  %v5010 = vadd.f32 %v4991, %v5006
  %v5011 = vadd.f32 %v4992, %v5006
  %v5012 = vadd.f32 %v4993, %v5006
  %v5013 = vadd.f32 %v4994, %v5006
  %v5014 = vadd.f32 %v4995, %v5006
  %v5015 = vadd.f32 %v4996, %v5006
  %v5016 = vadd.f32 %v4997, %v5006
  %v5017 = vadd.f32 %v4998, %v5006
  %v5018 = vadd.f32 %v4999, %v5006
  %v5019 = vadd.f32 %v5000, %v5006
  %v5020 = vadd.f32 %v5001, %v5006
  %v5021 = vadd.f32 %v5002, %v5006
  %v5022 = vadd.f32 %v5003, %v5006
  %v5023 = vadd.f32 %v5004, %v5006
  %v5024 = vadd.f32 %v4686, %v5008
  %v5025 = vadd.f32 %v4687, %v5009
  %v5026 = vadd.f32 %v4688, %v5010
  %v5027 = vadd.f32 %v4689, %v5011
  %v5028 = vadd.f32 %v4690, %v5012
  %v5029 = vadd.f32 %v4691, %v5013
  %v5030 = vadd.f32 %v4692, %v5014
  %v5031 = vadd.f32 %v4693, %v5015
  %v5032 = vadd.f32 %v4694, %v5016
  %v5033 = vadd.f32 %v4695, %v5017
  %v5034 = vadd.f32 %v4696, %v5018
  %v5035 = vadd.f32 %v4697, %v5019
  %v5036 = vadd.f32 %v4698, %v5020
  %v5037 = vadd.f32 %v4699, %v5021
  %v5038 = vadd.f32 %v4700, %v5022
  %v5039 = vadd.f32 %v4701, %v5023
  %v5040 = vmax.f32 %v5024, 0.0
  %v5041 = vmax.f32 %v5025, 0.0
  %v5042 = vmax.f32 %v5026, 0.0
  %v5043 = vmax.f32 %v5027, 0.0
  %v5044 = vmax.f32 %v5028, 0.0
  %v5045 = vmax.f32 %v5029, 0.0
  %v5046 = vmax.f32 %v5030, 0.0
  %v5047 = vmax.f32 %v5031, 0.0
  %v5048 = vmax.f32 %v5032, 0.0
  %v5049 = vmax.f32 %v5033, 0.0
  %v5050 = vmax.f32 %v5034, 0.0
  %v5051 = vmax.f32 %v5035, 0.0
  %v5052 = vmax.f32 %v5036, 0.0
  %v5053 = vmax.f32 %v5037, 0.0
  %v5054 = vmax.f32 %v5038, 0.0
  %v5055 = vmax.f32 %v5039, 0.0
  %5056 = vst [vmem:[%s12] sm:$0xff] %v5040
  %5057 = vst [vmem:[%s12 + $0x8] sm:$0xff] %v5041
  %5058 = vst [vmem:[%s12 + $0x10] sm:$0xff] %v5042
  %5059 = vst [vmem:[%s12 + $0x18] sm:$0xff] %v5043
  %5060 = vst [vmem:[%s12 + $0x20] sm:$0xff] %v5044
  %5061 = vst [vmem:[%s12 + $0x28] sm:$0xff] %v5045
  %5062 = vst [vmem:[%s12 + $0x30] sm:$0xff] %v5046
  %5063 = vst [vmem:[%s12 + $0x38] sm:$0xff] %v5047
  %5064 = vst [vmem:[%s12 + $0x40] sm:$0xff] %v5048
  %5065 = vst [vmem:[%s12 + $0x48] sm:$0xff] %v5049
  %5066 = vst [vmem:[%s12 + $0x50] sm:$0xff] %v5050
  %5067 = vst [vmem:[%s12 + $0x58] sm:$0xff] %v5051
  %5068 = vst [vmem:[%s12 + $0x60] sm:$0xff] %v5052
  %5069 = vst [vmem:[%s12 + $0x68] sm:$0xff] %v5053
  %5070 = vst [vmem:[%s12 + $0x70] sm:$0xff] %v5054
  %5071 = vst [vmem:[%s12 + $0x78] sm:$0xff] %v5055
  // Predicated region
  $region50: #{res_blk_forward.1} parent=0 // pred_check
    _
  $region51: #{res_blk_forward.1} parent=0 // pred_check_branch
    %5073 = sbr.rel (0) target = $region53
  $region52: #{res_blk_forward.1} parent=0 // pred_region
    _
  $region53: #{res_blk_forward.1} parent=0 // pred_fallthru
    _
  // Predicated region
  $region54: #{res_blk_forward.1} parent=0 // pred_check
    _
  $region55: #{res_blk_forward.1} parent=0 // pred_check_branch
    %5075 = sbr.rel (0) target = $region57
  $region56: #{res_blk_forward.1} parent=0 // pred_region
    _
  $region57: #{res_blk_forward.1} parent=0 // pred_fallthru
    _

</llo_original>
